<compile_context>
chip_gen: v5e
topology: v5e:2x2
jax: 0.10.0
libtpu: 0.0.40
codegen_flags: <defaults>
</compile_context>

<pallas_src>
import jax
import jax.numpy as jnp
from jax.experimental import pallas as pl
from jax.experimental.pallas import tpu as pltpu

_EPS = 1e-5


# ----------------------------------------------------------------------------
# Fused kernel: one batch element -> three gates + gated residual average
# ----------------------------------------------------------------------------
def _triplet_kernel(x_ref, tw_hw_ref, tw_cw_ref, tw_hc_ref,
                    s_h_ref, s_c_ref, shift_ref, o_ref):
    x = x_ref[0]                                                   # (C, H, W) f32

    # ZPool maps (channel 0 = max, channel 1 = mean) for the three branches.
    hw_max, hw_mean = jnp.max(x, axis=0), jnp.mean(x, axis=0)      # (H, W)  pool over C
    cw_max, cw_mean = jnp.max(x, axis=1), jnp.mean(x, axis=1)      # (C, W)  pool over H
    hc_max, hc_mean = jnp.max(x, axis=2), jnp.mean(x, axis=2)      # (C, H)  pool over W

    def gate(m_max, m_mean, tw_ref, s_ref, bn_shift):
        # 7x7 "same" conv (2->1 ch, BN scale pre-folded into tw) + BN shift + sigmoid.
        # tw_ref[k] / tw_ref[7+k] are the kx-folded column-shift matrices for the
        # max / mean channels; s_ref[k] are the row-shift matrices.
        acc = None
        for k in range(7):
            inner = (jnp.dot(m_max, tw_ref[k], preferred_element_type=jnp.float32)
                     + jnp.dot(m_mean, tw_ref[7 + k], preferred_element_type=jnp.float32))
            term = jnp.dot(s_ref[k], inner, preferred_element_type=jnp.float32)
            acc = term if acc is None else acc + term
        return jax.nn.sigmoid(acc + bn_shift)

    s_hw = gate(hw_max, hw_mean, tw_hw_ref, s_h_ref, shift_ref[0])  # (H, W)
    s_cw = gate(cw_max, cw_mean, tw_cw_ref, s_c_ref, shift_ref[1])  # (C, W)
    s_hc = gate(hc_max, hc_mean, tw_hc_ref, s_c_ref, shift_ref[2])  # (C, H) (transposed)

    gate_sum = s_hw[None, :, :] + s_cw[:, None, :] + s_hc[:, :, None]
    o_ref[0] = x * (gate_sum * (1.0 / 3.0))


# ----------------------------------------------------------------------------
# Host-side precomputation of shift matrices / weight folding
# ----------------------------------------------------------------------------
def _col_shift_stack(n):
    # (M @ T[k])[a, b] = M[a, b + k - 3]  (zero outside)
    r = jnp.arange(n)[:, None]
    c = jnp.arange(n)[None, :]
    return jnp.stack([(r == c + d).astype(jnp.float32) for d in range(-3, 4)])


def _row_shift_stack(n):
    # (S[k] @ M)[a, b] = M[a + k - 3, b]  (zero outside)
    r = jnp.arange(n)[:, None]
    c = jnp.arange(n)[None, :]
    return jnp.stack([(c == r + d).astype(jnp.float32) for d in range(-3, 4)])


def triplet_attention_forward(x, params):
    N, C, H, W = x.shape
    f32 = jnp.float32

    t_w = _col_shift_stack(W)          # (7, W, W) column (W) shifts   (hw, cw)
    t_h = _col_shift_stack(H)          # (7, H, H) column (H) shifts   (hc)
    s_h = _row_shift_stack(H)          # (7, H, H) row (H) shifts      (hw)
    s_c = _row_shift_stack(C)          # (7, C, C) row (C) shifts      (cw, hc)

    def bn_fold(bn):
        scale = bn["gamma"] / jnp.sqrt(bn["var"] + _EPS)
        shift = bn["beta"] - bn["mean"] * scale
        return scale, shift

    sc_hw, sh_hw = bn_fold(params["bn_hw"])
    sc_cw, sh_cw = bn_fold(params["bn_cw"])
    sc_hc, sh_hc = bn_fold(params["bn_hc"])

    # Fold eval-mode BN scale + one conv-kernel axis into the shift matrices:
    #   hw / cw : tw[ch, ky] = sum_kx w[ch, ky, kx] * T_W[kx]   (row shifts in-kernel)
    #   hc      : tw[ch, kx] = sum_ky w[ch, ky, kx] * T_H[ky]   ((C, H) transposed layout)
    tw_hw = jnp.einsum("cyx,xab->cyab", params["w_hw"][0] * sc_hw, t_w).reshape(14, W, W)
    tw_cw = jnp.einsum("cyx,xab->cyab", params["w_cw"][0] * sc_cw, t_w).reshape(14, W, W)
    tw_hc = jnp.einsum("cyx,yab->cxab", params["w_hc"][0] * sc_hc, t_h).reshape(14, H, H)

    shifts = jnp.concatenate([sh_hw, sh_cw, sh_hc]).astype(f32)     # (3,) BN shifts

    return pl.pallas_call(
        _triplet_kernel,
        grid=(N,),
        in_specs=[
            pl.BlockSpec((1, C, H, W), lambda n: (n, 0, 0, 0)),
            pl.BlockSpec((14, W, W), lambda n: (0, 0, 0)),
            pl.BlockSpec((14, W, W), lambda n: (0, 0, 0)),
            pl.BlockSpec((14, H, H), lambda n: (0, 0, 0)),
            pl.BlockSpec((7, H, H), lambda n: (0, 0, 0)),
            pl.BlockSpec((7, C, C), lambda n: (0, 0, 0)),
            pl.BlockSpec(memory_space=pltpu.MemorySpace.SMEM),      # BN shifts (3,)
        ],
        out_specs=pl.BlockSpec((1, C, H, W), lambda n: (n, 0, 0, 0)),
        out_shape=jax.ShapeDtypeStruct((N, C, H, W), f32),
        compiler_params=pltpu.CompilerParams(
            dimension_semantics=("parallel",)),
    )(x, tw_hw, tw_cw, tw_hc, s_h, s_c, shifts)


# ----------------------------------------------------------------------------
# Pure-JAX reference (mirrors the PyTorch module, eval-mode BN)
# ----------------------------------------------------------------------------
def _attention_gate_ref(x, w, bn):
    zmax = jnp.max(x, axis=1, keepdims=True)
    zmean = jnp.mean(x, axis=1, keepdims=True)
    z = jnp.concatenate([zmax, zmean], axis=1)                      # (N, 2, A, B)
    y = jax.lax.conv_general_dilated(
        z, w, window_strides=(1, 1), padding=((3, 3), (3, 3)),
        dimension_numbers=("NCHW", "OIHW", "NCHW"),
        precision=jax.lax.Precision.HIGHEST)                        # (N, 1, A, B)
    scale = bn["gamma"] / jnp.sqrt(bn["var"] + _EPS)
    shift = bn["beta"] - bn["mean"] * scale
    y = y * scale.reshape(1, 1, 1, 1) + shift.reshape(1, 1, 1, 1)
    return x * jax.nn.sigmoid(y)


def triplet_attention_ref(x, params):
    xp1 = jnp.transpose(x, (0, 2, 1, 3))
    o1 = jnp.transpose(_attention_gate_ref(xp1, params["w_cw"], params["bn_cw"]),
                       (0, 2, 1, 3))
    xp2 = jnp.transpose(x, (0, 3, 2, 1))
    o2 = jnp.transpose(_attention_gate_ref(xp2, params["w_hc"], params["bn_hc"]),
                       (0, 3, 2, 1))
    o3 = _attention_gate_ref(x, params["w_hw"], params["bn_hw"])
    return (o1 + o2 + o3) / 3.0


# ----------------------------------------------------------------------------
# Parameter construction (matches the PyTorch module shapes)
# ----------------------------------------------------------------------------
def init_params(key):
    ks = jax.random.split(key, 15)

    def rnd(k, shape, s=0.1):
        return (s * jax.random.normal(k, shape)).astype(jnp.float32)

    def bn(k0, k1, k2, k3):
        return {
            "gamma": (1.0 + 0.2 * jax.random.normal(k0, (1,))).astype(jnp.float32),
            "beta": (0.2 * jax.random.normal(k1, (1,))).astype(jnp.float32),
            "mean": (0.2 * jax.random.normal(k2, (1,))).astype(jnp.float32),
            "var": (1.0 + 0.2 * jnp.abs(jax.random.normal(k3, (1,)))).astype(jnp.float32),
        }

    return {
        "w_cw": rnd(ks[0], (1, 2, 7, 7)),    # Conv2d(2, 1, 7, pad=3, bias=False)
        "w_hc": rnd(ks[1], (1, 2, 7, 7)),
        "w_hw": rnd(ks[2], (1, 2, 7, 7)),
        "bn_cw": bn(ks[3], ks[4], ks[5], ks[6]),     # BatchNorm2d(1), eval stats
        "bn_hc": bn(ks[7], ks[8], ks[9], ks[10]),
        "bn_hw": bn(ks[11], ks[12], ks[13], ks[14]),
    }


if __name__ == "__main__":
    key = jax.random.PRNGKey(0)
    kx, kp = jax.random.split(key)

    N, C, H, W = 2, 8, 16, 16
    x = jax.random.normal(kx, (N, C, H, W), dtype=jnp.float32)
    params = init_params(kp)

    out = jax.jit(triplet_attention_forward)(x, params)
    out = jax.block_until_ready(out)
    assert out.shape == (N, C, H, W) and out.dtype == jnp.float32

    # Correctness check against the pure-JAX reference (tolerance covers MXU
    # f32-emulation rounding; structural errors would be >> 1e-2).
    ref = triplet_attention_ref(x, params)
    err = float(jnp.max(jnp.abs(out - ref)))
    assert err < 1e-2, f"max abs error vs reference = {err}"

    print("KERNEL_OK")
</pallas_src>

<mosaic_0001>
module attributes {stable_mosaic.version = 11 : i64} {
  func.func @_triplet_kernel(%arg0: i32, %arg1: memref<1x8x16x16xf32, #tpu.memory_space<vmem>>, %arg2: memref<14x16x16xf32, #tpu.memory_space<vmem>>, %arg3: memref<14x16x16xf32, #tpu.memory_space<vmem>>, %arg4: memref<14x16x16xf32, #tpu.memory_space<vmem>>, %arg5: memref<7x16x16xf32, #tpu.memory_space<vmem>>, %arg6: memref<7x8x8xf32, #tpu.memory_space<vmem>>, %arg7: memref<3xf32, #tpu.memory_space<smem>>, %arg8: memref<1x8x16x16xf32, #tpu.memory_space<vmem>>) attributes {dimension_semantics = [#tpu.dimension_semantics<parallel>], iteration_bounds = array<i64: 2>, scalar_prefetch = 0 : i64, scratch_operands = 0 : i64, tpu.core_type = #tpu.core_type<tc>, window_params = [{transform_indices = @transform_0, window_bounds = array<i64: 1, 8, 16, 16>}, {pipeline_mode = #tpu.pipeline_mode<synchronous>, transform_indices = @transform_1, window_bounds = array<i64: 14, 16, 16>}, {pipeline_mode = #tpu.pipeline_mode<synchronous>, transform_indices = @transform_2, window_bounds = array<i64: 14, 16, 16>}, {pipeline_mode = #tpu.pipeline_mode<synchronous>, transform_indices = @transform_3, window_bounds = array<i64: 14, 16, 16>}, {pipeline_mode = #tpu.pipeline_mode<synchronous>, transform_indices = @transform_4, window_bounds = array<i64: 7, 16, 16>}, {pipeline_mode = #tpu.pipeline_mode<synchronous>, transform_indices = @transform_5, window_bounds = array<i64: 7, 8, 8>}, {transform_indices = @transform_6, window_bounds = array<i64: 3>}, {transform_indices = @transform_7, window_bounds = array<i64: 1, 8, 16, 16>}]} {
    %c0 = arith.constant 0 : index
    %c0_0 = arith.constant 0 : index
    %c0_1 = arith.constant 0 : index
    %c0_2 = arith.constant 0 : index
    %0 = vector.load %arg1[%c0, %c0_0, %c0_1, %c0_2] : memref<1x8x16x16xf32, #tpu.memory_space<vmem>>, vector<1x8x16x16xf32>
    %1 = vector.shape_cast %0 : vector<1x8x16x16xf32> to vector<8x16x16xf32>
    %cst = arith.constant dense<0xFF800000> : vector<16x16xf32>
    %2 = vector.multi_reduction <maximumf>, %1, %cst [0] : vector<8x16x16xf32> to vector<16x16xf32>
    %cst_3 = arith.constant dense<0.000000e+00> : vector<16x16xf32>
    %3 = vector.multi_reduction <add>, %1, %cst_3 [0] : vector<8x16x16xf32> to vector<16x16xf32>
    %cst_4 = arith.constant 8.000000e+00 : f32
    %4 = vector.broadcast %cst_4 : f32 to vector<16x16xf32>
    %5 = arith.divf %3, %4 : vector<16x16xf32>
    %cst_5 = arith.constant dense<0xFF800000> : vector<8x16xf32>
    %6 = vector.multi_reduction <maximumf>, %1, %cst_5 [1] : vector<8x16x16xf32> to vector<8x16xf32>
    %cst_6 = arith.constant dense<0.000000e+00> : vector<8x16xf32>
    %7 = vector.multi_reduction <add>, %1, %cst_6 [1] : vector<8x16x16xf32> to vector<8x16xf32>
    %cst_7 = arith.constant 1.600000e+01 : f32
    %8 = vector.broadcast %cst_7 : f32 to vector<8x16xf32>
    %9 = arith.divf %7, %8 : vector<8x16xf32>
    %cst_8 = arith.constant dense<0xFF800000> : vector<8x16xf32>
    %10 = vector.multi_reduction <maximumf>, %1, %cst_8 [2] : vector<8x16x16xf32> to vector<8x16xf32>
    %cst_9 = arith.constant dense<0.000000e+00> : vector<8x16xf32>
    %11 = vector.multi_reduction <add>, %1, %cst_9 [2] : vector<8x16x16xf32> to vector<8x16xf32>
    %cst_10 = arith.constant 1.600000e+01 : f32
    %12 = vector.broadcast %cst_10 : f32 to vector<8x16xf32>
    %13 = arith.divf %11, %12 : vector<8x16xf32>
    %c0_11 = arith.constant 0 : index
    %14 = memref.load %arg7[%c0_11] : memref<3xf32, #tpu.memory_space<smem>>
    %c0_12 = arith.constant 0 : index
    %c0_13 = arith.constant 0 : index
    %c0_14 = arith.constant 0 : index
    %15 = vector.load %arg2[%c0_12, %c0_13, %c0_14] : memref<14x16x16xf32, #tpu.memory_space<vmem>>, vector<1x16x16xf32>
    %16 = vector.shape_cast %15 : vector<1x16x16xf32> to vector<16x16xf32>
    %cst_15 = arith.constant dense<0.000000e+00> : vector<16x16xf32>
    %17 = tpu.matmul %2, %16, %cst_15 {dimension_numbers = #tpu.dot_dimension_numbers<[1], [0], [0], [1], [0, 0, 1, 1], [], []>} : vector<16x16xf32>, vector<16x16xf32>, vector<16x16xf32> -> vector<16x16xf32>
    %c7 = arith.constant 7 : index
    %c0_16 = arith.constant 0 : index
    %c0_17 = arith.constant 0 : index
    %18 = vector.load %arg2[%c7, %c0_16, %c0_17] : memref<14x16x16xf32, #tpu.memory_space<vmem>>, vector<1x16x16xf32>
    %19 = vector.shape_cast %18 : vector<1x16x16xf32> to vector<16x16xf32>
    %cst_18 = arith.constant dense<0.000000e+00> : vector<16x16xf32>
    %20 = tpu.matmul %5, %19, %cst_18 {dimension_numbers = #tpu.dot_dimension_numbers<[1], [0], [0], [1], [0, 0, 1, 1], [], []>} : vector<16x16xf32>, vector<16x16xf32>, vector<16x16xf32> -> vector<16x16xf32>
    %21 = arith.addf %17, %20 : vector<16x16xf32>
    %c0_19 = arith.constant 0 : index
    %c0_20 = arith.constant 0 : index
    %c0_21 = arith.constant 0 : index
    %22 = vector.load %arg5[%c0_19, %c0_20, %c0_21] : memref<7x16x16xf32, #tpu.memory_space<vmem>>, vector<1x16x16xf32>
    %23 = vector.shape_cast %22 : vector<1x16x16xf32> to vector<16x16xf32>
    %cst_22 = arith.constant dense<0.000000e+00> : vector<16x16xf32>
    %24 = tpu.matmul %23, %21, %cst_22 {dimension_numbers = #tpu.dot_dimension_numbers<[1], [0], [0], [1], [0, 0, 1, 1], [], []>} : vector<16x16xf32>, vector<16x16xf32>, vector<16x16xf32> -> vector<16x16xf32>
    %c1 = arith.constant 1 : index
    %c0_23 = arith.constant 0 : index
    %c0_24 = arith.constant 0 : index
    %25 = vector.load %arg2[%c1, %c0_23, %c0_24] : memref<14x16x16xf32, #tpu.memory_space<vmem>>, vector<1x16x16xf32>
    %26 = vector.shape_cast %25 : vector<1x16x16xf32> to vector<16x16xf32>
    %cst_25 = arith.constant dense<0.000000e+00> : vector<16x16xf32>
    %27 = tpu.matmul %2, %26, %cst_25 {dimension_numbers = #tpu.dot_dimension_numbers<[1], [0], [0], [1], [0, 0, 1, 1], [], []>} : vector<16x16xf32>, vector<16x16xf32>, vector<16x16xf32> -> vector<16x16xf32>
    %c8 = arith.constant 8 : index
    %c0_26 = arith.constant 0 : index
    %c0_27 = arith.constant 0 : index
    %28 = vector.load %arg2[%c8, %c0_26, %c0_27] : memref<14x16x16xf32, #tpu.memory_space<vmem>>, vector<1x16x16xf32>
    %29 = vector.shape_cast %28 : vector<1x16x16xf32> to vector<16x16xf32>
    %cst_28 = arith.constant dense<0.000000e+00> : vector<16x16xf32>
    %30 = tpu.matmul %5, %29, %cst_28 {dimension_numbers = #tpu.dot_dimension_numbers<[1], [0], [0], [1], [0, 0, 1, 1], [], []>} : vector<16x16xf32>, vector<16x16xf32>, vector<16x16xf32> -> vector<16x16xf32>
    %31 = arith.addf %27, %30 : vector<16x16xf32>
    %c1_29 = arith.constant 1 : index
    %c0_30 = arith.constant 0 : index
    %c0_31 = arith.constant 0 : index
    %32 = vector.load %arg5[%c1_29, %c0_30, %c0_31] : memref<7x16x16xf32, #tpu.memory_space<vmem>>, vector<1x16x16xf32>
    %33 = vector.shape_cast %32 : vector<1x16x16xf32> to vector<16x16xf32>
    %cst_32 = arith.constant dense<0.000000e+00> : vector<16x16xf32>
    %34 = tpu.matmul %33, %31, %cst_32 {dimension_numbers = #tpu.dot_dimension_numbers<[1], [0], [0], [1], [0, 0, 1, 1], [], []>} : vector<16x16xf32>, vector<16x16xf32>, vector<16x16xf32> -> vector<16x16xf32>
    %35 = arith.addf %24, %34 : vector<16x16xf32>
    %c2 = arith.constant 2 : index
    %c0_33 = arith.constant 0 : index
    %c0_34 = arith.constant 0 : index
    %36 = vector.load %arg2[%c2, %c0_33, %c0_34] : memref<14x16x16xf32, #tpu.memory_space<vmem>>, vector<1x16x16xf32>
    %37 = vector.shape_cast %36 : vector<1x16x16xf32> to vector<16x16xf32>
    %cst_35 = arith.constant dense<0.000000e+00> : vector<16x16xf32>
    %38 = tpu.matmul %2, %37, %cst_35 {dimension_numbers = #tpu.dot_dimension_numbers<[1], [0], [0], [1], [0, 0, 1, 1], [], []>} : vector<16x16xf32>, vector<16x16xf32>, vector<16x16xf32> -> vector<16x16xf32>
    %c9 = arith.constant 9 : index
    %c0_36 = arith.constant 0 : index
    %c0_37 = arith.constant 0 : index
    %39 = vector.load %arg2[%c9, %c0_36, %c0_37] : memref<14x16x16xf32, #tpu.memory_space<vmem>>, vector<1x16x16xf32>
    %40 = vector.shape_cast %39 : vector<1x16x16xf32> to vector<16x16xf32>
    %cst_38 = arith.constant dense<0.000000e+00> : vector<16x16xf32>
    %41 = tpu.matmul %5, %40, %cst_38 {dimension_numbers = #tpu.dot_dimension_numbers<[1], [0], [0], [1], [0, 0, 1, 1], [], []>} : vector<16x16xf32>, vector<16x16xf32>, vector<16x16xf32> -> vector<16x16xf32>
    %42 = arith.addf %38, %41 : vector<16x16xf32>
    %c2_39 = arith.constant 2 : index
    %c0_40 = arith.constant 0 : index
    %c0_41 = arith.constant 0 : index
    %43 = vector.load %arg5[%c2_39, %c0_40, %c0_41] : memref<7x16x16xf32, #tpu.memory_space<vmem>>, vector<1x16x16xf32>
    %44 = vector.shape_cast %43 : vector<1x16x16xf32> to vector<16x16xf32>
    %cst_42 = arith.constant dense<0.000000e+00> : vector<16x16xf32>
    %45 = tpu.matmul %44, %42, %cst_42 {dimension_numbers = #tpu.dot_dimension_numbers<[1], [0], [0], [1], [0, 0, 1, 1], [], []>} : vector<16x16xf32>, vector<16x16xf32>, vector<16x16xf32> -> vector<16x16xf32>
    %46 = arith.addf %35, %45 : vector<16x16xf32>
    %c3 = arith.constant 3 : index
    %c0_43 = arith.constant 0 : index
    %c0_44 = arith.constant 0 : index
    %47 = vector.load %arg2[%c3, %c0_43, %c0_44] : memref<14x16x16xf32, #tpu.memory_space<vmem>>, vector<1x16x16xf32>
    %48 = vector.shape_cast %47 : vector<1x16x16xf32> to vector<16x16xf32>
    %cst_45 = arith.constant dense<0.000000e+00> : vector<16x16xf32>
    %49 = tpu.matmul %2, %48, %cst_45 {dimension_numbers = #tpu.dot_dimension_numbers<[1], [0], [0], [1], [0, 0, 1, 1], [], []>} : vector<16x16xf32>, vector<16x16xf32>, vector<16x16xf32> -> vector<16x16xf32>
    %c10 = arith.constant 10 : index
    %c0_46 = arith.constant 0 : index
    %c0_47 = arith.constant 0 : index
    %50 = vector.load %arg2[%c10, %c0_46, %c0_47] : memref<14x16x16xf32, #tpu.memory_space<vmem>>, vector<1x16x16xf32>
    %51 = vector.shape_cast %50 : vector<1x16x16xf32> to vector<16x16xf32>
    %cst_48 = arith.constant dense<0.000000e+00> : vector<16x16xf32>
    %52 = tpu.matmul %5, %51, %cst_48 {dimension_numbers = #tpu.dot_dimension_numbers<[1], [0], [0], [1], [0, 0, 1, 1], [], []>} : vector<16x16xf32>, vector<16x16xf32>, vector<16x16xf32> -> vector<16x16xf32>
    %53 = arith.addf %49, %52 : vector<16x16xf32>
    %c3_49 = arith.constant 3 : index
    %c0_50 = arith.constant 0 : index
    %c0_51 = arith.constant 0 : index
    %54 = vector.load %arg5[%c3_49, %c0_50, %c0_51] : memref<7x16x16xf32, #tpu.memory_space<vmem>>, vector<1x16x16xf32>
    %55 = vector.shape_cast %54 : vector<1x16x16xf32> to vector<16x16xf32>
    %cst_52 = arith.constant dense<0.000000e+00> : vector<16x16xf32>
    %56 = tpu.matmul %55, %53, %cst_52 {dimension_numbers = #tpu.dot_dimension_numbers<[1], [0], [0], [1], [0, 0, 1, 1], [], []>} : vector<16x16xf32>, vector<16x16xf32>, vector<16x16xf32> -> vector<16x16xf32>
    %57 = arith.addf %46, %56 : vector<16x16xf32>
    %c4 = arith.constant 4 : index
    %c0_53 = arith.constant 0 : index
    %c0_54 = arith.constant 0 : index
    %58 = vector.load %arg2[%c4, %c0_53, %c0_54] : memref<14x16x16xf32, #tpu.memory_space<vmem>>, vector<1x16x16xf32>
    %59 = vector.shape_cast %58 : vector<1x16x16xf32> to vector<16x16xf32>
    %cst_55 = arith.constant dense<0.000000e+00> : vector<16x16xf32>
    %60 = tpu.matmul %2, %59, %cst_55 {dimension_numbers = #tpu.dot_dimension_numbers<[1], [0], [0], [1], [0, 0, 1, 1], [], []>} : vector<16x16xf32>, vector<16x16xf32>, vector<16x16xf32> -> vector<16x16xf32>
    %c11 = arith.constant 11 : index
    %c0_56 = arith.constant 0 : index
    %c0_57 = arith.constant 0 : index
    %61 = vector.load %arg2[%c11, %c0_56, %c0_57] : memref<14x16x16xf32, #tpu.memory_space<vmem>>, vector<1x16x16xf32>
    %62 = vector.shape_cast %61 : vector<1x16x16xf32> to vector<16x16xf32>
    %cst_58 = arith.constant dense<0.000000e+00> : vector<16x16xf32>
    %63 = tpu.matmul %5, %62, %cst_58 {dimension_numbers = #tpu.dot_dimension_numbers<[1], [0], [0], [1], [0, 0, 1, 1], [], []>} : vector<16x16xf32>, vector<16x16xf32>, vector<16x16xf32> -> vector<16x16xf32>
    %64 = arith.addf %60, %63 : vector<16x16xf32>
    %c4_59 = arith.constant 4 : index
    %c0_60 = arith.constant 0 : index
    %c0_61 = arith.constant 0 : index
    %65 = vector.load %arg5[%c4_59, %c0_60, %c0_61] : memref<7x16x16xf32, #tpu.memory_space<vmem>>, vector<1x16x16xf32>
    %66 = vector.shape_cast %65 : vector<1x16x16xf32> to vector<16x16xf32>
    %cst_62 = arith.constant dense<0.000000e+00> : vector<16x16xf32>
    %67 = tpu.matmul %66, %64, %cst_62 {dimension_numbers = #tpu.dot_dimension_numbers<[1], [0], [0], [1], [0, 0, 1, 1], [], []>} : vector<16x16xf32>, vector<16x16xf32>, vector<16x16xf32> -> vector<16x16xf32>
    %68 = arith.addf %57, %67 : vector<16x16xf32>
    %c5 = arith.constant 5 : index
    %c0_63 = arith.constant 0 : index
    %c0_64 = arith.constant 0 : index
    %69 = vector.load %arg2[%c5, %c0_63, %c0_64] : memref<14x16x16xf32, #tpu.memory_space<vmem>>, vector<1x16x16xf32>
    %70 = vector.shape_cast %69 : vector<1x16x16xf32> to vector<16x16xf32>
    %cst_65 = arith.constant dense<0.000000e+00> : vector<16x16xf32>
    %71 = tpu.matmul %2, %70, %cst_65 {dimension_numbers = #tpu.dot_dimension_numbers<[1], [0], [0], [1], [0, 0, 1, 1], [], []>} : vector<16x16xf32>, vector<16x16xf32>, vector<16x16xf32> -> vector<16x16xf32>
    %c12 = arith.constant 12 : index
    %c0_66 = arith.constant 0 : index
    %c0_67 = arith.constant 0 : index
    %72 = vector.load %arg2[%c12, %c0_66, %c0_67] : memref<14x16x16xf32, #tpu.memory_space<vmem>>, vector<1x16x16xf32>
    %73 = vector.shape_cast %72 : vector<1x16x16xf32> to vector<16x16xf32>
    %cst_68 = arith.constant dense<0.000000e+00> : vector<16x16xf32>
    %74 = tpu.matmul %5, %73, %cst_68 {dimension_numbers = #tpu.dot_dimension_numbers<[1], [0], [0], [1], [0, 0, 1, 1], [], []>} : vector<16x16xf32>, vector<16x16xf32>, vector<16x16xf32> -> vector<16x16xf32>
    %75 = arith.addf %71, %74 : vector<16x16xf32>
    %c5_69 = arith.constant 5 : index
    %c0_70 = arith.constant 0 : index
    %c0_71 = arith.constant 0 : index
    %76 = vector.load %arg5[%c5_69, %c0_70, %c0_71] : memref<7x16x16xf32, #tpu.memory_space<vmem>>, vector<1x16x16xf32>
    %77 = vector.shape_cast %76 : vector<1x16x16xf32> to vector<16x16xf32>
    %cst_72 = arith.constant dense<0.000000e+00> : vector<16x16xf32>
    %78 = tpu.matmul %77, %75, %cst_72 {dimension_numbers = #tpu.dot_dimension_numbers<[1], [0], [0], [1], [0, 0, 1, 1], [], []>} : vector<16x16xf32>, vector<16x16xf32>, vector<16x16xf32> -> vector<16x16xf32>
    %79 = arith.addf %68, %78 : vector<16x16xf32>
    %c6 = arith.constant 6 : index
    %c0_73 = arith.constant 0 : index
    %c0_74 = arith.constant 0 : index
    %80 = vector.load %arg2[%c6, %c0_73, %c0_74] : memref<14x16x16xf32, #tpu.memory_space<vmem>>, vector<1x16x16xf32>
    %81 = vector.shape_cast %80 : vector<1x16x16xf32> to vector<16x16xf32>
    %cst_75 = arith.constant dense<0.000000e+00> : vector<16x16xf32>
    %82 = tpu.matmul %2, %81, %cst_75 {dimension_numbers = #tpu.dot_dimension_numbers<[1], [0], [0], [1], [0, 0, 1, 1], [], []>} : vector<16x16xf32>, vector<16x16xf32>, vector<16x16xf32> -> vector<16x16xf32>
    %c13 = arith.constant 13 : index
    %c0_76 = arith.constant 0 : index
    %c0_77 = arith.constant 0 : index
    %83 = vector.load %arg2[%c13, %c0_76, %c0_77] : memref<14x16x16xf32, #tpu.memory_space<vmem>>, vector<1x16x16xf32>
    %84 = vector.shape_cast %83 : vector<1x16x16xf32> to vector<16x16xf32>
    %cst_78 = arith.constant dense<0.000000e+00> : vector<16x16xf32>
    %85 = tpu.matmul %5, %84, %cst_78 {dimension_numbers = #tpu.dot_dimension_numbers<[1], [0], [0], [1], [0, 0, 1, 1], [], []>} : vector<16x16xf32>, vector<16x16xf32>, vector<16x16xf32> -> vector<16x16xf32>
    %86 = arith.addf %82, %85 : vector<16x16xf32>
    %c6_79 = arith.constant 6 : index
    %c0_80 = arith.constant 0 : index
    %c0_81 = arith.constant 0 : index
    %87 = vector.load %arg5[%c6_79, %c0_80, %c0_81] : memref<7x16x16xf32, #tpu.memory_space<vmem>>, vector<1x16x16xf32>
    %88 = vector.shape_cast %87 : vector<1x16x16xf32> to vector<16x16xf32>
    %cst_82 = arith.constant dense<0.000000e+00> : vector<16x16xf32>
    %89 = tpu.matmul %88, %86, %cst_82 {dimension_numbers = #tpu.dot_dimension_numbers<[1], [0], [0], [1], [0, 0, 1, 1], [], []>} : vector<16x16xf32>, vector<16x16xf32>, vector<16x16xf32> -> vector<16x16xf32>
    %90 = arith.addf %79, %89 : vector<16x16xf32>
    %91 = vector.broadcast %14 : f32 to vector<16x16xf32>
    %92 = arith.addf %90, %91 : vector<16x16xf32>
    %93 = arith.negf %92 : vector<16x16xf32>
    %94 = math.exp %93 : vector<16x16xf32>
    %cst_83 = arith.constant 1.000000e+00 : f32
    %95 = vector.broadcast %cst_83 : f32 to vector<16x16xf32>
    %96 = arith.addf %95, %94 : vector<16x16xf32>
    %97 = arith.divf %95, %96 : vector<16x16xf32>
    %c1_84 = arith.constant 1 : index
    %98 = memref.load %arg7[%c1_84] : memref<3xf32, #tpu.memory_space<smem>>
    %c0_85 = arith.constant 0 : index
    %c0_86 = arith.constant 0 : index
    %c0_87 = arith.constant 0 : index
    %99 = vector.load %arg3[%c0_85, %c0_86, %c0_87] : memref<14x16x16xf32, #tpu.memory_space<vmem>>, vector<1x16x16xf32>
    %100 = vector.shape_cast %99 : vector<1x16x16xf32> to vector<16x16xf32>
    %cst_88 = arith.constant dense<0.000000e+00> : vector<8x16xf32>
    %101 = tpu.matmul %6, %100, %cst_88 {dimension_numbers = #tpu.dot_dimension_numbers<[1], [0], [0], [1], [0, 0, 1, 1], [], []>} : vector<8x16xf32>, vector<16x16xf32>, vector<8x16xf32> -> vector<8x16xf32>
    %c7_89 = arith.constant 7 : index
    %c0_90 = arith.constant 0 : index
    %c0_91 = arith.constant 0 : index
    %102 = vector.load %arg3[%c7_89, %c0_90, %c0_91] : memref<14x16x16xf32, #tpu.memory_space<vmem>>, vector<1x16x16xf32>
    %103 = vector.shape_cast %102 : vector<1x16x16xf32> to vector<16x16xf32>
    %cst_92 = arith.constant dense<0.000000e+00> : vector<8x16xf32>
    %104 = tpu.matmul %9, %103, %cst_92 {dimension_numbers = #tpu.dot_dimension_numbers<[1], [0], [0], [1], [0, 0, 1, 1], [], []>} : vector<8x16xf32>, vector<16x16xf32>, vector<8x16xf32> -> vector<8x16xf32>
    %105 = arith.addf %101, %104 : vector<8x16xf32>
    %c0_93 = arith.constant 0 : index
    %c0_94 = arith.constant 0 : index
    %c0_95 = arith.constant 0 : index
    %106 = vector.load %arg6[%c0_93, %c0_94, %c0_95] : memref<7x8x8xf32, #tpu.memory_space<vmem>>, vector<1x8x8xf32>
    %107 = vector.shape_cast %106 : vector<1x8x8xf32> to vector<8x8xf32>
    %cst_96 = arith.constant dense<0.000000e+00> : vector<8x16xf32>
    %108 = tpu.matmul %107, %105, %cst_96 {dimension_numbers = #tpu.dot_dimension_numbers<[1], [0], [0], [1], [0, 0, 1, 1], [], []>} : vector<8x8xf32>, vector<8x16xf32>, vector<8x16xf32> -> vector<8x16xf32>
    %c1_97 = arith.constant 1 : index
    %c0_98 = arith.constant 0 : index
    %c0_99 = arith.constant 0 : index
    %109 = vector.load %arg3[%c1_97, %c0_98, %c0_99] : memref<14x16x16xf32, #tpu.memory_space<vmem>>, vector<1x16x16xf32>
    %110 = vector.shape_cast %109 : vector<1x16x16xf32> to vector<16x16xf32>
    %cst_100 = arith.constant dense<0.000000e+00> : vector<8x16xf32>
    %111 = tpu.matmul %6, %110, %cst_100 {dimension_numbers = #tpu.dot_dimension_numbers<[1], [0], [0], [1], [0, 0, 1, 1], [], []>} : vector<8x16xf32>, vector<16x16xf32>, vector<8x16xf32> -> vector<8x16xf32>
    %c8_101 = arith.constant 8 : index
    %c0_102 = arith.constant 0 : index
    %c0_103 = arith.constant 0 : index
    %112 = vector.load %arg3[%c8_101, %c0_102, %c0_103] : memref<14x16x16xf32, #tpu.memory_space<vmem>>, vector<1x16x16xf32>
    %113 = vector.shape_cast %112 : vector<1x16x16xf32> to vector<16x16xf32>
    %cst_104 = arith.constant dense<0.000000e+00> : vector<8x16xf32>
    %114 = tpu.matmul %9, %113, %cst_104 {dimension_numbers = #tpu.dot_dimension_numbers<[1], [0], [0], [1], [0, 0, 1, 1], [], []>} : vector<8x16xf32>, vector<16x16xf32>, vector<8x16xf32> -> vector<8x16xf32>
    %115 = arith.addf %111, %114 : vector<8x16xf32>
    %c1_105 = arith.constant 1 : index
    %c0_106 = arith.constant 0 : index
    %c0_107 = arith.constant 0 : index
    %116 = vector.load %arg6[%c1_105, %c0_106, %c0_107] : memref<7x8x8xf32, #tpu.memory_space<vmem>>, vector<1x8x8xf32>
    %117 = vector.shape_cast %116 : vector<1x8x8xf32> to vector<8x8xf32>
    %cst_108 = arith.constant dense<0.000000e+00> : vector<8x16xf32>
    %118 = tpu.matmul %117, %115, %cst_108 {dimension_numbers = #tpu.dot_dimension_numbers<[1], [0], [0], [1], [0, 0, 1, 1], [], []>} : vector<8x8xf32>, vector<8x16xf32>, vector<8x16xf32> -> vector<8x16xf32>
    %119 = arith.addf %108, %118 : vector<8x16xf32>
    %c2_109 = arith.constant 2 : index
    %c0_110 = arith.constant 0 : index
    %c0_111 = arith.constant 0 : index
    %120 = vector.load %arg3[%c2_109, %c0_110, %c0_111] : memref<14x16x16xf32, #tpu.memory_space<vmem>>, vector<1x16x16xf32>
    %121 = vector.shape_cast %120 : vector<1x16x16xf32> to vector<16x16xf32>
    %cst_112 = arith.constant dense<0.000000e+00> : vector<8x16xf32>
    %122 = tpu.matmul %6, %121, %cst_112 {dimension_numbers = #tpu.dot_dimension_numbers<[1], [0], [0], [1], [0, 0, 1, 1], [], []>} : vector<8x16xf32>, vector<16x16xf32>, vector<8x16xf32> -> vector<8x16xf32>
    %c9_113 = arith.constant 9 : index
    %c0_114 = arith.constant 0 : index
    %c0_115 = arith.constant 0 : index
    %123 = vector.load %arg3[%c9_113, %c0_114, %c0_115] : memref<14x16x16xf32, #tpu.memory_space<vmem>>, vector<1x16x16xf32>
    %124 = vector.shape_cast %123 : vector<1x16x16xf32> to vector<16x16xf32>
    %cst_116 = arith.constant dense<0.000000e+00> : vector<8x16xf32>
    %125 = tpu.matmul %9, %124, %cst_116 {dimension_numbers = #tpu.dot_dimension_numbers<[1], [0], [0], [1], [0, 0, 1, 1], [], []>} : vector<8x16xf32>, vector<16x16xf32>, vector<8x16xf32> -> vector<8x16xf32>
    %126 = arith.addf %122, %125 : vector<8x16xf32>
    %c2_117 = arith.constant 2 : index
    %c0_118 = arith.constant 0 : index
    %c0_119 = arith.constant 0 : index
    %127 = vector.load %arg6[%c2_117, %c0_118, %c0_119] : memref<7x8x8xf32, #tpu.memory_space<vmem>>, vector<1x8x8xf32>
    %128 = vector.shape_cast %127 : vector<1x8x8xf32> to vector<8x8xf32>
    %cst_120 = arith.constant dense<0.000000e+00> : vector<8x16xf32>
    %129 = tpu.matmul %128, %126, %cst_120 {dimension_numbers = #tpu.dot_dimension_numbers<[1], [0], [0], [1], [0, 0, 1, 1], [], []>} : vector<8x8xf32>, vector<8x16xf32>, vector<8x16xf32> -> vector<8x16xf32>
    %130 = arith.addf %119, %129 : vector<8x16xf32>
    %c3_121 = arith.constant 3 : index
    %c0_122 = arith.constant 0 : index
    %c0_123 = arith.constant 0 : index
    %131 = vector.load %arg3[%c3_121, %c0_122, %c0_123] : memref<14x16x16xf32, #tpu.memory_space<vmem>>, vector<1x16x16xf32>
    %132 = vector.shape_cast %131 : vector<1x16x16xf32> to vector<16x16xf32>
    %cst_124 = arith.constant dense<0.000000e+00> : vector<8x16xf32>
    %133 = tpu.matmul %6, %132, %cst_124 {dimension_numbers = #tpu.dot_dimension_numbers<[1], [0], [0], [1], [0, 0, 1, 1], [], []>} : vector<8x16xf32>, vector<16x16xf32>, vector<8x16xf32> -> vector<8x16xf32>
    %c10_125 = arith.constant 10 : index
    %c0_126 = arith.constant 0 : index
    %c0_127 = arith.constant 0 : index
    %134 = vector.load %arg3[%c10_125, %c0_126, %c0_127] : memref<14x16x16xf32, #tpu.memory_space<vmem>>, vector<1x16x16xf32>
    %135 = vector.shape_cast %134 : vector<1x16x16xf32> to vector<16x16xf32>
    %cst_128 = arith.constant dense<0.000000e+00> : vector<8x16xf32>
    %136 = tpu.matmul %9, %135, %cst_128 {dimension_numbers = #tpu.dot_dimension_numbers<[1], [0], [0], [1], [0, 0, 1, 1], [], []>} : vector<8x16xf32>, vector<16x16xf32>, vector<8x16xf32> -> vector<8x16xf32>
    %137 = arith.addf %133, %136 : vector<8x16xf32>
    %c3_129 = arith.constant 3 : index
    %c0_130 = arith.constant 0 : index
    %c0_131 = arith.constant 0 : index
    %138 = vector.load %arg6[%c3_129, %c0_130, %c0_131] : memref<7x8x8xf32, #tpu.memory_space<vmem>>, vector<1x8x8xf32>
    %139 = vector.shape_cast %138 : vector<1x8x8xf32> to vector<8x8xf32>
    %cst_132 = arith.constant dense<0.000000e+00> : vector<8x16xf32>
    %140 = tpu.matmul %139, %137, %cst_132 {dimension_numbers = #tpu.dot_dimension_numbers<[1], [0], [0], [1], [0, 0, 1, 1], [], []>} : vector<8x8xf32>, vector<8x16xf32>, vector<8x16xf32> -> vector<8x16xf32>
    %141 = arith.addf %130, %140 : vector<8x16xf32>
    %c4_133 = arith.constant 4 : index
    %c0_134 = arith.constant 0 : index
    %c0_135 = arith.constant 0 : index
    %142 = vector.load %arg3[%c4_133, %c0_134, %c0_135] : memref<14x16x16xf32, #tpu.memory_space<vmem>>, vector<1x16x16xf32>
    %143 = vector.shape_cast %142 : vector<1x16x16xf32> to vector<16x16xf32>
    %cst_136 = arith.constant dense<0.000000e+00> : vector<8x16xf32>
    %144 = tpu.matmul %6, %143, %cst_136 {dimension_numbers = #tpu.dot_dimension_numbers<[1], [0], [0], [1], [0, 0, 1, 1], [], []>} : vector<8x16xf32>, vector<16x16xf32>, vector<8x16xf32> -> vector<8x16xf32>
    %c11_137 = arith.constant 11 : index
    %c0_138 = arith.constant 0 : index
    %c0_139 = arith.constant 0 : index
    %145 = vector.load %arg3[%c11_137, %c0_138, %c0_139] : memref<14x16x16xf32, #tpu.memory_space<vmem>>, vector<1x16x16xf32>
    %146 = vector.shape_cast %145 : vector<1x16x16xf32> to vector<16x16xf32>
    %cst_140 = arith.constant dense<0.000000e+00> : vector<8x16xf32>
    %147 = tpu.matmul %9, %146, %cst_140 {dimension_numbers = #tpu.dot_dimension_numbers<[1], [0], [0], [1], [0, 0, 1, 1], [], []>} : vector<8x16xf32>, vector<16x16xf32>, vector<8x16xf32> -> vector<8x16xf32>
    %148 = arith.addf %144, %147 : vector<8x16xf32>
    %c4_141 = arith.constant 4 : index
    %c0_142 = arith.constant 0 : index
    %c0_143 = arith.constant 0 : index
    %149 = vector.load %arg6[%c4_141, %c0_142, %c0_143] : memref<7x8x8xf32, #tpu.memory_space<vmem>>, vector<1x8x8xf32>
    %150 = vector.shape_cast %149 : vector<1x8x8xf32> to vector<8x8xf32>
    %cst_144 = arith.constant dense<0.000000e+00> : vector<8x16xf32>
    %151 = tpu.matmul %150, %148, %cst_144 {dimension_numbers = #tpu.dot_dimension_numbers<[1], [0], [0], [1], [0, 0, 1, 1], [], []>} : vector<8x8xf32>, vector<8x16xf32>, vector<8x16xf32> -> vector<8x16xf32>
    %152 = arith.addf %141, %151 : vector<8x16xf32>
    %c5_145 = arith.constant 5 : index
    %c0_146 = arith.constant 0 : index
    %c0_147 = arith.constant 0 : index
    %153 = vector.load %arg3[%c5_145, %c0_146, %c0_147] : memref<14x16x16xf32, #tpu.memory_space<vmem>>, vector<1x16x16xf32>
    %154 = vector.shape_cast %153 : vector<1x16x16xf32> to vector<16x16xf32>
    %cst_148 = arith.constant dense<0.000000e+00> : vector<8x16xf32>
    %155 = tpu.matmul %6, %154, %cst_148 {dimension_numbers = #tpu.dot_dimension_numbers<[1], [0], [0], [1], [0, 0, 1, 1], [], []>} : vector<8x16xf32>, vector<16x16xf32>, vector<8x16xf32> -> vector<8x16xf32>
    %c12_149 = arith.constant 12 : index
    %c0_150 = arith.constant 0 : index
    %c0_151 = arith.constant 0 : index
    %156 = vector.load %arg3[%c12_149, %c0_150, %c0_151] : memref<14x16x16xf32, #tpu.memory_space<vmem>>, vector<1x16x16xf32>
    %157 = vector.shape_cast %156 : vector<1x16x16xf32> to vector<16x16xf32>
    %cst_152 = arith.constant dense<0.000000e+00> : vector<8x16xf32>
    %158 = tpu.matmul %9, %157, %cst_152 {dimension_numbers = #tpu.dot_dimension_numbers<[1], [0], [0], [1], [0, 0, 1, 1], [], []>} : vector<8x16xf32>, vector<16x16xf32>, vector<8x16xf32> -> vector<8x16xf32>
    %159 = arith.addf %155, %158 : vector<8x16xf32>
    %c5_153 = arith.constant 5 : index
    %c0_154 = arith.constant 0 : index
    %c0_155 = arith.constant 0 : index
    %160 = vector.load %arg6[%c5_153, %c0_154, %c0_155] : memref<7x8x8xf32, #tpu.memory_space<vmem>>, vector<1x8x8xf32>
    %161 = vector.shape_cast %160 : vector<1x8x8xf32> to vector<8x8xf32>
    %cst_156 = arith.constant dense<0.000000e+00> : vector<8x16xf32>
    %162 = tpu.matmul %161, %159, %cst_156 {dimension_numbers = #tpu.dot_dimension_numbers<[1], [0], [0], [1], [0, 0, 1, 1], [], []>} : vector<8x8xf32>, vector<8x16xf32>, vector<8x16xf32> -> vector<8x16xf32>
    %163 = arith.addf %152, %162 : vector<8x16xf32>
    %c6_157 = arith.constant 6 : index
    %c0_158 = arith.constant 0 : index
    %c0_159 = arith.constant 0 : index
    %164 = vector.load %arg3[%c6_157, %c0_158, %c0_159] : memref<14x16x16xf32, #tpu.memory_space<vmem>>, vector<1x16x16xf32>
    %165 = vector.shape_cast %164 : vector<1x16x16xf32> to vector<16x16xf32>
    %cst_160 = arith.constant dense<0.000000e+00> : vector<8x16xf32>
    %166 = tpu.matmul %6, %165, %cst_160 {dimension_numbers = #tpu.dot_dimension_numbers<[1], [0], [0], [1], [0, 0, 1, 1], [], []>} : vector<8x16xf32>, vector<16x16xf32>, vector<8x16xf32> -> vector<8x16xf32>
    %c13_161 = arith.constant 13 : index
    %c0_162 = arith.constant 0 : index
    %c0_163 = arith.constant 0 : index
    %167 = vector.load %arg3[%c13_161, %c0_162, %c0_163] : memref<14x16x16xf32, #tpu.memory_space<vmem>>, vector<1x16x16xf32>
    %168 = vector.shape_cast %167 : vector<1x16x16xf32> to vector<16x16xf32>
    %cst_164 = arith.constant dense<0.000000e+00> : vector<8x16xf32>
    %169 = tpu.matmul %9, %168, %cst_164 {dimension_numbers = #tpu.dot_dimension_numbers<[1], [0], [0], [1], [0, 0, 1, 1], [], []>} : vector<8x16xf32>, vector<16x16xf32>, vector<8x16xf32> -> vector<8x16xf32>
    %170 = arith.addf %166, %169 : vector<8x16xf32>
    %c6_165 = arith.constant 6 : index
    %c0_166 = arith.constant 0 : index
    %c0_167 = arith.constant 0 : index
    %171 = vector.load %arg6[%c6_165, %c0_166, %c0_167] : memref<7x8x8xf32, #tpu.memory_space<vmem>>, vector<1x8x8xf32>
    %172 = vector.shape_cast %171 : vector<1x8x8xf32> to vector<8x8xf32>
    %cst_168 = arith.constant dense<0.000000e+00> : vector<8x16xf32>
    %173 = tpu.matmul %172, %170, %cst_168 {dimension_numbers = #tpu.dot_dimension_numbers<[1], [0], [0], [1], [0, 0, 1, 1], [], []>} : vector<8x8xf32>, vector<8x16xf32>, vector<8x16xf32> -> vector<8x16xf32>
    %174 = arith.addf %163, %173 : vector<8x16xf32>
    %175 = vector.broadcast %98 : f32 to vector<8x16xf32>
    %176 = arith.addf %174, %175 : vector<8x16xf32>
    %177 = arith.negf %176 : vector<8x16xf32>
    %178 = math.exp %177 : vector<8x16xf32>
    %cst_169 = arith.constant 1.000000e+00 : f32
    %179 = vector.broadcast %cst_169 : f32 to vector<8x16xf32>
    %180 = arith.addf %179, %178 : vector<8x16xf32>
    %181 = arith.divf %179, %180 : vector<8x16xf32>
    %c2_170 = arith.constant 2 : index
    %182 = memref.load %arg7[%c2_170] : memref<3xf32, #tpu.memory_space<smem>>
    %c0_171 = arith.constant 0 : index
    %c0_172 = arith.constant 0 : index
    %c0_173 = arith.constant 0 : index
    %183 = vector.load %arg4[%c0_171, %c0_172, %c0_173] : memref<14x16x16xf32, #tpu.memory_space<vmem>>, vector<1x16x16xf32>
    %184 = vector.shape_cast %183 : vector<1x16x16xf32> to vector<16x16xf32>
    %cst_174 = arith.constant dense<0.000000e+00> : vector<8x16xf32>
    %185 = tpu.matmul %10, %184, %cst_174 {dimension_numbers = #tpu.dot_dimension_numbers<[1], [0], [0], [1], [0, 0, 1, 1], [], []>} : vector<8x16xf32>, vector<16x16xf32>, vector<8x16xf32> -> vector<8x16xf32>
    %c7_175 = arith.constant 7 : index
    %c0_176 = arith.constant 0 : index
    %c0_177 = arith.constant 0 : index
    %186 = vector.load %arg4[%c7_175, %c0_176, %c0_177] : memref<14x16x16xf32, #tpu.memory_space<vmem>>, vector<1x16x16xf32>
    %187 = vector.shape_cast %186 : vector<1x16x16xf32> to vector<16x16xf32>
    %cst_178 = arith.constant dense<0.000000e+00> : vector<8x16xf32>
    %188 = tpu.matmul %13, %187, %cst_178 {dimension_numbers = #tpu.dot_dimension_numbers<[1], [0], [0], [1], [0, 0, 1, 1], [], []>} : vector<8x16xf32>, vector<16x16xf32>, vector<8x16xf32> -> vector<8x16xf32>
    %189 = arith.addf %185, %188 : vector<8x16xf32>
    %c0_179 = arith.constant 0 : index
    %c0_180 = arith.constant 0 : index
    %c0_181 = arith.constant 0 : index
    %190 = vector.load %arg6[%c0_179, %c0_180, %c0_181] : memref<7x8x8xf32, #tpu.memory_space<vmem>>, vector<1x8x8xf32>
    %191 = vector.shape_cast %190 : vector<1x8x8xf32> to vector<8x8xf32>
    %cst_182 = arith.constant dense<0.000000e+00> : vector<8x16xf32>
    %192 = tpu.matmul %191, %189, %cst_182 {dimension_numbers = #tpu.dot_dimension_numbers<[1], [0], [0], [1], [0, 0, 1, 1], [], []>} : vector<8x8xf32>, vector<8x16xf32>, vector<8x16xf32> -> vector<8x16xf32>
    %c1_183 = arith.constant 1 : index
    %c0_184 = arith.constant 0 : index
    %c0_185 = arith.constant 0 : index
    %193 = vector.load %arg4[%c1_183, %c0_184, %c0_185] : memref<14x16x16xf32, #tpu.memory_space<vmem>>, vector<1x16x16xf32>
    %194 = vector.shape_cast %193 : vector<1x16x16xf32> to vector<16x16xf32>
    %cst_186 = arith.constant dense<0.000000e+00> : vector<8x16xf32>
    %195 = tpu.matmul %10, %194, %cst_186 {dimension_numbers = #tpu.dot_dimension_numbers<[1], [0], [0], [1], [0, 0, 1, 1], [], []>} : vector<8x16xf32>, vector<16x16xf32>, vector<8x16xf32> -> vector<8x16xf32>
    %c8_187 = arith.constant 8 : index
    %c0_188 = arith.constant 0 : index
    %c0_189 = arith.constant 0 : index
    %196 = vector.load %arg4[%c8_187, %c0_188, %c0_189] : memref<14x16x16xf32, #tpu.memory_space<vmem>>, vector<1x16x16xf32>
    %197 = vector.shape_cast %196 : vector<1x16x16xf32> to vector<16x16xf32>
    %cst_190 = arith.constant dense<0.000000e+00> : vector<8x16xf32>
    %198 = tpu.matmul %13, %197, %cst_190 {dimension_numbers = #tpu.dot_dimension_numbers<[1], [0], [0], [1], [0, 0, 1, 1], [], []>} : vector<8x16xf32>, vector<16x16xf32>, vector<8x16xf32> -> vector<8x16xf32>
    %199 = arith.addf %195, %198 : vector<8x16xf32>
    %c1_191 = arith.constant 1 : index
    %c0_192 = arith.constant 0 : index
    %c0_193 = arith.constant 0 : index
    %200 = vector.load %arg6[%c1_191, %c0_192, %c0_193] : memref<7x8x8xf32, #tpu.memory_space<vmem>>, vector<1x8x8xf32>
    %201 = vector.shape_cast %200 : vector<1x8x8xf32> to vector<8x8xf32>
    %cst_194 = arith.constant dense<0.000000e+00> : vector<8x16xf32>
    %202 = tpu.matmul %201, %199, %cst_194 {dimension_numbers = #tpu.dot_dimension_numbers<[1], [0], [0], [1], [0, 0, 1, 1], [], []>} : vector<8x8xf32>, vector<8x16xf32>, vector<8x16xf32> -> vector<8x16xf32>
    %203 = arith.addf %192, %202 : vector<8x16xf32>
    %c2_195 = arith.constant 2 : index
    %c0_196 = arith.constant 0 : index
    %c0_197 = arith.constant 0 : index
    %204 = vector.load %arg4[%c2_195, %c0_196, %c0_197] : memref<14x16x16xf32, #tpu.memory_space<vmem>>, vector<1x16x16xf32>
    %205 = vector.shape_cast %204 : vector<1x16x16xf32> to vector<16x16xf32>
    %cst_198 = arith.constant dense<0.000000e+00> : vector<8x16xf32>
    %206 = tpu.matmul %10, %205, %cst_198 {dimension_numbers = #tpu.dot_dimension_numbers<[1], [0], [0], [1], [0, 0, 1, 1], [], []>} : vector<8x16xf32>, vector<16x16xf32>, vector<8x16xf32> -> vector<8x16xf32>
    %c9_199 = arith.constant 9 : index
    %c0_200 = arith.constant 0 : index
    %c0_201 = arith.constant 0 : index
    %207 = vector.load %arg4[%c9_199, %c0_200, %c0_201] : memref<14x16x16xf32, #tpu.memory_space<vmem>>, vector<1x16x16xf32>
    %208 = vector.shape_cast %207 : vector<1x16x16xf32> to vector<16x16xf32>
    %cst_202 = arith.constant dense<0.000000e+00> : vector<8x16xf32>
    %209 = tpu.matmul %13, %208, %cst_202 {dimension_numbers = #tpu.dot_dimension_numbers<[1], [0], [0], [1], [0, 0, 1, 1], [], []>} : vector<8x16xf32>, vector<16x16xf32>, vector<8x16xf32> -> vector<8x16xf32>
    %210 = arith.addf %206, %209 : vector<8x16xf32>
    %c2_203 = arith.constant 2 : index
    %c0_204 = arith.constant 0 : index
    %c0_205 = arith.constant 0 : index
    %211 = vector.load %arg6[%c2_203, %c0_204, %c0_205] : memref<7x8x8xf32, #tpu.memory_space<vmem>>, vector<1x8x8xf32>
    %212 = vector.shape_cast %211 : vector<1x8x8xf32> to vector<8x8xf32>
    %cst_206 = arith.constant dense<0.000000e+00> : vector<8x16xf32>
    %213 = tpu.matmul %212, %210, %cst_206 {dimension_numbers = #tpu.dot_dimension_numbers<[1], [0], [0], [1], [0, 0, 1, 1], [], []>} : vector<8x8xf32>, vector<8x16xf32>, vector<8x16xf32> -> vector<8x16xf32>
    %214 = arith.addf %203, %213 : vector<8x16xf32>
    %c3_207 = arith.constant 3 : index
    %c0_208 = arith.constant 0 : index
    %c0_209 = arith.constant 0 : index
    %215 = vector.load %arg4[%c3_207, %c0_208, %c0_209] : memref<14x16x16xf32, #tpu.memory_space<vmem>>, vector<1x16x16xf32>
    %216 = vector.shape_cast %215 : vector<1x16x16xf32> to vector<16x16xf32>
    %cst_210 = arith.constant dense<0.000000e+00> : vector<8x16xf32>
    %217 = tpu.matmul %10, %216, %cst_210 {dimension_numbers = #tpu.dot_dimension_numbers<[1], [0], [0], [1], [0, 0, 1, 1], [], []>} : vector<8x16xf32>, vector<16x16xf32>, vector<8x16xf32> -> vector<8x16xf32>
    %c10_211 = arith.constant 10 : index
    %c0_212 = arith.constant 0 : index
    %c0_213 = arith.constant 0 : index
    %218 = vector.load %arg4[%c10_211, %c0_212, %c0_213] : memref<14x16x16xf32, #tpu.memory_space<vmem>>, vector<1x16x16xf32>
    %219 = vector.shape_cast %218 : vector<1x16x16xf32> to vector<16x16xf32>
    %cst_214 = arith.constant dense<0.000000e+00> : vector<8x16xf32>
    %220 = tpu.matmul %13, %219, %cst_214 {dimension_numbers = #tpu.dot_dimension_numbers<[1], [0], [0], [1], [0, 0, 1, 1], [], []>} : vector<8x16xf32>, vector<16x16xf32>, vector<8x16xf32> -> vector<8x16xf32>
    %221 = arith.addf %217, %220 : vector<8x16xf32>
    %c3_215 = arith.constant 3 : index
    %c0_216 = arith.constant 0 : index
    %c0_217 = arith.constant 0 : index
    %222 = vector.load %arg6[%c3_215, %c0_216, %c0_217] : memref<7x8x8xf32, #tpu.memory_space<vmem>>, vector<1x8x8xf32>
    %223 = vector.shape_cast %222 : vector<1x8x8xf32> to vector<8x8xf32>
    %cst_218 = arith.constant dense<0.000000e+00> : vector<8x16xf32>
    %224 = tpu.matmul %223, %221, %cst_218 {dimension_numbers = #tpu.dot_dimension_numbers<[1], [0], [0], [1], [0, 0, 1, 1], [], []>} : vector<8x8xf32>, vector<8x16xf32>, vector<8x16xf32> -> vector<8x16xf32>
    %225 = arith.addf %214, %224 : vector<8x16xf32>
    %c4_219 = arith.constant 4 : index
    %c0_220 = arith.constant 0 : index
    %c0_221 = arith.constant 0 : index
    %226 = vector.load %arg4[%c4_219, %c0_220, %c0_221] : memref<14x16x16xf32, #tpu.memory_space<vmem>>, vector<1x16x16xf32>
    %227 = vector.shape_cast %226 : vector<1x16x16xf32> to vector<16x16xf32>
    %cst_222 = arith.constant dense<0.000000e+00> : vector<8x16xf32>
    %228 = tpu.matmul %10, %227, %cst_222 {dimension_numbers = #tpu.dot_dimension_numbers<[1], [0], [0], [1], [0, 0, 1, 1], [], []>} : vector<8x16xf32>, vector<16x16xf32>, vector<8x16xf32> -> vector<8x16xf32>
    %c11_223 = arith.constant 11 : index
    %c0_224 = arith.constant 0 : index
    %c0_225 = arith.constant 0 : index
    %229 = vector.load %arg4[%c11_223, %c0_224, %c0_225] : memref<14x16x16xf32, #tpu.memory_space<vmem>>, vector<1x16x16xf32>
    %230 = vector.shape_cast %229 : vector<1x16x16xf32> to vector<16x16xf32>
    %cst_226 = arith.constant dense<0.000000e+00> : vector<8x16xf32>
    %231 = tpu.matmul %13, %230, %cst_226 {dimension_numbers = #tpu.dot_dimension_numbers<[1], [0], [0], [1], [0, 0, 1, 1], [], []>} : vector<8x16xf32>, vector<16x16xf32>, vector<8x16xf32> -> vector<8x16xf32>
    %232 = arith.addf %228, %231 : vector<8x16xf32>
    %c4_227 = arith.constant 4 : index
    %c0_228 = arith.constant 0 : index
    %c0_229 = arith.constant 0 : index
    %233 = vector.load %arg6[%c4_227, %c0_228, %c0_229] : memref<7x8x8xf32, #tpu.memory_space<vmem>>, vector<1x8x8xf32>
    %234 = vector.shape_cast %233 : vector<1x8x8xf32> to vector<8x8xf32>
    %cst_230 = arith.constant dense<0.000000e+00> : vector<8x16xf32>
    %235 = tpu.matmul %234, %232, %cst_230 {dimension_numbers = #tpu.dot_dimension_numbers<[1], [0], [0], [1], [0, 0, 1, 1], [], []>} : vector<8x8xf32>, vector<8x16xf32>, vector<8x16xf32> -> vector<8x16xf32>
    %236 = arith.addf %225, %235 : vector<8x16xf32>
    %c5_231 = arith.constant 5 : index
    %c0_232 = arith.constant 0 : index
    %c0_233 = arith.constant 0 : index
    %237 = vector.load %arg4[%c5_231, %c0_232, %c0_233] : memref<14x16x16xf32, #tpu.memory_space<vmem>>, vector<1x16x16xf32>
    %238 = vector.shape_cast %237 : vector<1x16x16xf32> to vector<16x16xf32>
    %cst_234 = arith.constant dense<0.000000e+00> : vector<8x16xf32>
    %239 = tpu.matmul %10, %238, %cst_234 {dimension_numbers = #tpu.dot_dimension_numbers<[1], [0], [0], [1], [0, 0, 1, 1], [], []>} : vector<8x16xf32>, vector<16x16xf32>, vector<8x16xf32> -> vector<8x16xf32>
    %c12_235 = arith.constant 12 : index
    %c0_236 = arith.constant 0 : index
    %c0_237 = arith.constant 0 : index
    %240 = vector.load %arg4[%c12_235, %c0_236, %c0_237] : memref<14x16x16xf32, #tpu.memory_space<vmem>>, vector<1x16x16xf32>
    %241 = vector.shape_cast %240 : vector<1x16x16xf32> to vector<16x16xf32>
    %cst_238 = arith.constant dense<0.000000e+00> : vector<8x16xf32>
    %242 = tpu.matmul %13, %241, %cst_238 {dimension_numbers = #tpu.dot_dimension_numbers<[1], [0], [0], [1], [0, 0, 1, 1], [], []>} : vector<8x16xf32>, vector<16x16xf32>, vector<8x16xf32> -> vector<8x16xf32>
    %243 = arith.addf %239, %242 : vector<8x16xf32>
    %c5_239 = arith.constant 5 : index
    %c0_240 = arith.constant 0 : index
    %c0_241 = arith.constant 0 : index
    %244 = vector.load %arg6[%c5_239, %c0_240, %c0_241] : memref<7x8x8xf32, #tpu.memory_space<vmem>>, vector<1x8x8xf32>
    %245 = vector.shape_cast %244 : vector<1x8x8xf32> to vector<8x8xf32>
    %cst_242 = arith.constant dense<0.000000e+00> : vector<8x16xf32>
    %246 = tpu.matmul %245, %243, %cst_242 {dimension_numbers = #tpu.dot_dimension_numbers<[1], [0], [0], [1], [0, 0, 1, 1], [], []>} : vector<8x8xf32>, vector<8x16xf32>, vector<8x16xf32> -> vector<8x16xf32>
    %247 = arith.addf %236, %246 : vector<8x16xf32>
    %c6_243 = arith.constant 6 : index
    %c0_244 = arith.constant 0 : index
    %c0_245 = arith.constant 0 : index
    %248 = vector.load %arg4[%c6_243, %c0_244, %c0_245] : memref<14x16x16xf32, #tpu.memory_space<vmem>>, vector<1x16x16xf32>
    %249 = vector.shape_cast %248 : vector<1x16x16xf32> to vector<16x16xf32>
    %cst_246 = arith.constant dense<0.000000e+00> : vector<8x16xf32>
    %250 = tpu.matmul %10, %249, %cst_246 {dimension_numbers = #tpu.dot_dimension_numbers<[1], [0], [0], [1], [0, 0, 1, 1], [], []>} : vector<8x16xf32>, vector<16x16xf32>, vector<8x16xf32> -> vector<8x16xf32>
    %c13_247 = arith.constant 13 : index
    %c0_248 = arith.constant 0 : index
    %c0_249 = arith.constant 0 : index
    %251 = vector.load %arg4[%c13_247, %c0_248, %c0_249] : memref<14x16x16xf32, #tpu.memory_space<vmem>>, vector<1x16x16xf32>
    %252 = vector.shape_cast %251 : vector<1x16x16xf32> to vector<16x16xf32>
    %cst_250 = arith.constant dense<0.000000e+00> : vector<8x16xf32>
    %253 = tpu.matmul %13, %252, %cst_250 {dimension_numbers = #tpu.dot_dimension_numbers<[1], [0], [0], [1], [0, 0, 1, 1], [], []>} : vector<8x16xf32>, vector<16x16xf32>, vector<8x16xf32> -> vector<8x16xf32>
    %254 = arith.addf %250, %253 : vector<8x16xf32>
    %c6_251 = arith.constant 6 : index
    %c0_252 = arith.constant 0 : index
    %c0_253 = arith.constant 0 : index
    %255 = vector.load %arg6[%c6_251, %c0_252, %c0_253] : memref<7x8x8xf32, #tpu.memory_space<vmem>>, vector<1x8x8xf32>
    %256 = vector.shape_cast %255 : vector<1x8x8xf32> to vector<8x8xf32>
    %cst_254 = arith.constant dense<0.000000e+00> : vector<8x16xf32>
    %257 = tpu.matmul %256, %254, %cst_254 {dimension_numbers = #tpu.dot_dimension_numbers<[1], [0], [0], [1], [0, 0, 1, 1], [], []>} : vector<8x8xf32>, vector<8x16xf32>, vector<8x16xf32> -> vector<8x16xf32>
    %258 = arith.addf %247, %257 : vector<8x16xf32>
    %259 = vector.broadcast %182 : f32 to vector<8x16xf32>
    %260 = arith.addf %258, %259 : vector<8x16xf32>
    %261 = arith.negf %260 : vector<8x16xf32>
    %262 = math.exp %261 : vector<8x16xf32>
    %cst_255 = arith.constant 1.000000e+00 : f32
    %263 = vector.broadcast %cst_255 : f32 to vector<8x16xf32>
    %264 = arith.addf %263, %262 : vector<8x16xf32>
    %265 = arith.divf %263, %264 : vector<8x16xf32>
    %266 = vector.shape_cast %97 : vector<16x16xf32> to vector<1x16x16xf32>
    %267 = vector.shape_cast %181 : vector<8x16xf32> to vector<8x1x16xf32>
    %268 = vector.broadcast %266 : vector<1x16x16xf32> to vector<8x16x16xf32>
    %269 = vector.broadcast %267 : vector<8x1x16xf32> to vector<8x16x16xf32>
    %270 = arith.addf %268, %269 : vector<8x16x16xf32>
    %271 = vector.shape_cast %265 : vector<8x16xf32> to vector<8x16x1xf32>
    %272 = vector.broadcast %271 : vector<8x16x1xf32> to vector<8x16x16xf32>
    %273 = arith.addf %270, %272 : vector<8x16x16xf32>
    %cst_256 = arith.constant 0.333333343 : f32
    %274 = vector.broadcast %cst_256 : f32 to vector<8x16x16xf32>
    %275 = arith.mulf %273, %274 : vector<8x16x16xf32>
    %276 = arith.mulf %1, %275 : vector<8x16x16xf32>
    %c0_257 = arith.constant 0 : index
    %c0_258 = arith.constant 0 : index
    %c0_259 = arith.constant 0 : index
    %c0_260 = arith.constant 0 : index
    %277 = vector.load %arg8[%c0_257, %c0_258, %c0_259, %c0_260] : memref<1x8x16x16xf32, #tpu.memory_space<vmem>>, vector<1x8x16x16xf32>
    %278 = vector.shape_cast %277 : vector<1x8x16x16xf32> to vector<8x16x16xf32>
    %279 = vector.shape_cast %276 : vector<8x16x16xf32> to vector<1x8x16x16xf32>
    tpu.vector_store %arg8[%c0_257, %c0_258, %c0_259, %c0_260], %279 {strides = array<i32>} : memref<1x8x16x16xf32, #tpu.memory_space<vmem>>, vector<1x8x16x16xf32>,
    return
  }
  func.func @transform_0(%arg0: i32) -> (i32, i32, i32, i32) {
    %c0_i32 = arith.constant 0 : i32
    %c0_i32_0 = arith.constant 0 : i32
    %c0_i32_1 = arith.constant 0 : i32
    %c0_i32_2 = arith.constant 0 : i32
    return %arg0, %c0_i32, %c0_i32_0, %c0_i32_1 : i32, i32, i32, i32
  }
  func.func @transform_1(%arg0: i32) -> (i32, i32, i32) {
    %c0_i32 = arith.constant 0 : i32
    %c0_i32_0 = arith.constant 0 : i32
    %c0_i32_1 = arith.constant 0 : i32
    %c0_i32_2 = arith.constant 0 : i32
    return %c0_i32, %c0_i32_0, %c0_i32_1 : i32, i32, i32
  }
  func.func @transform_2(%arg0: i32) -> (i32, i32, i32) {
    %c0_i32 = arith.constant 0 : i32
    %c0_i32_0 = arith.constant 0 : i32
    %c0_i32_1 = arith.constant 0 : i32
    %c0_i32_2 = arith.constant 0 : i32
    return %c0_i32, %c0_i32_0, %c0_i32_1 : i32, i32, i32
  }
  func.func @transform_3(%arg0: i32) -> (i32, i32, i32) {
    %c0_i32 = arith.constant 0 : i32
    %c0_i32_0 = arith.constant 0 : i32
    %c0_i32_1 = arith.constant 0 : i32
    %c0_i32_2 = arith.constant 0 : i32
    return %c0_i32, %c0_i32_0, %c0_i32_1 : i32, i32, i32
  }
  func.func @transform_4(%arg0: i32) -> (i32, i32, i32) {
    %c0_i32 = arith.constant 0 : i32
    %c0_i32_0 = arith.constant 0 : i32
    %c0_i32_1 = arith.constant 0 : i32
    %c0_i32_2 = arith.constant 0 : i32
    return %c0_i32, %c0_i32_0, %c0_i32_1 : i32, i32, i32
  }
  func.func @transform_5(%arg0: i32) -> (i32, i32, i32) {
    %c0_i32 = arith.constant 0 : i32
    %c0_i32_0 = arith.constant 0 : i32
    %c0_i32_1 = arith.constant 0 : i32
    %c0_i32_2 = arith.constant 0 : i32
    return %c0_i32, %c0_i32_0, %c0_i32_1 : i32, i32, i32
  }
  func.func @transform_6(%arg0: i32) -> i32 {
    %c0_i32 = arith.constant 0 : i32
    %c0_i32_0 = arith.constant 0 : i32
    return %c0_i32 : i32
  }
  func.func @transform_7(%arg0: i32) -> (i32, i32, i32, i32) {
    %c0_i32 = arith.constant 0 : i32
    %c0_i32_0 = arith.constant 0 : i32
    %c0_i32_1 = arith.constant 0 : i32
    %c0_i32_2 = arith.constant 0 : i32
    return %arg0, %c0_i32, %c0_i32_0, %c0_i32_1 : i32, i32, i32, i32
  }
}

</mosaic_0001>

<llo_original>
// kernel: triplet_attention_forward.1
$region0: #{triplet_attention_forward.1}
  #allocation0 [shape = 'u32[]', space=smem, size = 0x4, offset = 0x4, fixed_abs, tag = 'smem constant byte address 0x4 - core index']
  #allocation1 [shape = 'u32[72,128]{1,0:T(1,128)}', space=vmem, size = 0x9000, scoped, tag = 'internal scratch']
  %s0 = inlined_call_operand.vmem [shape: f32[2,8,16,16], index: 0, kind: input, shape index: {}]
  %s1 = inlined_call_operand.vmem [shape: f32[14,16,16], index: 1, kind: input, shape index: {}]
  %s2 = inlined_call_operand.vmem [shape: f32[14,16,16], index: 2, kind: input, shape index: {}]
  %s3 = inlined_call_operand.vmem [shape: f32[14,16,16], index: 3, kind: input, shape index: {}]
  %s4 = inlined_call_operand.vmem [shape: f32[7,16,16], index: 4, kind: input, shape index: {}]
  %s5 = inlined_call_operand.vmem [shape: f32[7,8,8], index: 5, kind: input, shape index: {}]
  %s6 = inlined_call_operand.vmem [shape: f32[3], index: 6, kind: input, shape index: {}]
  %s7 = inlined_call_operand.hbm [shape: f32[2,8,16,16], index: 7, kind: output, shape index: {}]
  %s8 = sld [smem:[#allocation0]]
  $region65: #{triplet_attention_forward.1} parent=0
    _
  %s10 = ssub.s32 1, %s8
  %s11 = scalar_select 0, %s10, %s8
  $region1: #{triplet_attention_forward.1} parent=0
    #allocation2 [shape = 'u8[512]{0}', space=smem, size = 0x200, scoped, tag = 'input window, operand 6, single buffered']
    #allocation3 [shape = 's32[2]{0}', space=sflag, size = 0x8, scoped, tag = 'scoped memory for triplet_attention_forward.1']
    #allocation4 [shape = 's32[2]{0}', space=sflag, size = 0x8, scoped, tag = 'scoped memory for triplet_attention_forward.1']
    #allocation5 [shape = 'u8[131072]{0}', space=vmem, size = 0x20000, scoped, tag = 'output window, operand 0']
    %12 = vsyncpa [#allocation4], 0
    %13 = vsyncpa [#allocation3], 0
    %s14 = scalar_lea.sflag [#allocation3], 1
    %15 = vsyncpa %s14, 0
    loop: start=0, step=1, limit=4
    $region2: #{triplet_attention_forward.1} parent=1 // loop_pre_header
      _
    $region3: #{triplet_attention_forward.1} parent=1 // loop_header
      %s17 = sphi 0, %s21
      %p18 = scmp.ge.s32.totalorder %s17, 4
      %s27 = sphi 0, %s29
      %s30 = sphi 0, %s27
      %s31 = sphi 0, %s30
      %s47 = sphi 0, %s31
      %s51 = sphi 0, %s51
      %s53 = sphi 0, %s51
      %s54 = sphi 0, %s53
      %s68 = sphi 0, %s54
      %s72 = sphi 0, %s72
      %s74 = sphi 0, %s72
      %s75 = sphi 0, %s74
      %s89 = sphi 0, %s75
      %s93 = sphi 0, %s93
      %s95 = sphi 0, %s93
      %s96 = sphi 0, %s95
      %s110 = sphi 0, %s96
      %s114 = sphi 0, %s114
      %s116 = sphi 0, %s114
      %s117 = sphi 0, %s116
      %s131 = sphi 0, %s117
      %s135 = sphi 0, %s135
      %s137 = sphi 0, %s135
      %s138 = sphi 0, %s137
      %s152 = sphi 0, %s138
      %s156 = sphi 0, %s156
      %s158 = sphi 0, %s156
      %s159 = sphi 0, %s158
      %s173 = sphi 0, %s159
      %s179 = sphi 0, %s181
      %s182 = sphi 0, %s179
      %s183 = sphi 0, %s182
      %s199 = sphi 0, %s183
    $region4: #{triplet_attention_forward.1} parent=1 // loop_header_branch
      %20 = sbr.rel (%p18) target = $region8
    $region5: #{triplet_attention_forward.1} parent=1 // loop_body
      %s22 = ssub.s32 %s17, 1
      %s23 = ssub.s32 %s17, 2
      %s24 = sadd.s32 %s17, 1
      %s25 = ssub.s32 %s17, %s24
      %p26 = scmp.eq.s32.totalorder %s25, 0
      %s28 = sadd.s32 %s27, 1
      %s29 = scalar_select %p26, %s27, %s28
      %p32 = pneg %p26
      %p33 = scmp.eq.s32.totalorder %s17, 1
      %p34 = por %p32, %p33
      %p35 = scmp.ne.s32.totalorder %s27, %s30
      %p36 = scmp.eq.s32.totalorder %s17, 0
      %p37 = por %p35, %p36
      %p38 = scmp.ne.s32.totalorder %s27, %s30
      %p39 = scmp.eq.s32.totalorder %s22, 1
      %p40 = por %p38, %p39
      %p41 = scmp.ne.s32.totalorder %s30, %s31
      %p42 = scmp.eq.s32.totalorder %s22, 0
      %p43 = por %p41, %p42
      %p44 = scmp.ne.s32.totalorder %s30, %s31
      %p45 = scmp.eq.s32.totalorder %s23, 1
      %p46 = por %p44, %p45
      %p48 = scmp.ne.s32.totalorder %s31, %s47
      %p49 = scmp.eq.s32.totalorder %s23, 0
      %p50 = por %p48, %p49
      %s52 = sadd.s32 %s51, 1
      %p55 = scmp.eq.s32.totalorder %s17, 1
      %p56 = scmp.ne.s32.totalorder %s51, %s53
      %p57 = scmp.eq.s32.totalorder %s17, 0
      %p58 = por %p56, %p57
      %p59 = scmp.ne.s32.totalorder %s51, %s53
      %p60 = scmp.eq.s32.totalorder %s22, 1
      %p61 = por %p59, %p60
      %p62 = scmp.ne.s32.totalorder %s53, %s54
      %p63 = scmp.eq.s32.totalorder %s22, 0
      %p64 = por %p62, %p63
      %p65 = scmp.ne.s32.totalorder %s53, %s54
      %p66 = scmp.eq.s32.totalorder %s23, 1
      %p67 = por %p65, %p66
      %p69 = scmp.ne.s32.totalorder %s54, %s68
      %p70 = scmp.eq.s32.totalorder %s23, 0
      %p71 = por %p69, %p70
      %s73 = sadd.s32 %s72, 1
      %p76 = scmp.eq.s32.totalorder %s17, 1
      %p77 = scmp.ne.s32.totalorder %s72, %s74
      %p78 = scmp.eq.s32.totalorder %s17, 0
      %p79 = por %p77, %p78
      %p80 = scmp.ne.s32.totalorder %s72, %s74
      %p81 = scmp.eq.s32.totalorder %s22, 1
      %p82 = por %p80, %p81
      %p83 = scmp.ne.s32.totalorder %s74, %s75
      %p84 = scmp.eq.s32.totalorder %s22, 0
      %p85 = por %p83, %p84
      %p86 = scmp.ne.s32.totalorder %s74, %s75
      %p87 = scmp.eq.s32.totalorder %s23, 1
      %p88 = por %p86, %p87
      %p90 = scmp.ne.s32.totalorder %s75, %s89
      %p91 = scmp.eq.s32.totalorder %s23, 0
      %p92 = por %p90, %p91
      %s94 = sadd.s32 %s93, 1
      %p97 = scmp.eq.s32.totalorder %s17, 1
      %p98 = scmp.ne.s32.totalorder %s93, %s95
      %p99 = scmp.eq.s32.totalorder %s17, 0
      %p100 = por %p98, %p99
      %p101 = scmp.ne.s32.totalorder %s93, %s95
      %p102 = scmp.eq.s32.totalorder %s22, 1
      %p103 = por %p101, %p102
      %p104 = scmp.ne.s32.totalorder %s95, %s96
      %p105 = scmp.eq.s32.totalorder %s22, 0
      %p106 = por %p104, %p105
      %p107 = scmp.ne.s32.totalorder %s95, %s96
      %p108 = scmp.eq.s32.totalorder %s23, 1
      %p109 = por %p107, %p108
      %p111 = scmp.ne.s32.totalorder %s96, %s110
      %p112 = scmp.eq.s32.totalorder %s23, 0
      %p113 = por %p111, %p112
      %s115 = sadd.s32 %s114, 1
      %p118 = scmp.eq.s32.totalorder %s17, 1
      %p119 = scmp.ne.s32.totalorder %s114, %s116
      %p120 = scmp.eq.s32.totalorder %s17, 0
      %p121 = por %p119, %p120
      %p122 = scmp.ne.s32.totalorder %s114, %s116
      %p123 = scmp.eq.s32.totalorder %s22, 1
      %p124 = por %p122, %p123
      %p125 = scmp.ne.s32.totalorder %s116, %s117
      %p126 = scmp.eq.s32.totalorder %s22, 0
      %p127 = por %p125, %p126
      %p128 = scmp.ne.s32.totalorder %s116, %s117
      %p129 = scmp.eq.s32.totalorder %s23, 1
      %p130 = por %p128, %p129
      %p132 = scmp.ne.s32.totalorder %s117, %s131
      %p133 = scmp.eq.s32.totalorder %s23, 0
      %p134 = por %p132, %p133
      %s136 = sadd.s32 %s135, 1
      %p139 = scmp.eq.s32.totalorder %s17, 1
      %p140 = scmp.ne.s32.totalorder %s135, %s137
      %p141 = scmp.eq.s32.totalorder %s17, 0
      %p142 = por %p140, %p141
      %p143 = scmp.ne.s32.totalorder %s135, %s137
      %p144 = scmp.eq.s32.totalorder %s22, 1
      %p145 = por %p143, %p144
      %p146 = scmp.ne.s32.totalorder %s137, %s138
      %p147 = scmp.eq.s32.totalorder %s22, 0
      %p148 = por %p146, %p147
      %p149 = scmp.ne.s32.totalorder %s137, %s138
      %p150 = scmp.eq.s32.totalorder %s23, 1
      %p151 = por %p149, %p150
      %p153 = scmp.ne.s32.totalorder %s138, %s152
      %p154 = scmp.eq.s32.totalorder %s23, 0
      %p155 = por %p153, %p154
      %s157 = sadd.s32 %s156, 1
      %p160 = scmp.eq.s32.totalorder %s17, 1
      %p161 = scmp.ne.s32.totalorder %s156, %s158
      %p162 = scmp.eq.s32.totalorder %s17, 0
      %p163 = por %p161, %p162
      %p164 = scmp.ne.s32.totalorder %s156, %s158
      %p165 = scmp.eq.s32.totalorder %s22, 1
      %p166 = por %p164, %p165
      %p167 = scmp.ne.s32.totalorder %s158, %s159
      %p168 = scmp.eq.s32.totalorder %s22, 0
      %p169 = por %p167, %p168
      %p170 = scmp.ne.s32.totalorder %s158, %s159
      %p171 = scmp.eq.s32.totalorder %s23, 1
      %p172 = por %p170, %p171
      %p174 = scmp.ne.s32.totalorder %s159, %s173
      %p175 = scmp.eq.s32.totalorder %s23, 0
      %p176 = por %p174, %p175
      %s177 = ssub.s32 %s17, %s24
      %p178 = scmp.eq.s32.totalorder %s177, 0
      %s180 = sadd.s32 %s179, 1
      %s181 = scalar_select %p178, %s179, %s180
      %p184 = pneg %p178
      %p185 = scmp.eq.s32.totalorder %s17, 1
      %p186 = por %p184, %p185
      %p187 = scmp.ne.s32.totalorder %s179, %s182
      %p188 = scmp.eq.s32.totalorder %s17, 0
      %p189 = por %p187, %p188
      %p190 = scmp.ne.s32.totalorder %s179, %s182
      %p191 = scmp.eq.s32.totalorder %s22, 1
      %p192 = por %p190, %p191
      %p193 = scmp.ne.s32.totalorder %s182, %s183
      %p194 = scmp.eq.s32.totalorder %s22, 0
      %p195 = por %p193, %p194
      %p196 = scmp.ne.s32.totalorder %s182, %s183
      %p197 = scmp.eq.s32.totalorder %s23, 1
      %p198 = por %p196, %p197
      %p200 = scmp.ne.s32.totalorder %s183, %s199
      %p201 = scmp.eq.s32.totalorder %s23, 0
      %p202 = por %p200, %p201
      %p203 = scmp.le.s32.totalorder 1, %s17
      %p204 = scmp.lt.s32.totalorder %s17, 3
      %p205 = pnand %p203, %p204
      %p206 = pneg %p205
      // Predicated region
      $region9: #{triplet_attention_forward.1} parent=5 // pred_check
        _
      $region10: #{triplet_attention_forward.1} parent=5 // pred_check_branch
        %208 = sbr.rel (%p205) target = $region12
      $region11: #{triplet_attention_forward.1} parent=5 // pred_region
        %s209 = ssub.s32 %s17, 1
        // Predicated region
        $region13: #{triplet_attention_forward.1} parent=11 // pred_check
          %p210 = pneg %p64
        $region14: #{triplet_attention_forward.1} parent=11 // pred_check_branch
          %212 = sbr.rel (%p210) target = $region16
        $region15: #{triplet_attention_forward.1} parent=11 // pred_region
          _
        $region16: #{triplet_attention_forward.1} parent=11 // pred_fallthru
          _
        // Predicated region
        $region17: #{triplet_attention_forward.1} parent=11 // pred_check
          %p213 = pneg %p85
        $region18: #{triplet_attention_forward.1} parent=11 // pred_check_branch
          %215 = sbr.rel (%p213) target = $region20
        $region19: #{triplet_attention_forward.1} parent=11 // pred_region
          _
        $region20: #{triplet_attention_forward.1} parent=11 // pred_fallthru
          _
        // Predicated region
        $region21: #{triplet_attention_forward.1} parent=11 // pred_check
          %p216 = pneg %p106
        $region22: #{triplet_attention_forward.1} parent=11 // pred_check_branch
          %218 = sbr.rel (%p216) target = $region24
        $region23: #{triplet_attention_forward.1} parent=11 // pred_region
          _
        $region24: #{triplet_attention_forward.1} parent=11 // pred_fallthru
          _
        // Predicated region
        $region25: #{triplet_attention_forward.1} parent=11 // pred_check
          %p219 = pneg %p127
        $region26: #{triplet_attention_forward.1} parent=11 // pred_check_branch
          %221 = sbr.rel (%p219) target = $region28
        $region27: #{triplet_attention_forward.1} parent=11 // pred_region
          _
        $region28: #{triplet_attention_forward.1} parent=11 // pred_fallthru
          _
        // Predicated region
        $region29: #{triplet_attention_forward.1} parent=11 // pred_check
          %p222 = pneg %p148
        $region30: #{triplet_attention_forward.1} parent=11 // pred_check_branch
          %224 = sbr.rel (%p222) target = $region32
        $region31: #{triplet_attention_forward.1} parent=11 // pred_region
          _
        $region32: #{triplet_attention_forward.1} parent=11 // pred_fallthru
          _
        // Predicated region
        $region33: #{triplet_attention_forward.1} parent=11 // pred_check
          %p225 = pneg %p169
        $region34: #{triplet_attention_forward.1} parent=11 // pred_check_branch
          %227 = sbr.rel (%p225) target = $region36
        $region35: #{triplet_attention_forward.1} parent=11 // pred_region
          %229 = vsyncadd [#allocation4], 0
          %s231 = sshll.u32 %s6, 4
          %s232 = int_to_ptr.vmem [resolvable:$true] %s231
          %234 = dma.vmem_to_smem %s232, 16, [#allocation2], [#allocation4]
        $region36: #{triplet_attention_forward.1} parent=11 // pred_fallthru
          _
      $region12: #{triplet_attention_forward.1} parent=5 // pred_fallthru
        _
      %p235 = scmp.lt.s32.totalorder %s17, 2
      // Predicated region
      $region37: #{triplet_attention_forward.1} parent=5 // pred_check
        %p236 = pneg %p235
      $region38: #{triplet_attention_forward.1} parent=5 // pred_check_branch
        %238 = sbr.rel (%p236) target = $region40
      $region39: #{triplet_attention_forward.1} parent=5 // pred_region
        // Predicated region
        $region41: #{triplet_attention_forward.1} parent=39 // pred_check
          %p239 = pneg %p37
        $region42: #{triplet_attention_forward.1} parent=39 // pred_check_branch
          %241 = sbr.rel (%p239) target = $region44
        $region43: #{triplet_attention_forward.1} parent=39 // pred_region
          %p242 = scmp.lt.s32.totalorder %s17, 1
          %s243 = scalar_select %p242, %s17, 1
          %s244 = smul.addr %s243, 16
          %s245 = smul.addr %s244, 8
          %s246 = scalar_lea.vmem %s0, %s245
        $region44: #{triplet_attention_forward.1} parent=39 // pred_fallthru
          _
      $region40: #{triplet_attention_forward.1} parent=5 // pred_fallthru
        _
      %p247 = scmp.le.s32.totalorder 1, %s17
      %p248 = scmp.lt.s32.totalorder %s17, 3
      %p249 = pnand %p247, %p248
      %p250 = pneg %p249
      // Predicated region
      $region45: #{triplet_attention_forward.1} parent=5 // pred_check
        _
      $region46: #{triplet_attention_forward.1} parent=5 // pred_check_branch
        %252 = sbr.rel (%p249) target = $region48
      $region47: #{triplet_attention_forward.1} parent=5 // pred_region
        %s253 = ssub.s32 %s17, 1
        // Predicated region
        $region49: #{triplet_attention_forward.1} parent=47 // pred_check
          %p254 = pneg %p169
        $region50: #{triplet_attention_forward.1} parent=47 // pred_check_branch
          %256 = sbr.rel (%p254) target = $region52
        $region51: #{triplet_attention_forward.1} parent=47 // pred_region
          %258 = dma.done [#allocation4], 16
        $region52: #{triplet_attention_forward.1} parent=47 // pred_fallthru
          _
        %259 = sfence
        %p260 = scmp.lt.s32.totalorder %s22, 1
        %s261 = scalar_select %p260, %s22, 1
        %s262 = smul.addr %s261, 16
        %s263 = smul.addr %s262, 8
        %s264 = scalar_lea.vmem %s0, %s263
        %p265 = pneg %p43
        %p266 = pneg %p40
        %p267 = pneg %p64
        %p268 = pneg %p61
        %p269 = pneg %p85
        %p270 = pneg %p82
        %p271 = pneg %p106
        %p272 = pneg %p103
        %p273 = pneg %p127
        %p274 = pneg %p124
        %p275 = pneg %p148
        %p276 = pneg %p145
        %p277 = pneg %p169
        %p278 = pneg %p166
        %p279 = pneg %p195
        %p280 = pneg %p192
        %s281 = sand.u32 %s182, 1
        %s282 = scalar_lea.sflag [#allocation3], %s281
        %s283 = sand.u32 %s182, 1
        %s284 = smul.addr %s283, 128
        %s285 = scalar_lea.vmem [#allocation5], %s284
        %p286 = scmp.lt.s32.totalorder %s22, 1
        %s287 = scalar_select %p286, %s22, 1
        %s288 = smul.addr %s287, 16
        %s289 = smul.addr %s288, 8
        %s290 = scalar_lea.vmem %s0, %s289
        %v291 = vld [vmem:[%s290] sm:$0xff]
        %v292 = vld [vmem:[%s290 + $0x8] sm:$0xff]
        %v293 = vld [vmem:[%s290 + $0x10] sm:$0xff]
        %v294 = vld [vmem:[%s290 + $0x18] sm:$0xff]
        %v295 = vld [vmem:[%s290 + $0x20] sm:$0xff]
        %v296 = vld [vmem:[%s290 + $0x28] sm:$0xff]
        %v297 = vld [vmem:[%s290 + $0x30] sm:$0xff]
        %v298 = vld [vmem:[%s290 + $0x38] sm:$0xff]
        %v299 = vld [vmem:[%s290 + $0x40] sm:$0xff]
        %v300 = vld [vmem:[%s290 + $0x48] sm:$0xff]
        %v301 = vld [vmem:[%s290 + $0x50] sm:$0xff]
        %v302 = vld [vmem:[%s290 + $0x58] sm:$0xff]
        %v303 = vld [vmem:[%s290 + $0x60] sm:$0xff]
        %v304 = vld [vmem:[%s290 + $0x68] sm:$0xff]
        %v305 = vld [vmem:[%s290 + $0x70] sm:$0xff]
        %v306 = vld [vmem:[%s290 + $0x78] sm:$0xff]
        %vm307 = vcmask 130048
        %v308 = vsel %vm307, %v291, -inf
        %v309 = vsel %vm307, %v293, -inf
        %v310 = vsel %vm307, %v295, -inf
        %v311 = vmax.f32 %v308, %v310
        %v312 = vsel %vm307, %v297, -inf
        %v313 = vmax.f32 %v309, %v312
        %v314 = vsel %vm307, %v299, -inf
        %v315 = vmax.f32 %v311, %v314
        %v316 = vsel %vm307, %v301, -inf
        %v317 = vmax.f32 %v313, %v316
        %v318 = vsel %vm307, %v303, -inf
        %v319 = vmax.f32 %v315, %v318
        %v320 = vsel %vm307, %v305, -inf
        %v321 = vmax.f32 %v317, %v320
        %v322 = vmax.f32 %v319, %v321
        %v323 = vsel %vm307, %v292, -inf
        %v324 = vsel %vm307, %v294, -inf
        %v325 = vsel %vm307, %v296, -inf
        %v326 = vmax.f32 %v323, %v325
        %v327 = vsel %vm307, %v298, -inf
        %v328 = vmax.f32 %v324, %v327
        %v329 = vsel %vm307, %v300, -inf
        %v330 = vmax.f32 %v326, %v329
        %v331 = vsel %vm307, %v302, -inf
        %v332 = vmax.f32 %v328, %v331
        %v333 = vsel %vm307, %v304, -inf
        %v334 = vmax.f32 %v330, %v333
        %v335 = vsel %vm307, %v306, -inf
        %v336 = vmax.f32 %v332, %v335
        %v337 = vmax.f32 %v334, %v336
        %v338 = vsel %vm307, %v291, 0.0
        %v339 = vsel %vm307, %v293, 0.0
        %v340 = vadd.f32 %v338, %v339
        %v341 = vsel %vm307, %v295, 0.0
        %v342 = vadd.f32 %v340, %v341
        %v343 = vsel %vm307, %v297, 0.0
        %v344 = vadd.f32 %v342, %v343
        %v345 = vsel %vm307, %v299, 0.0
        %v346 = vadd.f32 %v344, %v345
        %v347 = vsel %vm307, %v301, 0.0
        %v348 = vadd.f32 %v346, %v347
        %v349 = vsel %vm307, %v303, 0.0
        %v350 = vadd.f32 %v348, %v349
        %v351 = vsel %vm307, %v305, 0.0
        %v352 = vadd.f32 %v350, %v351
        %v353 = vsel %vm307, %v292, 0.0
        %v354 = vsel %vm307, %v294, 0.0
        %v355 = vadd.f32 %v353, %v354
        %v356 = vsel %vm307, %v296, 0.0
        %v357 = vadd.f32 %v355, %v356
        %v358 = vsel %vm307, %v298, 0.0
        %v359 = vadd.f32 %v357, %v358
        %v360 = vsel %vm307, %v300, 0.0
        %v361 = vadd.f32 %v359, %v360
        %v362 = vsel %vm307, %v302, 0.0
        %v363 = vadd.f32 %v361, %v362
        %v364 = vsel %vm307, %v304, 0.0
        %v365 = vadd.f32 %v363, %v364
        %v366 = vsel %vm307, %v306, 0.0
        %v367 = vadd.f32 %v365, %v366
        %v368 = vrcp.pop 8.0
        %v369 = vmul.f32 8.0, %v368
        %v370 = vsub.f32 1.0, %v369
        %v371 = vmul.f32 %v368, %v370
        %v372 = vadd.f32 %v368, %v371
        %vm373 = vweird.f32 %v368
        %v374 = vsel %vm373, %v368, %v372
        %v375 = vmul.f32 %v352, %v374
        %v376 = vmul.f32 %v367, %v374
        %v377 = vmax.f32 %v308, %v323
        %v378 = vrot.slane %v377, 4
        %v379 = vmax.f32 %v377, %v378
        %v380 = vrot.slane %v379, 2
        %v381 = vmax.f32 %v379, %v380
        %v382 = vrot.slane %v381, 1
        %v383 = vmax.f32 %v381, %v382
        %v384 = vmax.f32 %v309, %v324
        %v385 = vrot.slane %v384, 4
        %v386 = vmax.f32 %v384, %v385
        %v387 = vrot.slane %v386, 2
        %v388 = vmax.f32 %v386, %v387
        %v389 = vrot.slane %v388, 1
        %v390 = vmax.f32 %v388, %v389
        %v391 = vmax.f32 %v310, %v325
        %v392 = vrot.slane %v391, 4
        %v393 = vmax.f32 %v391, %v392
        %v394 = vrot.slane %v393, 2
        %v395 = vmax.f32 %v393, %v394
        %v396 = vrot.slane %v395, 1
        %v397 = vmax.f32 %v395, %v396
        %v398 = vmax.f32 %v312, %v327
        %v399 = vrot.slane %v398, 4
        %v400 = vmax.f32 %v398, %v399
        %v401 = vrot.slane %v400, 2
        %v402 = vmax.f32 %v400, %v401
        %v403 = vrot.slane %v402, 1
        %v404 = vmax.f32 %v402, %v403
        %v405 = vmax.f32 %v314, %v329
        %v406 = vrot.slane %v405, 4
        %v407 = vmax.f32 %v405, %v406
        %v408 = vrot.slane %v407, 2
        %v409 = vmax.f32 %v407, %v408
        %v410 = vrot.slane %v409, 1
        %v411 = vmax.f32 %v409, %v410
        %v412 = vmax.f32 %v316, %v331
        %v413 = vrot.slane %v412, 4
        %v414 = vmax.f32 %v412, %v413
        %v415 = vrot.slane %v414, 2
        %v416 = vmax.f32 %v414, %v415
        %v417 = vrot.slane %v416, 1
        %v418 = vmax.f32 %v416, %v417
        %v419 = vmax.f32 %v318, %v333
        %v420 = vrot.slane %v419, 4
        %v421 = vmax.f32 %v419, %v420
        %v422 = vrot.slane %v421, 2
        %v423 = vmax.f32 %v421, %v422
        %v424 = vrot.slane %v423, 1
        %v425 = vmax.f32 %v423, %v424
        %v426 = vmax.f32 %v320, %v335
        %v427 = vrot.slane %v426, 4
        %v428 = vmax.f32 %v426, %v427
        %v429 = vrot.slane %v428, 2
        %v430 = vmax.f32 %v428, %v429
        %v431 = vrot.slane %v430, 1
        %v432 = vmax.f32 %v430, %v431
        %v433 = vadd.f32 %v338, %v353
        %v434 = vrot.slane %v433, 4
        %v435 = vadd.f32 %v433, %v434
        %v436 = vrot.slane %v435, 2
        %v437 = vadd.f32 %v435, %v436
        %v438 = vrot.slane %v437, 1
        %v439 = vadd.f32 %v437, %v438
        %v440 = vadd.f32 %v339, %v354
        %v441 = vrot.slane %v440, 4
        %v442 = vadd.f32 %v440, %v441
        %v443 = vrot.slane %v442, 2
        %v444 = vadd.f32 %v442, %v443
        %v445 = vrot.slane %v444, 1
        %v446 = vadd.f32 %v444, %v445
        %v447 = vadd.f32 %v341, %v356
        %v448 = vrot.slane %v447, 4
        %v449 = vadd.f32 %v447, %v448
        %v450 = vrot.slane %v449, 2
        %v451 = vadd.f32 %v449, %v450
        %v452 = vrot.slane %v451, 1
        %v453 = vadd.f32 %v451, %v452
        %v454 = vadd.f32 %v343, %v358
        %v455 = vrot.slane %v454, 4
        %v456 = vadd.f32 %v454, %v455
        %v457 = vrot.slane %v456, 2
        %v458 = vadd.f32 %v456, %v457
        %v459 = vrot.slane %v458, 1
        %v460 = vadd.f32 %v458, %v459
        %v461 = vadd.f32 %v345, %v360
        %v462 = vrot.slane %v461, 4
        %v463 = vadd.f32 %v461, %v462
        %v464 = vrot.slane %v463, 2
        %v465 = vadd.f32 %v463, %v464
        %v466 = vrot.slane %v465, 1
        %v467 = vadd.f32 %v465, %v466
        %v468 = vadd.f32 %v347, %v362
        %v469 = vrot.slane %v468, 4
        %v470 = vadd.f32 %v468, %v469
        %v471 = vrot.slane %v470, 2
        %v472 = vadd.f32 %v470, %v471
        %v473 = vrot.slane %v472, 1
        %v474 = vadd.f32 %v472, %v473
        %v475 = vadd.f32 %v349, %v364
        %v476 = vrot.slane %v475, 4
        %v477 = vadd.f32 %v475, %v476
        %v478 = vrot.slane %v477, 2
        %v479 = vadd.f32 %v477, %v478
        %v480 = vrot.slane %v479, 1
        %v481 = vadd.f32 %v479, %v480
        %v482 = vadd.f32 %v351, %v366
        %v483 = vrot.slane %v482, 4
        %v484 = vadd.f32 %v482, %v483
        %v485 = vrot.slane %v484, 2
        %v486 = vadd.f32 %v484, %v485
        %v487 = vrot.slane %v486, 1
        %v488 = vadd.f32 %v486, %v487
        %v489 = vrcp.pop 16.0
        %v490 = vmul.f32 16.0, %v489
        %v491 = vsub.f32 1.0, %v490
        %v492 = vmul.f32 %v489, %v491
        %v493 = vadd.f32 %v489, %v492
        %vm494 = vweird.f32 %v489
        %v495 = vsel %vm494, %v489, %v493
        %v496 = vmul.f32 %v439, %v495
        %v497 = vmul.f32 %v446, %v495
        %v498 = vmul.f32 %v453, %v495
        %v499 = vmul.f32 %v460, %v495
        %v500 = vmul.f32 %v467, %v495
        %v501 = vmul.f32 %v474, %v495
        %v502 = vmul.f32 %v481, %v495
        %v503 = vmul.f32 %v488, %v495
        %504 = vmax.xlane.f32.xlu0 %v308
        %v505 = vpop.xlane.xlu0 %504
        %506 = vmax.xlane.f32.xlu0 %v323
        %v507 = vpop.xlane.xlu0 %506
        %508 = vmax.xlane.f32.xlu0 %v309
        %v509 = vpop.xlane.xlu0 %508
        %510 = vmax.xlane.f32.xlu0 %v324
        %v511 = vpop.xlane.xlu0 %510
        %512 = vmax.xlane.f32.xlu0 %v310
        %v513 = vpop.xlane.xlu0 %512
        %514 = vmax.xlane.f32.xlu0 %v325
        %v515 = vpop.xlane.xlu0 %514
        %516 = vmax.xlane.f32.xlu0 %v312
        %v517 = vpop.xlane.xlu0 %516
        %518 = vmax.xlane.f32.xlu0 %v327
        %v519 = vpop.xlane.xlu0 %518
        %520 = vmax.xlane.f32.xlu0 %v314
        %v521 = vpop.xlane.xlu0 %520
        %522 = vmax.xlane.f32.xlu0 %v329
        %v523 = vpop.xlane.xlu0 %522
        %524 = vmax.xlane.f32.xlu0 %v316
        %v525 = vpop.xlane.xlu0 %524
        %526 = vmax.xlane.f32.xlu0 %v331
        %v527 = vpop.xlane.xlu0 %526
        %528 = vmax.xlane.f32.xlu0 %v318
        %v529 = vpop.xlane.xlu0 %528
        %530 = vmax.xlane.f32.xlu0 %v333
        %v531 = vpop.xlane.xlu0 %530
        %532 = vmax.xlane.f32.xlu0 %v320
        %v533 = vpop.xlane.xlu0 %532
        %534 = vmax.xlane.f32.xlu0 %v335
        %v535 = vpop.xlane.xlu0 %534
        %536 = vadd.xlane.f32.xlu0 %v338
        %v537 = vpop.xlane.xlu0 %536
        %538 = vadd.xlane.f32.xlu0 %v353
        %v539 = vpop.xlane.xlu0 %538
        %540 = vadd.xlane.f32.xlu0 %v339
        %v541 = vpop.xlane.xlu0 %540
        %542 = vadd.xlane.f32.xlu0 %v354
        %v543 = vpop.xlane.xlu0 %542
        %544 = vadd.xlane.f32.xlu0 %v341
        %v545 = vpop.xlane.xlu0 %544
        %546 = vadd.xlane.f32.xlu0 %v356
        %v547 = vpop.xlane.xlu0 %546
        %548 = vadd.xlane.f32.xlu0 %v343
        %v549 = vpop.xlane.xlu0 %548
        %550 = vadd.xlane.f32.xlu0 %v358
        %v551 = vpop.xlane.xlu0 %550
        %552 = vadd.xlane.f32.xlu0 %v345
        %v553 = vpop.xlane.xlu0 %552
        %554 = vadd.xlane.f32.xlu0 %v360
        %v555 = vpop.xlane.xlu0 %554
        %556 = vadd.xlane.f32.xlu0 %v347
        %v557 = vpop.xlane.xlu0 %556
        %558 = vadd.xlane.f32.xlu0 %v362
        %v559 = vpop.xlane.xlu0 %558
        %560 = vadd.xlane.f32.xlu0 %v349
        %v561 = vpop.xlane.xlu0 %560
        %562 = vadd.xlane.f32.xlu0 %v364
        %v563 = vpop.xlane.xlu0 %562
        %564 = vadd.xlane.f32.xlu0 %v351
        %v565 = vpop.xlane.xlu0 %564
        %566 = vadd.xlane.f32.xlu0 %v366
        %v567 = vpop.xlane.xlu0 %566
        %v568 = vmul.f32 %v537, %v495
        %v569 = vmul.f32 %v539, %v495
        %v570 = vmul.f32 %v541, %v495
        %v571 = vmul.f32 %v543, %v495
        %v572 = vmul.f32 %v545, %v495
        %v573 = vmul.f32 %v547, %v495
        %v574 = vmul.f32 %v549, %v495
        %v575 = vmul.f32 %v551, %v495
        %v576 = vmul.f32 %v553, %v495
        %v577 = vmul.f32 %v555, %v495
        %v578 = vmul.f32 %v557, %v495
        %v579 = vmul.f32 %v559, %v495
        %v580 = vmul.f32 %v561, %v495
        %v581 = vmul.f32 %v563, %v495
        %v582 = vmul.f32 %v565, %v495
        %v583 = vmul.f32 %v567, %v495
        %s584 = sld [smem:[#allocation2]]
        %v585 = vld [vmem:[%s1] sm:$0xff]
        %v586 = vld [vmem:[%s1 + $0x8] sm:$0xff]
        %s587 = scalar_lea.vmem %s1, 112
        %v588 = vld [vmem:[%s587] sm:$0xff]
        %v589 = vld [vmem:[%s587 + $0x8] sm:$0xff]
        %v591 = vsel %vm307, %v375, 0
        %v594 = vsel %vm307, %v376, 0
        %596 = vmatpush.msra.mxu0 0.0
        %597 = vmatpush.msra.mxu0 0.0
        %598 = vmatpush.msra.mxu0 0.0
        %599 = vmatpush.msra.mxu0 0.0
        %600 = vmatpush.msra.mxu0 0.0
        %601 = vmatpush.msra.mxu0 0.0
        %602 = vmatpush.msra.mxu0 0.0
        %603 = vmatpush.msra.mxu0 0.0
        %604 = vmatpush.msra.mxu0 0.0
        %605 = vmatpush.msra.mxu0 0.0
        %606 = vmatpush.msra.mxu0 0.0
        %607 = vmatpush.msra.mxu0 0.0
        %608 = vmatpush.msra.mxu0 0.0
        %609 = vmatpush.msra.mxu0 0.0
        %610 = vmatpush.msra.mxu0 %v589
        %611 = vmatpush.msra.mxu0 %v588
        %612 = vmatmul.f32.gmra.mxu0 %v591
        %v613 = vpop.f32.mrf.mxu0
        %v614 = vadd.f32 0.0, %v613
        %615 = vmatmul.f32.gmra.mxu0 %v594
        %v616 = vpop.f32.mrf.mxu0
        %v617 = vadd.f32 0.0, %v616
        %618 = vdwg.mxu0
        %v620 = vsel %vm307, %v322, 0
        %v623 = vsel %vm307, %v337, 0
        %625 = vmatpush.msra.mxu0 0.0
        %626 = vmatpush.msra.mxu0 0.0
        %627 = vmatpush.msra.mxu0 0.0
        %628 = vmatpush.msra.mxu0 0.0
        %629 = vmatpush.msra.mxu0 0.0
        %630 = vmatpush.msra.mxu0 0.0
        %631 = vmatpush.msra.mxu0 0.0
        %632 = vmatpush.msra.mxu0 0.0
        %633 = vmatpush.msra.mxu0 0.0
        %634 = vmatpush.msra.mxu0 0.0
        %635 = vmatpush.msra.mxu0 0.0
        %636 = vmatpush.msra.mxu0 0.0
        %637 = vmatpush.msra.mxu0 0.0
        %638 = vmatpush.msra.mxu0 0.0
        %639 = vmatpush.msra.mxu0 %v586
        %640 = vmatpush.msra.mxu0 %v585
        %641 = vmatmul.f32.gmra.mxu0 %v620
        %v642 = vpop.f32.mrf.mxu0
        %v643 = vadd.f32 %v614, %v642
        %644 = vmatmul.f32.gmra.mxu0 %v623
        %v645 = vpop.f32.mrf.mxu0
        %v646 = vadd.f32 %v617, %v645
        %647 = vdwg.mxu0
        %v648 = vld [vmem:[%s4] sm:$0xff]
        %v649 = vld [vmem:[%s4 + $0x8] sm:$0xff]
        %s650 = scalar_lea.vmem %s1, 16
        %v651 = vld [vmem:[%s650] sm:$0xff]
        %v652 = vld [vmem:[%s650 + $0x8] sm:$0xff]
        %s653 = scalar_lea.vmem %s1, 128
        %v654 = vld [vmem:[%s653] sm:$0xff]
        %v655 = vld [vmem:[%s653 + $0x8] sm:$0xff]
        %656 = vmatpush.msra.mxu0 0.0
        %657 = vmatpush.msra.mxu0 0.0
        %658 = vmatpush.msra.mxu0 0.0
        %659 = vmatpush.msra.mxu0 0.0
        %660 = vmatpush.msra.mxu0 0.0
        %661 = vmatpush.msra.mxu0 0.0
        %662 = vmatpush.msra.mxu0 0.0
        %663 = vmatpush.msra.mxu0 0.0
        %664 = vmatpush.msra.mxu0 0.0
        %665 = vmatpush.msra.mxu0 0.0
        %666 = vmatpush.msra.mxu0 0.0
        %667 = vmatpush.msra.mxu0 0.0
        %668 = vmatpush.msra.mxu0 0.0
        %669 = vmatpush.msra.mxu0 0.0
        %670 = vmatpush.msra.mxu0 %v655
        %671 = vmatpush.msra.mxu0 %v654
        %672 = vmatmul.f32.gmra.mxu0 %v591
        %v673 = vpop.f32.mrf.mxu0
        %v674 = vadd.f32 0.0, %v673
        %675 = vmatmul.f32.gmra.mxu0 %v594
        %v676 = vpop.f32.mrf.mxu0
        %v677 = vadd.f32 0.0, %v676
        %678 = vdwg.mxu0
        %679 = vmatpush.msra.mxu0 0.0
        %680 = vmatpush.msra.mxu0 0.0
        %681 = vmatpush.msra.mxu0 0.0
        %682 = vmatpush.msra.mxu0 0.0
        %683 = vmatpush.msra.mxu0 0.0
        %684 = vmatpush.msra.mxu0 0.0
        %685 = vmatpush.msra.mxu0 0.0
        %686 = vmatpush.msra.mxu0 0.0
        %687 = vmatpush.msra.mxu0 0.0
        %688 = vmatpush.msra.mxu0 0.0
        %689 = vmatpush.msra.mxu0 0.0
        %690 = vmatpush.msra.mxu0 0.0
        %691 = vmatpush.msra.mxu0 0.0
        %692 = vmatpush.msra.mxu0 0.0
        %693 = vmatpush.msra.mxu0 %v652
        %694 = vmatpush.msra.mxu0 %v651
        %695 = vmatmul.f32.gmra.mxu0 %v620
        %v696 = vpop.f32.mrf.mxu0
        %v697 = vadd.f32 %v674, %v696
        %698 = vmatmul.f32.gmra.mxu0 %v623
        %v699 = vpop.f32.mrf.mxu0
        %v700 = vadd.f32 %v677, %v699
        %701 = vdwg.mxu0
        %s702 = scalar_lea.vmem %s4, 16
        %v703 = vld [vmem:[%s702] sm:$0xff]
        %v704 = vld [vmem:[%s702 + $0x8] sm:$0xff]
        %v706 = vsel %vm307, %v703, 0
        %v709 = vsel %vm307, %v704, 0
        %711 = vmatpush.msra.mxu0 0.0
        %712 = vmatpush.msra.mxu0 0.0
        %713 = vmatpush.msra.mxu0 0.0
        %714 = vmatpush.msra.mxu0 0.0
        %715 = vmatpush.msra.mxu0 0.0
        %716 = vmatpush.msra.mxu0 0.0
        %717 = vmatpush.msra.mxu0 0.0
        %718 = vmatpush.msra.mxu0 0.0
        %719 = vmatpush.msra.mxu0 0.0
        %720 = vmatpush.msra.mxu0 0.0
        %721 = vmatpush.msra.mxu0 0.0
        %722 = vmatpush.msra.mxu0 0.0
        %723 = vmatpush.msra.mxu0 0.0
        %724 = vmatpush.msra.mxu0 0.0
        %725 = vmatpush.msra.mxu0 %v700
        %726 = vmatpush.msra.mxu0 %v697
        %727 = vmatmul.f32.gmra.mxu0 %v706
        %v728 = vpop.f32.mrf.mxu0
        %v729 = vadd.f32 0.0, %v728
        %730 = vmatmul.f32.gmra.mxu0 %v709
        %v731 = vpop.f32.mrf.mxu0
        %v732 = vadd.f32 0.0, %v731
        %733 = vdwg.mxu0
        %v735 = vsel %vm307, %v648, 0
        %v738 = vsel %vm307, %v649, 0
        %740 = vmatpush.msra.mxu0 0.0
        %741 = vmatpush.msra.mxu0 0.0
        %742 = vmatpush.msra.mxu0 0.0
        %743 = vmatpush.msra.mxu0 0.0
        %744 = vmatpush.msra.mxu0 0.0
        %745 = vmatpush.msra.mxu0 0.0
        %746 = vmatpush.msra.mxu0 0.0
        %747 = vmatpush.msra.mxu0 0.0
        %748 = vmatpush.msra.mxu0 0.0
        %749 = vmatpush.msra.mxu0 0.0
        %750 = vmatpush.msra.mxu0 0.0
        %751 = vmatpush.msra.mxu0 0.0
        %752 = vmatpush.msra.mxu0 0.0
        %753 = vmatpush.msra.mxu0 0.0
        %754 = vmatpush.msra.mxu0 %v646
        %755 = vmatpush.msra.mxu0 %v643
        %756 = vmatmul.f32.gmra.mxu0 %v735
        %v757 = vpop.f32.mrf.mxu0
        %v758 = vadd.f32 %v729, %v757
        %759 = vmatmul.f32.gmra.mxu0 %v738
        %v760 = vpop.f32.mrf.mxu0
        %v761 = vadd.f32 %v732, %v760
        %762 = vdwg.mxu0
        %s763 = scalar_lea.vmem %s1, 32
        %v764 = vld [vmem:[%s763] sm:$0xff]
        %v765 = vld [vmem:[%s763 + $0x8] sm:$0xff]
        %s766 = scalar_lea.vmem %s1, 144
        %v767 = vld [vmem:[%s766] sm:$0xff]
        %v768 = vld [vmem:[%s766 + $0x8] sm:$0xff]
        %769 = vmatpush.msra.mxu0 0.0
        %770 = vmatpush.msra.mxu0 0.0
        %771 = vmatpush.msra.mxu0 0.0
        %772 = vmatpush.msra.mxu0 0.0
        %773 = vmatpush.msra.mxu0 0.0
        %774 = vmatpush.msra.mxu0 0.0
        %775 = vmatpush.msra.mxu0 0.0
        %776 = vmatpush.msra.mxu0 0.0
        %777 = vmatpush.msra.mxu0 0.0
        %778 = vmatpush.msra.mxu0 0.0
        %779 = vmatpush.msra.mxu0 0.0
        %780 = vmatpush.msra.mxu0 0.0
        %781 = vmatpush.msra.mxu0 0.0
        %782 = vmatpush.msra.mxu0 0.0
        %783 = vmatpush.msra.mxu0 %v768
        %784 = vmatpush.msra.mxu0 %v767
        %785 = vmatmul.f32.gmra.mxu0 %v591
        %v786 = vpop.f32.mrf.mxu0
        %v787 = vadd.f32 0.0, %v786
        %788 = vmatmul.f32.gmra.mxu0 %v594
        %v789 = vpop.f32.mrf.mxu0
        %v790 = vadd.f32 0.0, %v789
        %791 = vdwg.mxu0
        %792 = vmatpush.msra.mxu0 0.0
        %793 = vmatpush.msra.mxu0 0.0
        %794 = vmatpush.msra.mxu0 0.0
        %795 = vmatpush.msra.mxu0 0.0
        %796 = vmatpush.msra.mxu0 0.0
        %797 = vmatpush.msra.mxu0 0.0
        %798 = vmatpush.msra.mxu0 0.0
        %799 = vmatpush.msra.mxu0 0.0
        %800 = vmatpush.msra.mxu0 0.0
        %801 = vmatpush.msra.mxu0 0.0
        %802 = vmatpush.msra.mxu0 0.0
        %803 = vmatpush.msra.mxu0 0.0
        %804 = vmatpush.msra.mxu0 0.0
        %805 = vmatpush.msra.mxu0 0.0
        %806 = vmatpush.msra.mxu0 %v765
        %807 = vmatpush.msra.mxu0 %v764
        %808 = vmatmul.f32.gmra.mxu0 %v620
        %v809 = vpop.f32.mrf.mxu0
        %v810 = vadd.f32 %v787, %v809
        %811 = vmatmul.f32.gmra.mxu0 %v623
        %v812 = vpop.f32.mrf.mxu0
        %v813 = vadd.f32 %v790, %v812
        %814 = vdwg.mxu0
        %s815 = scalar_lea.vmem %s4, 32
        %v816 = vld [vmem:[%s815] sm:$0xff]
        %v817 = vld [vmem:[%s815 + $0x8] sm:$0xff]
        %v819 = vsel %vm307, %v816, 0
        %v822 = vsel %vm307, %v817, 0
        %824 = vmatpush.msra.mxu0 0.0
        %825 = vmatpush.msra.mxu0 0.0
        %826 = vmatpush.msra.mxu0 0.0
        %827 = vmatpush.msra.mxu0 0.0
        %828 = vmatpush.msra.mxu0 0.0
        %829 = vmatpush.msra.mxu0 0.0
        %830 = vmatpush.msra.mxu0 0.0
        %831 = vmatpush.msra.mxu0 0.0
        %832 = vmatpush.msra.mxu0 0.0
        %833 = vmatpush.msra.mxu0 0.0
        %834 = vmatpush.msra.mxu0 0.0
        %835 = vmatpush.msra.mxu0 0.0
        %836 = vmatpush.msra.mxu0 0.0
        %837 = vmatpush.msra.mxu0 0.0
        %838 = vmatpush.msra.mxu0 %v813
        %839 = vmatpush.msra.mxu0 %v810
        %840 = vmatmul.f32.gmra.mxu0 %v819
        %v841 = vpop.f32.mrf.mxu0
        %v842 = vadd.f32 0.0, %v841
        %843 = vmatmul.f32.gmra.mxu0 %v822
        %v844 = vpop.f32.mrf.mxu0
        %v845 = vadd.f32 0.0, %v844
        %846 = vdwg.mxu0
        %v847 = vadd.f32 %v758, %v842
        %v848 = vadd.f32 %v761, %v845
        %s849 = scalar_lea.vmem %s1, 48
        %v850 = vld [vmem:[%s849] sm:$0xff]
        %v851 = vld [vmem:[%s849 + $0x8] sm:$0xff]
        %s852 = scalar_lea.vmem %s1, 160
        %v853 = vld [vmem:[%s852] sm:$0xff]
        %v854 = vld [vmem:[%s852 + $0x8] sm:$0xff]
        %855 = vmatpush.msra.mxu0 0.0
        %856 = vmatpush.msra.mxu0 0.0
        %857 = vmatpush.msra.mxu0 0.0
        %858 = vmatpush.msra.mxu0 0.0
        %859 = vmatpush.msra.mxu0 0.0
        %860 = vmatpush.msra.mxu0 0.0
        %861 = vmatpush.msra.mxu0 0.0
        %862 = vmatpush.msra.mxu0 0.0
        %863 = vmatpush.msra.mxu0 0.0
        %864 = vmatpush.msra.mxu0 0.0
        %865 = vmatpush.msra.mxu0 0.0
        %866 = vmatpush.msra.mxu0 0.0
        %867 = vmatpush.msra.mxu0 0.0
        %868 = vmatpush.msra.mxu0 0.0
        %869 = vmatpush.msra.mxu0 %v854
        %870 = vmatpush.msra.mxu0 %v853
        %871 = vmatmul.f32.gmra.mxu0 %v591
        %v872 = vpop.f32.mrf.mxu0
        %v873 = vadd.f32 0.0, %v872
        %874 = vmatmul.f32.gmra.mxu0 %v594
        %v875 = vpop.f32.mrf.mxu0
        %v876 = vadd.f32 0.0, %v875
        %877 = vdwg.mxu0
        %878 = vmatpush.msra.mxu0 0.0
        %879 = vmatpush.msra.mxu0 0.0
        %880 = vmatpush.msra.mxu0 0.0
        %881 = vmatpush.msra.mxu0 0.0
        %882 = vmatpush.msra.mxu0 0.0
        %883 = vmatpush.msra.mxu0 0.0
        %884 = vmatpush.msra.mxu0 0.0
        %885 = vmatpush.msra.mxu0 0.0
        %886 = vmatpush.msra.mxu0 0.0
        %887 = vmatpush.msra.mxu0 0.0
        %888 = vmatpush.msra.mxu0 0.0
        %889 = vmatpush.msra.mxu0 0.0
        %890 = vmatpush.msra.mxu0 0.0
        %891 = vmatpush.msra.mxu0 0.0
        %892 = vmatpush.msra.mxu0 %v851
        %893 = vmatpush.msra.mxu0 %v850
        %894 = vmatmul.f32.gmra.mxu0 %v620
        %v895 = vpop.f32.mrf.mxu0
        %v896 = vadd.f32 %v873, %v895
        %897 = vmatmul.f32.gmra.mxu0 %v623
        %v898 = vpop.f32.mrf.mxu0
        %v899 = vadd.f32 %v876, %v898
        %900 = vdwg.mxu0
        %s901 = scalar_lea.vmem %s4, 48
        %v902 = vld [vmem:[%s901] sm:$0xff]
        %v903 = vld [vmem:[%s901 + $0x8] sm:$0xff]
        %v905 = vsel %vm307, %v902, 0
        %v908 = vsel %vm307, %v903, 0
        %910 = vmatpush.msra.mxu0 0.0
        %911 = vmatpush.msra.mxu0 0.0
        %912 = vmatpush.msra.mxu0 0.0
        %913 = vmatpush.msra.mxu0 0.0
        %914 = vmatpush.msra.mxu0 0.0
        %915 = vmatpush.msra.mxu0 0.0
        %916 = vmatpush.msra.mxu0 0.0
        %917 = vmatpush.msra.mxu0 0.0
        %918 = vmatpush.msra.mxu0 0.0
        %919 = vmatpush.msra.mxu0 0.0
        %920 = vmatpush.msra.mxu0 0.0
        %921 = vmatpush.msra.mxu0 0.0
        %922 = vmatpush.msra.mxu0 0.0
        %923 = vmatpush.msra.mxu0 0.0
        %924 = vmatpush.msra.mxu0 %v899
        %925 = vmatpush.msra.mxu0 %v896
        %926 = vmatmul.f32.gmra.mxu0 %v905
        %v927 = vpop.f32.mrf.mxu0
        %v928 = vadd.f32 0.0, %v927
        %929 = vmatmul.f32.gmra.mxu0 %v908
        %v930 = vpop.f32.mrf.mxu0
        %v931 = vadd.f32 0.0, %v930
        %932 = vdwg.mxu0
        %v933 = vadd.f32 %v847, %v928
        %v934 = vadd.f32 %v848, %v931
        %s935 = scalar_lea.vmem %s1, 64
        %v936 = vld [vmem:[%s935] sm:$0xff]
        %v937 = vld [vmem:[%s935 + $0x8] sm:$0xff]
        %s938 = scalar_lea.vmem %s1, 176
        %v939 = vld [vmem:[%s938] sm:$0xff]
        %v940 = vld [vmem:[%s938 + $0x8] sm:$0xff]
        %941 = vmatpush.msra.mxu0 0.0
        %942 = vmatpush.msra.mxu0 0.0
        %943 = vmatpush.msra.mxu0 0.0
        %944 = vmatpush.msra.mxu0 0.0
        %945 = vmatpush.msra.mxu0 0.0
        %946 = vmatpush.msra.mxu0 0.0
        %947 = vmatpush.msra.mxu0 0.0
        %948 = vmatpush.msra.mxu0 0.0
        %949 = vmatpush.msra.mxu0 0.0
        %950 = vmatpush.msra.mxu0 0.0
        %951 = vmatpush.msra.mxu0 0.0
        %952 = vmatpush.msra.mxu0 0.0
        %953 = vmatpush.msra.mxu0 0.0
        %954 = vmatpush.msra.mxu0 0.0
        %955 = vmatpush.msra.mxu0 %v940
        %956 = vmatpush.msra.mxu0 %v939
        %957 = vmatmul.f32.gmra.mxu0 %v591
        %v958 = vpop.f32.mrf.mxu0
        %v959 = vadd.f32 0.0, %v958
        %960 = vmatmul.f32.gmra.mxu0 %v594
        %v961 = vpop.f32.mrf.mxu0
        %v962 = vadd.f32 0.0, %v961
        %963 = vdwg.mxu0
        %964 = vmatpush.msra.mxu0 0.0
        %965 = vmatpush.msra.mxu0 0.0
        %966 = vmatpush.msra.mxu0 0.0
        %967 = vmatpush.msra.mxu0 0.0
        %968 = vmatpush.msra.mxu0 0.0
        %969 = vmatpush.msra.mxu0 0.0
        %970 = vmatpush.msra.mxu0 0.0
        %971 = vmatpush.msra.mxu0 0.0
        %972 = vmatpush.msra.mxu0 0.0
        %973 = vmatpush.msra.mxu0 0.0
        %974 = vmatpush.msra.mxu0 0.0
        %975 = vmatpush.msra.mxu0 0.0
        %976 = vmatpush.msra.mxu0 0.0
        %977 = vmatpush.msra.mxu0 0.0
        %978 = vmatpush.msra.mxu0 %v937
        %979 = vmatpush.msra.mxu0 %v936
        %980 = vmatmul.f32.gmra.mxu0 %v620
        %v981 = vpop.f32.mrf.mxu0
        %v982 = vadd.f32 %v959, %v981
        %983 = vmatmul.f32.gmra.mxu0 %v623
        %v984 = vpop.f32.mrf.mxu0
        %v985 = vadd.f32 %v962, %v984
        %986 = vdwg.mxu0
        %s987 = scalar_lea.vmem %s4, 64
        %v988 = vld [vmem:[%s987] sm:$0xff]
        %v989 = vld [vmem:[%s987 + $0x8] sm:$0xff]
        %v991 = vsel %vm307, %v988, 0
        %v994 = vsel %vm307, %v989, 0
        %996 = vmatpush.msra.mxu0 0.0
        %997 = vmatpush.msra.mxu0 0.0
        %998 = vmatpush.msra.mxu0 0.0
        %999 = vmatpush.msra.mxu0 0.0
        %1000 = vmatpush.msra.mxu0 0.0
        %1001 = vmatpush.msra.mxu0 0.0
        %1002 = vmatpush.msra.mxu0 0.0
        %1003 = vmatpush.msra.mxu0 0.0
        %1004 = vmatpush.msra.mxu0 0.0
        %1005 = vmatpush.msra.mxu0 0.0
        %1006 = vmatpush.msra.mxu0 0.0
        %1007 = vmatpush.msra.mxu0 0.0
        %1008 = vmatpush.msra.mxu0 0.0
        %1009 = vmatpush.msra.mxu0 0.0
        %1010 = vmatpush.msra.mxu0 %v985
        %1011 = vmatpush.msra.mxu0 %v982
        %1012 = vmatmul.f32.gmra.mxu0 %v991
        %v1013 = vpop.f32.mrf.mxu0
        %v1014 = vadd.f32 0.0, %v1013
        %1015 = vmatmul.f32.gmra.mxu0 %v994
        %v1016 = vpop.f32.mrf.mxu0
        %v1017 = vadd.f32 0.0, %v1016
        %1018 = vdwg.mxu0
        %v1019 = vadd.f32 %v933, %v1014
        %v1020 = vadd.f32 %v934, %v1017
        %s1021 = scalar_lea.vmem %s1, 80
        %v1022 = vld [vmem:[%s1021] sm:$0xff]
        %v1023 = vld [vmem:[%s1021 + $0x8] sm:$0xff]
        %s1024 = scalar_lea.vmem %s1, 192
        %v1025 = vld [vmem:[%s1024] sm:$0xff]
        %v1026 = vld [vmem:[%s1024 + $0x8] sm:$0xff]
        %1027 = vmatpush.msra.mxu0 0.0
        %1028 = vmatpush.msra.mxu0 0.0
        %1029 = vmatpush.msra.mxu0 0.0
        %1030 = vmatpush.msra.mxu0 0.0
        %1031 = vmatpush.msra.mxu0 0.0
        %1032 = vmatpush.msra.mxu0 0.0
        %1033 = vmatpush.msra.mxu0 0.0
        %1034 = vmatpush.msra.mxu0 0.0
        %1035 = vmatpush.msra.mxu0 0.0
        %1036 = vmatpush.msra.mxu0 0.0
        %1037 = vmatpush.msra.mxu0 0.0
        %1038 = vmatpush.msra.mxu0 0.0
        %1039 = vmatpush.msra.mxu0 0.0
        %1040 = vmatpush.msra.mxu0 0.0
        %1041 = vmatpush.msra.mxu0 %v1026
        %1042 = vmatpush.msra.mxu0 %v1025
        %1043 = vmatmul.f32.gmra.mxu0 %v591
        %v1044 = vpop.f32.mrf.mxu0
        %v1045 = vadd.f32 0.0, %v1044
        %1046 = vmatmul.f32.gmra.mxu0 %v594
        %v1047 = vpop.f32.mrf.mxu0
        %v1048 = vadd.f32 0.0, %v1047
        %1049 = vdwg.mxu0
        %1050 = vmatpush.msra.mxu0 0.0
        %1051 = vmatpush.msra.mxu0 0.0
        %1052 = vmatpush.msra.mxu0 0.0
        %1053 = vmatpush.msra.mxu0 0.0
        %1054 = vmatpush.msra.mxu0 0.0
        %1055 = vmatpush.msra.mxu0 0.0
        %1056 = vmatpush.msra.mxu0 0.0
        %1057 = vmatpush.msra.mxu0 0.0
        %1058 = vmatpush.msra.mxu0 0.0
        %1059 = vmatpush.msra.mxu0 0.0
        %1060 = vmatpush.msra.mxu0 0.0
        %1061 = vmatpush.msra.mxu0 0.0
        %1062 = vmatpush.msra.mxu0 0.0
        %1063 = vmatpush.msra.mxu0 0.0
        %1064 = vmatpush.msra.mxu0 %v1023
        %1065 = vmatpush.msra.mxu0 %v1022
        %1066 = vmatmul.f32.gmra.mxu0 %v620
        %v1067 = vpop.f32.mrf.mxu0
        %v1068 = vadd.f32 %v1045, %v1067
        %1069 = vmatmul.f32.gmra.mxu0 %v623
        %v1070 = vpop.f32.mrf.mxu0
        %v1071 = vadd.f32 %v1048, %v1070
        %1072 = vdwg.mxu0
        %s1073 = scalar_lea.vmem %s4, 80
        %v1074 = vld [vmem:[%s1073] sm:$0xff]
        %v1075 = vld [vmem:[%s1073 + $0x8] sm:$0xff]
        %v1077 = vsel %vm307, %v1074, 0
        %v1080 = vsel %vm307, %v1075, 0
        %1082 = vmatpush.msra.mxu0 0.0
        %1083 = vmatpush.msra.mxu0 0.0
        %1084 = vmatpush.msra.mxu0 0.0
        %1085 = vmatpush.msra.mxu0 0.0
        %1086 = vmatpush.msra.mxu0 0.0
        %1087 = vmatpush.msra.mxu0 0.0
        %1088 = vmatpush.msra.mxu0 0.0
        %1089 = vmatpush.msra.mxu0 0.0
        %1090 = vmatpush.msra.mxu0 0.0
        %1091 = vmatpush.msra.mxu0 0.0
        %1092 = vmatpush.msra.mxu0 0.0
        %1093 = vmatpush.msra.mxu0 0.0
        %1094 = vmatpush.msra.mxu0 0.0
        %1095 = vmatpush.msra.mxu0 0.0
        %1096 = vmatpush.msra.mxu0 %v1071
        %1097 = vmatpush.msra.mxu0 %v1068
        %1098 = vmatmul.f32.gmra.mxu0 %v1077
        %v1099 = vpop.f32.mrf.mxu0
        %v1100 = vadd.f32 0.0, %v1099
        %1101 = vmatmul.f32.gmra.mxu0 %v1080
        %v1102 = vpop.f32.mrf.mxu0
        %v1103 = vadd.f32 0.0, %v1102
        %1104 = vdwg.mxu0
        %v1105 = vadd.f32 %v1019, %v1100
        %v1106 = vadd.f32 %v1020, %v1103
        %s1107 = scalar_lea.vmem %s1, 96
        %v1108 = vld [vmem:[%s1107] sm:$0xff]
        %v1109 = vld [vmem:[%s1107 + $0x8] sm:$0xff]
        %s1110 = scalar_lea.vmem %s1, 208
        %v1111 = vld [vmem:[%s1110] sm:$0xff]
        %v1112 = vld [vmem:[%s1110 + $0x8] sm:$0xff]
        %1113 = vmatpush.msra.mxu0 0.0
        %1114 = vmatpush.msra.mxu0 0.0
        %1115 = vmatpush.msra.mxu0 0.0
        %1116 = vmatpush.msra.mxu0 0.0
        %1117 = vmatpush.msra.mxu0 0.0
        %1118 = vmatpush.msra.mxu0 0.0
        %1119 = vmatpush.msra.mxu0 0.0
        %1120 = vmatpush.msra.mxu0 0.0
        %1121 = vmatpush.msra.mxu0 0.0
        %1122 = vmatpush.msra.mxu0 0.0
        %1123 = vmatpush.msra.mxu0 0.0
        %1124 = vmatpush.msra.mxu0 0.0
        %1125 = vmatpush.msra.mxu0 0.0
        %1126 = vmatpush.msra.mxu0 0.0
        %1127 = vmatpush.msra.mxu0 %v1112
        %1128 = vmatpush.msra.mxu0 %v1111
        %1129 = vmatmul.f32.gmra.mxu0 %v591
        %v1130 = vpop.f32.mrf.mxu0
        %v1131 = vadd.f32 0.0, %v1130
        %1132 = vmatmul.f32.gmra.mxu0 %v594
        %v1133 = vpop.f32.mrf.mxu0
        %v1134 = vadd.f32 0.0, %v1133
        %1135 = vdwg.mxu0
        %1136 = vmatpush.msra.mxu0 0.0
        %1137 = vmatpush.msra.mxu0 0.0
        %1138 = vmatpush.msra.mxu0 0.0
        %1139 = vmatpush.msra.mxu0 0.0
        %1140 = vmatpush.msra.mxu0 0.0
        %1141 = vmatpush.msra.mxu0 0.0
        %1142 = vmatpush.msra.mxu0 0.0
        %1143 = vmatpush.msra.mxu0 0.0
        %1144 = vmatpush.msra.mxu0 0.0
        %1145 = vmatpush.msra.mxu0 0.0
        %1146 = vmatpush.msra.mxu0 0.0
        %1147 = vmatpush.msra.mxu0 0.0
        %1148 = vmatpush.msra.mxu0 0.0
        %1149 = vmatpush.msra.mxu0 0.0
        %1150 = vmatpush.msra.mxu0 %v1109
        %1151 = vmatpush.msra.mxu0 %v1108
        %1152 = vmatmul.f32.gmra.mxu0 %v620
        %v1153 = vpop.f32.mrf.mxu0
        %v1154 = vadd.f32 %v1131, %v1153
        %1155 = vmatmul.f32.gmra.mxu0 %v623
        %v1156 = vpop.f32.mrf.mxu0
        %v1157 = vadd.f32 %v1134, %v1156
        %1158 = vdwg.mxu0
        %s1159 = scalar_lea.vmem %s4, 96
        %v1160 = vld [vmem:[%s1159] sm:$0xff]
        %v1161 = vld [vmem:[%s1159 + $0x8] sm:$0xff]
        %v1163 = vsel %vm307, %v1160, 0
        %v1166 = vsel %vm307, %v1161, 0
        %1168 = vmatpush.msra.mxu0 0.0
        %1169 = vmatpush.msra.mxu0 0.0
        %1170 = vmatpush.msra.mxu0 0.0
        %1171 = vmatpush.msra.mxu0 0.0
        %1172 = vmatpush.msra.mxu0 0.0
        %1173 = vmatpush.msra.mxu0 0.0
        %1174 = vmatpush.msra.mxu0 0.0
        %1175 = vmatpush.msra.mxu0 0.0
        %1176 = vmatpush.msra.mxu0 0.0
        %1177 = vmatpush.msra.mxu0 0.0
        %1178 = vmatpush.msra.mxu0 0.0
        %1179 = vmatpush.msra.mxu0 0.0
        %1180 = vmatpush.msra.mxu0 0.0
        %1181 = vmatpush.msra.mxu0 0.0
        %1182 = vmatpush.msra.mxu0 %v1157
        %1183 = vmatpush.msra.mxu0 %v1154
        %1184 = vmatmul.f32.gmra.mxu0 %v1163
        %v1185 = vpop.f32.mrf.mxu0
        %v1186 = vadd.f32 0.0, %v1185
        %1187 = vmatmul.f32.gmra.mxu0 %v1166
        %v1188 = vpop.f32.mrf.mxu0
        %v1189 = vadd.f32 0.0, %v1188
        %1190 = vdwg.mxu0
        %v1191 = vadd.f32 %v1105, %v1186
        %v1192 = vadd.f32 %v1106, %v1189
        %v1193 = vstv %s584
        %v1194 = vadd.f32 %v1191, %v1193
        %v1195 = vadd.f32 %v1192, %v1193
        %v1196 = vxor.u32 %v1194, 2147483648
        %v1197 = vxor.u32 %v1195, 2147483648
        %v1198 = vmul.f32 %v1196, 1.442695
        %v1199 = vpow.pop %v1198
        %v1200 = vmul.f32 %v1197, 1.442695
        %v1201 = vpow.pop %v1200
        %v1202 = vadd.f32 %v1199, 1.0
        %v1203 = vadd.f32 %v1201, 1.0
        %v1204 = vrcp.pop %v1202
        %v1205 = vmul.f32 %v1202, %v1204
        %v1206 = vsub.f32 1.0, %v1205
        %v1207 = vmul.f32 %v1204, %v1206
        %v1208 = vadd.f32 %v1204, %v1207
        %vm1209 = vweird.f32 %v1202
        %vm1210 = vweird.f32 %v1204
        %vm1211 = vmor %vm1209, %vm1210
        %v1212 = vsel %vm1211, %v1204, %v1208
        %v1213 = vand.u32 2147483647, %v1202
        %vm1214 = vcmp.eq.f32.partialorder %v1213, 8.507059e+37
        %v1215 = vand.u32 %v1202, 2147483648
        %v1216 = vor.u32 1.1754944e-38, %v1215
        %v1217 = vsel %vm1214, %v1216, %v1212
        %v1218 = vmul.f32 1.0, %v1217
        %v1219 = vrcp.pop %v1203
        %v1220 = vmul.f32 %v1203, %v1219
        %v1221 = vsub.f32 1.0, %v1220
        %v1222 = vmul.f32 %v1219, %v1221
        %v1223 = vadd.f32 %v1219, %v1222
        %vm1224 = vweird.f32 %v1203
        %vm1225 = vweird.f32 %v1219
        %vm1226 = vmor %vm1224, %vm1225
        %v1227 = vsel %vm1226, %v1219, %v1223
        %v1228 = vand.u32 2147483647, %v1203
        %vm1229 = vcmp.eq.f32.partialorder %v1228, 8.507059e+37
        %v1230 = vand.u32 %v1203, 2147483648
        %v1231 = vor.u32 1.1754944e-38, %v1230
        %v1232 = vsel %vm1229, %v1231, %v1227
        %v1233 = vmul.f32 1.0, %v1232
        %s1234 = sld [smem:[#allocation2 + $0x1]]
        %v1235 = vld [vmem:[%s2] sm:$0xff]
        %v1236 = vld [vmem:[%s2 + $0x8] sm:$0xff]
        %s1237 = scalar_lea.vmem %s2, 112
        %v1238 = vld [vmem:[%s1237] sm:$0xff]
        %v1239 = vld [vmem:[%s1237 + $0x8] sm:$0xff]
        %vm1248 = vcmask 1041409
        %v1249 = vsel %vm1248, %v497, %v496
        %vm1250 = vcmask 1042434
        %v1251 = vsel %vm1250, %v498, %v1249
        %vm1252 = vcmask 1043459
        %v1253 = vsel %vm1252, %v499, %v1251
        %vm1254 = vcmask 1044484
        %v1255 = vsel %vm1254, %v500, %v1253
        %vm1256 = vcmask 1045509
        %v1257 = vsel %vm1256, %v501, %v1255
        %vm1258 = vcmask 1046534
        %v1259 = vsel %vm1258, %v502, %v1257
        %vm1260 = vcmask 1047559
        %v1261 = vsel %vm1260, %v503, %v1259
        %v1262 = vsel %vm307, %v1261, 0
        %1264 = vmatpush.msra.mxu0 0.0
        %1265 = vmatpush.msra.mxu0 0.0
        %1266 = vmatpush.msra.mxu0 0.0
        %1267 = vmatpush.msra.mxu0 0.0
        %1268 = vmatpush.msra.mxu0 0.0
        %1269 = vmatpush.msra.mxu0 0.0
        %1270 = vmatpush.msra.mxu0 0.0
        %1271 = vmatpush.msra.mxu0 0.0
        %1272 = vmatpush.msra.mxu0 0.0
        %1273 = vmatpush.msra.mxu0 0.0
        %1274 = vmatpush.msra.mxu0 0.0
        %1275 = vmatpush.msra.mxu0 0.0
        %1276 = vmatpush.msra.mxu0 0.0
        %1277 = vmatpush.msra.mxu0 0.0
        %1278 = vmatpush.msra.mxu0 %v1239
        %1279 = vmatpush.msra.mxu0 %v1238
        %1280 = vmatmul.f32.gmra.mxu0 %v1262
        %v1281 = vpop.f32.mrf.mxu0
        %v1282 = vadd.f32 0.0, %v1281
        %1283 = vdwg.mxu0
        %v1292 = vsel %vm1248, %v390, %v383
        %v1293 = vsel %vm1250, %v397, %v1292
        %v1294 = vsel %vm1252, %v404, %v1293
        %v1295 = vsel %vm1254, %v411, %v1294
        %v1296 = vsel %vm1256, %v418, %v1295
        %v1297 = vsel %vm1258, %v425, %v1296
        %v1298 = vsel %vm1260, %v432, %v1297
        %v1299 = vsel %vm307, %v1298, 0
        %1301 = vmatpush.msra.mxu0 0.0
        %1302 = vmatpush.msra.mxu0 0.0
        %1303 = vmatpush.msra.mxu0 0.0
        %1304 = vmatpush.msra.mxu0 0.0
        %1305 = vmatpush.msra.mxu0 0.0
        %1306 = vmatpush.msra.mxu0 0.0
        %1307 = vmatpush.msra.mxu0 0.0
        %1308 = vmatpush.msra.mxu0 0.0
        %1309 = vmatpush.msra.mxu0 0.0
        %1310 = vmatpush.msra.mxu0 0.0
        %1311 = vmatpush.msra.mxu0 0.0
        %1312 = vmatpush.msra.mxu0 0.0
        %1313 = vmatpush.msra.mxu0 0.0
        %1314 = vmatpush.msra.mxu0 0.0
        %1315 = vmatpush.msra.mxu0 %v1236
        %1316 = vmatpush.msra.mxu0 %v1235
        %1317 = vmatmul.f32.gmra.mxu0 %v1299
        %v1318 = vpop.f32.mrf.mxu0
        %v1319 = vadd.f32 %v1282, %v1318
        %1320 = vdwg.mxu0
        %v1321 = vld [vmem:[%s5] sm:$0xff]
        %s1322 = scalar_lea.vmem %s2, 16
        %v1323 = vld [vmem:[%s1322] sm:$0xff]
        %v1324 = vld [vmem:[%s1322 + $0x8] sm:$0xff]
        %s1325 = scalar_lea.vmem %s2, 128
        %v1326 = vld [vmem:[%s1325] sm:$0xff]
        %v1327 = vld [vmem:[%s1325 + $0x8] sm:$0xff]
        %1328 = vmatpush.msra.mxu0 0.0
        %1329 = vmatpush.msra.mxu0 0.0
        %1330 = vmatpush.msra.mxu0 0.0
        %1331 = vmatpush.msra.mxu0 0.0
        %1332 = vmatpush.msra.mxu0 0.0
        %1333 = vmatpush.msra.mxu0 0.0
        %1334 = vmatpush.msra.mxu0 0.0
        %1335 = vmatpush.msra.mxu0 0.0
        %1336 = vmatpush.msra.mxu0 0.0
        %1337 = vmatpush.msra.mxu0 0.0
        %1338 = vmatpush.msra.mxu0 0.0
        %1339 = vmatpush.msra.mxu0 0.0
        %1340 = vmatpush.msra.mxu0 0.0
        %1341 = vmatpush.msra.mxu0 0.0
        %1342 = vmatpush.msra.mxu0 %v1327
        %1343 = vmatpush.msra.mxu0 %v1326
        %1344 = vmatmul.f32.gmra.mxu0 %v1262
        %v1345 = vpop.f32.mrf.mxu0
        %v1346 = vadd.f32 0.0, %v1345
        %1347 = vdwg.mxu0
        %1348 = vmatpush.msra.mxu0 0.0
        %1349 = vmatpush.msra.mxu0 0.0
        %1350 = vmatpush.msra.mxu0 0.0
        %1351 = vmatpush.msra.mxu0 0.0
        %1352 = vmatpush.msra.mxu0 0.0
        %1353 = vmatpush.msra.mxu0 0.0
        %1354 = vmatpush.msra.mxu0 0.0
        %1355 = vmatpush.msra.mxu0 0.0
        %1356 = vmatpush.msra.mxu0 0.0
        %1357 = vmatpush.msra.mxu0 0.0
        %1358 = vmatpush.msra.mxu0 0.0
        %1359 = vmatpush.msra.mxu0 0.0
        %1360 = vmatpush.msra.mxu0 0.0
        %1361 = vmatpush.msra.mxu0 0.0
        %1362 = vmatpush.msra.mxu0 %v1324
        %1363 = vmatpush.msra.mxu0 %v1323
        %1364 = vmatmul.f32.gmra.mxu0 %v1299
        %v1365 = vpop.f32.mrf.mxu0
        %v1366 = vadd.f32 %v1346, %v1365
        %1367 = vdwg.mxu0
        %s1368 = scalar_lea.vmem %s5, 8
        %v1369 = vld [vmem:[%s1368] sm:$0xff]
        %vm1370 = vcmask 64512
        %v1372 = vsel %vm1370, %v1369, 0
        %1374 = vmatpush.msra.mxu0 0.0
        %1375 = vmatpush.msra.mxu0 0.0
        %1376 = vmatpush.msra.mxu0 0.0
        %1377 = vmatpush.msra.mxu0 0.0
        %1378 = vmatpush.msra.mxu0 0.0
        %1379 = vmatpush.msra.mxu0 0.0
        %1380 = vmatpush.msra.mxu0 0.0
        %1381 = vmatpush.msra.mxu0 0.0
        %1382 = vmatpush.msra.mxu0 0.0
        %1383 = vmatpush.msra.mxu0 0.0
        %1384 = vmatpush.msra.mxu0 0.0
        %1385 = vmatpush.msra.mxu0 0.0
        %1386 = vmatpush.msra.mxu0 0.0
        %1387 = vmatpush.msra.mxu0 0.0
        %1388 = vmatpush.msra.mxu0 0.0
        %1389 = vmatpush.msra.mxu0 %v1366
        %1390 = vmatmul.f32.gmra.mxu0 %v1372
        %v1391 = vpop.f32.mrf.mxu0
        %v1392 = vadd.f32 0.0, %v1391
        %1393 = vdwg.mxu0
        %v1395 = vsel %vm1370, %v1321, 0
        %1397 = vmatpush.msra.mxu0 0.0
        %1398 = vmatpush.msra.mxu0 0.0
        %1399 = vmatpush.msra.mxu0 0.0
        %1400 = vmatpush.msra.mxu0 0.0
        %1401 = vmatpush.msra.mxu0 0.0
        %1402 = vmatpush.msra.mxu0 0.0
        %1403 = vmatpush.msra.mxu0 0.0
        %1404 = vmatpush.msra.mxu0 0.0
        %1405 = vmatpush.msra.mxu0 0.0
        %1406 = vmatpush.msra.mxu0 0.0
        %1407 = vmatpush.msra.mxu0 0.0
        %1408 = vmatpush.msra.mxu0 0.0
        %1409 = vmatpush.msra.mxu0 0.0
        %1410 = vmatpush.msra.mxu0 0.0
        %1411 = vmatpush.msra.mxu0 0.0
        %1412 = vmatpush.msra.mxu0 %v1319
        %1413 = vmatmul.f32.gmra.mxu0 %v1395
        %v1414 = vpop.f32.mrf.mxu0
        %v1415 = vadd.f32 %v1392, %v1414
        %1416 = vdwg.mxu0
        %s1417 = scalar_lea.vmem %s2, 32
        %v1418 = vld [vmem:[%s1417] sm:$0xff]
        %v1419 = vld [vmem:[%s1417 + $0x8] sm:$0xff]
        %s1420 = scalar_lea.vmem %s2, 144
        %v1421 = vld [vmem:[%s1420] sm:$0xff]
        %v1422 = vld [vmem:[%s1420 + $0x8] sm:$0xff]
        %1423 = vmatpush.msra.mxu0 0.0
        %1424 = vmatpush.msra.mxu0 0.0
        %1425 = vmatpush.msra.mxu0 0.0
        %1426 = vmatpush.msra.mxu0 0.0
        %1427 = vmatpush.msra.mxu0 0.0
        %1428 = vmatpush.msra.mxu0 0.0
        %1429 = vmatpush.msra.mxu0 0.0
        %1430 = vmatpush.msra.mxu0 0.0
        %1431 = vmatpush.msra.mxu0 0.0
        %1432 = vmatpush.msra.mxu0 0.0
        %1433 = vmatpush.msra.mxu0 0.0
        %1434 = vmatpush.msra.mxu0 0.0
        %1435 = vmatpush.msra.mxu0 0.0
        %1436 = vmatpush.msra.mxu0 0.0
        %1437 = vmatpush.msra.mxu0 %v1422
        %1438 = vmatpush.msra.mxu0 %v1421
        %1439 = vmatmul.f32.gmra.mxu0 %v1262
        %v1440 = vpop.f32.mrf.mxu0
        %v1441 = vadd.f32 0.0, %v1440
        %1442 = vdwg.mxu0
        %1443 = vmatpush.msra.mxu0 0.0
        %1444 = vmatpush.msra.mxu0 0.0
        %1445 = vmatpush.msra.mxu0 0.0
        %1446 = vmatpush.msra.mxu0 0.0
        %1447 = vmatpush.msra.mxu0 0.0
        %1448 = vmatpush.msra.mxu0 0.0
        %1449 = vmatpush.msra.mxu0 0.0
        %1450 = vmatpush.msra.mxu0 0.0
        %1451 = vmatpush.msra.mxu0 0.0
        %1452 = vmatpush.msra.mxu0 0.0
        %1453 = vmatpush.msra.mxu0 0.0
        %1454 = vmatpush.msra.mxu0 0.0
        %1455 = vmatpush.msra.mxu0 0.0
        %1456 = vmatpush.msra.mxu0 0.0
        %1457 = vmatpush.msra.mxu0 %v1419
        %1458 = vmatpush.msra.mxu0 %v1418
        %1459 = vmatmul.f32.gmra.mxu0 %v1299
        %v1460 = vpop.f32.mrf.mxu0
        %v1461 = vadd.f32 %v1441, %v1460
        %1462 = vdwg.mxu0
        %s1463 = scalar_lea.vmem %s5, 16
        %v1464 = vld [vmem:[%s1463] sm:$0xff]
        %v1466 = vsel %vm1370, %v1464, 0
        %1468 = vmatpush.msra.mxu0 0.0
        %1469 = vmatpush.msra.mxu0 0.0
        %1470 = vmatpush.msra.mxu0 0.0
        %1471 = vmatpush.msra.mxu0 0.0
        %1472 = vmatpush.msra.mxu0 0.0
        %1473 = vmatpush.msra.mxu0 0.0
        %1474 = vmatpush.msra.mxu0 0.0
        %1475 = vmatpush.msra.mxu0 0.0
        %1476 = vmatpush.msra.mxu0 0.0
        %1477 = vmatpush.msra.mxu0 0.0
        %1478 = vmatpush.msra.mxu0 0.0
        %1479 = vmatpush.msra.mxu0 0.0
        %1480 = vmatpush.msra.mxu0 0.0
        %1481 = vmatpush.msra.mxu0 0.0
        %1482 = vmatpush.msra.mxu0 0.0
        %1483 = vmatpush.msra.mxu0 %v1461
        %1484 = vmatmul.f32.gmra.mxu0 %v1466
        %v1485 = vpop.f32.mrf.mxu0
        %v1486 = vadd.f32 0.0, %v1485
        %1487 = vdwg.mxu0
        %v1488 = vadd.f32 %v1415, %v1486
        %s1489 = scalar_lea.vmem %s2, 48
        %v1490 = vld [vmem:[%s1489] sm:$0xff]
        %v1491 = vld [vmem:[%s1489 + $0x8] sm:$0xff]
        %s1492 = scalar_lea.vmem %s2, 160
        %v1493 = vld [vmem:[%s1492] sm:$0xff]
        %v1494 = vld [vmem:[%s1492 + $0x8] sm:$0xff]
        %1495 = vmatpush.msra.mxu0 0.0
        %1496 = vmatpush.msra.mxu0 0.0
        %1497 = vmatpush.msra.mxu0 0.0
        %1498 = vmatpush.msra.mxu0 0.0
        %1499 = vmatpush.msra.mxu0 0.0
        %1500 = vmatpush.msra.mxu0 0.0
        %1501 = vmatpush.msra.mxu0 0.0
        %1502 = vmatpush.msra.mxu0 0.0
        %1503 = vmatpush.msra.mxu0 0.0
        %1504 = vmatpush.msra.mxu0 0.0
        %1505 = vmatpush.msra.mxu0 0.0
        %1506 = vmatpush.msra.mxu0 0.0
        %1507 = vmatpush.msra.mxu0 0.0
        %1508 = vmatpush.msra.mxu0 0.0
        %1509 = vmatpush.msra.mxu0 %v1494
        %1510 = vmatpush.msra.mxu0 %v1493
        %1511 = vmatmul.f32.gmra.mxu0 %v1262
        %v1512 = vpop.f32.mrf.mxu0
        %v1513 = vadd.f32 0.0, %v1512
        %1514 = vdwg.mxu0
        %1515 = vmatpush.msra.mxu0 0.0
        %1516 = vmatpush.msra.mxu0 0.0
        %1517 = vmatpush.msra.mxu0 0.0
        %1518 = vmatpush.msra.mxu0 0.0
        %1519 = vmatpush.msra.mxu0 0.0
        %1520 = vmatpush.msra.mxu0 0.0
        %1521 = vmatpush.msra.mxu0 0.0
        %1522 = vmatpush.msra.mxu0 0.0
        %1523 = vmatpush.msra.mxu0 0.0
        %1524 = vmatpush.msra.mxu0 0.0
        %1525 = vmatpush.msra.mxu0 0.0
        %1526 = vmatpush.msra.mxu0 0.0
        %1527 = vmatpush.msra.mxu0 0.0
        %1528 = vmatpush.msra.mxu0 0.0
        %1529 = vmatpush.msra.mxu0 %v1491
        %1530 = vmatpush.msra.mxu0 %v1490
        %1531 = vmatmul.f32.gmra.mxu0 %v1299
        %v1532 = vpop.f32.mrf.mxu0
        %v1533 = vadd.f32 %v1513, %v1532
        %1534 = vdwg.mxu0
        %s1535 = scalar_lea.vmem %s5, 24
        %v1536 = vld [vmem:[%s1535] sm:$0xff]
        %v1538 = vsel %vm1370, %v1536, 0
        %1540 = vmatpush.msra.mxu0 0.0
        %1541 = vmatpush.msra.mxu0 0.0
        %1542 = vmatpush.msra.mxu0 0.0
        %1543 = vmatpush.msra.mxu0 0.0
        %1544 = vmatpush.msra.mxu0 0.0
        %1545 = vmatpush.msra.mxu0 0.0
        %1546 = vmatpush.msra.mxu0 0.0
        %1547 = vmatpush.msra.mxu0 0.0
        %1548 = vmatpush.msra.mxu0 0.0
        %1549 = vmatpush.msra.mxu0 0.0
        %1550 = vmatpush.msra.mxu0 0.0
        %1551 = vmatpush.msra.mxu0 0.0
        %1552 = vmatpush.msra.mxu0 0.0
        %1553 = vmatpush.msra.mxu0 0.0
        %1554 = vmatpush.msra.mxu0 0.0
        %1555 = vmatpush.msra.mxu0 %v1533
        %1556 = vmatmul.f32.gmra.mxu0 %v1538
        %v1557 = vpop.f32.mrf.mxu0
        %v1558 = vadd.f32 0.0, %v1557
        %1559 = vdwg.mxu0
        %v1560 = vadd.f32 %v1488, %v1558
        %s1561 = scalar_lea.vmem %s2, 64
        %v1562 = vld [vmem:[%s1561] sm:$0xff]
        %v1563 = vld [vmem:[%s1561 + $0x8] sm:$0xff]
        %s1564 = scalar_lea.vmem %s2, 176
        %v1565 = vld [vmem:[%s1564] sm:$0xff]
        %v1566 = vld [vmem:[%s1564 + $0x8] sm:$0xff]
        %1567 = vmatpush.msra.mxu0 0.0
        %1568 = vmatpush.msra.mxu0 0.0
        %1569 = vmatpush.msra.mxu0 0.0
        %1570 = vmatpush.msra.mxu0 0.0
        %1571 = vmatpush.msra.mxu0 0.0
        %1572 = vmatpush.msra.mxu0 0.0
        %1573 = vmatpush.msra.mxu0 0.0
        %1574 = vmatpush.msra.mxu0 0.0
        %1575 = vmatpush.msra.mxu0 0.0
        %1576 = vmatpush.msra.mxu0 0.0
        %1577 = vmatpush.msra.mxu0 0.0
        %1578 = vmatpush.msra.mxu0 0.0
        %1579 = vmatpush.msra.mxu0 0.0
        %1580 = vmatpush.msra.mxu0 0.0
        %1581 = vmatpush.msra.mxu0 %v1566
        %1582 = vmatpush.msra.mxu0 %v1565
        %1583 = vmatmul.f32.gmra.mxu0 %v1262
        %v1584 = vpop.f32.mrf.mxu0
        %v1585 = vadd.f32 0.0, %v1584
        %1586 = vdwg.mxu0
        %1587 = vmatpush.msra.mxu0 0.0
        %1588 = vmatpush.msra.mxu0 0.0
        %1589 = vmatpush.msra.mxu0 0.0
        %1590 = vmatpush.msra.mxu0 0.0
        %1591 = vmatpush.msra.mxu0 0.0
        %1592 = vmatpush.msra.mxu0 0.0
        %1593 = vmatpush.msra.mxu0 0.0
        %1594 = vmatpush.msra.mxu0 0.0
        %1595 = vmatpush.msra.mxu0 0.0
        %1596 = vmatpush.msra.mxu0 0.0
        %1597 = vmatpush.msra.mxu0 0.0
        %1598 = vmatpush.msra.mxu0 0.0
        %1599 = vmatpush.msra.mxu0 0.0
        %1600 = vmatpush.msra.mxu0 0.0
        %1601 = vmatpush.msra.mxu0 %v1563
        %1602 = vmatpush.msra.mxu0 %v1562
        %1603 = vmatmul.f32.gmra.mxu0 %v1299
        %v1604 = vpop.f32.mrf.mxu0
        %v1605 = vadd.f32 %v1585, %v1604
        %1606 = vdwg.mxu0
        %s1607 = scalar_lea.vmem %s5, 32
        %v1608 = vld [vmem:[%s1607] sm:$0xff]
        %v1610 = vsel %vm1370, %v1608, 0
        %1612 = vmatpush.msra.mxu0 0.0
        %1613 = vmatpush.msra.mxu0 0.0
        %1614 = vmatpush.msra.mxu0 0.0
        %1615 = vmatpush.msra.mxu0 0.0
        %1616 = vmatpush.msra.mxu0 0.0
        %1617 = vmatpush.msra.mxu0 0.0
        %1618 = vmatpush.msra.mxu0 0.0
        %1619 = vmatpush.msra.mxu0 0.0
        %1620 = vmatpush.msra.mxu0 0.0
        %1621 = vmatpush.msra.mxu0 0.0
        %1622 = vmatpush.msra.mxu0 0.0
        %1623 = vmatpush.msra.mxu0 0.0
        %1624 = vmatpush.msra.mxu0 0.0
        %1625 = vmatpush.msra.mxu0 0.0
        %1626 = vmatpush.msra.mxu0 0.0
        %1627 = vmatpush.msra.mxu0 %v1605
        %1628 = vmatmul.f32.gmra.mxu0 %v1610
        %v1629 = vpop.f32.mrf.mxu0
        %v1630 = vadd.f32 0.0, %v1629
        %1631 = vdwg.mxu0
        %v1632 = vadd.f32 %v1560, %v1630
        %s1633 = scalar_lea.vmem %s2, 80
        %v1634 = vld [vmem:[%s1633] sm:$0xff]
        %v1635 = vld [vmem:[%s1633 + $0x8] sm:$0xff]
        %s1636 = scalar_lea.vmem %s2, 192
        %v1637 = vld [vmem:[%s1636] sm:$0xff]
        %v1638 = vld [vmem:[%s1636 + $0x8] sm:$0xff]
        %1639 = vmatpush.msra.mxu0 0.0
        %1640 = vmatpush.msra.mxu0 0.0
        %1641 = vmatpush.msra.mxu0 0.0
        %1642 = vmatpush.msra.mxu0 0.0
        %1643 = vmatpush.msra.mxu0 0.0
        %1644 = vmatpush.msra.mxu0 0.0
        %1645 = vmatpush.msra.mxu0 0.0
        %1646 = vmatpush.msra.mxu0 0.0
        %1647 = vmatpush.msra.mxu0 0.0
        %1648 = vmatpush.msra.mxu0 0.0
        %1649 = vmatpush.msra.mxu0 0.0
        %1650 = vmatpush.msra.mxu0 0.0
        %1651 = vmatpush.msra.mxu0 0.0
        %1652 = vmatpush.msra.mxu0 0.0
        %1653 = vmatpush.msra.mxu0 %v1638
        %1654 = vmatpush.msra.mxu0 %v1637
        %1655 = vmatmul.f32.gmra.mxu0 %v1262
        %v1656 = vpop.f32.mrf.mxu0
        %v1657 = vadd.f32 0.0, %v1656
        %1658 = vdwg.mxu0
        %1659 = vmatpush.msra.mxu0 0.0
        %1660 = vmatpush.msra.mxu0 0.0
        %1661 = vmatpush.msra.mxu0 0.0
        %1662 = vmatpush.msra.mxu0 0.0
        %1663 = vmatpush.msra.mxu0 0.0
        %1664 = vmatpush.msra.mxu0 0.0
        %1665 = vmatpush.msra.mxu0 0.0
        %1666 = vmatpush.msra.mxu0 0.0
        %1667 = vmatpush.msra.mxu0 0.0
        %1668 = vmatpush.msra.mxu0 0.0
        %1669 = vmatpush.msra.mxu0 0.0
        %1670 = vmatpush.msra.mxu0 0.0
        %1671 = vmatpush.msra.mxu0 0.0
        %1672 = vmatpush.msra.mxu0 0.0
        %1673 = vmatpush.msra.mxu0 %v1635
        %1674 = vmatpush.msra.mxu0 %v1634
        %1675 = vmatmul.f32.gmra.mxu0 %v1299
        %v1676 = vpop.f32.mrf.mxu0
        %v1677 = vadd.f32 %v1657, %v1676
        %1678 = vdwg.mxu0
        %s1679 = scalar_lea.vmem %s5, 40
        %v1680 = vld [vmem:[%s1679] sm:$0xff]
        %v1682 = vsel %vm1370, %v1680, 0
        %1684 = vmatpush.msra.mxu0 0.0
        %1685 = vmatpush.msra.mxu0 0.0
        %1686 = vmatpush.msra.mxu0 0.0
        %1687 = vmatpush.msra.mxu0 0.0
        %1688 = vmatpush.msra.mxu0 0.0
        %1689 = vmatpush.msra.mxu0 0.0
        %1690 = vmatpush.msra.mxu0 0.0
        %1691 = vmatpush.msra.mxu0 0.0
        %1692 = vmatpush.msra.mxu0 0.0
        %1693 = vmatpush.msra.mxu0 0.0
        %1694 = vmatpush.msra.mxu0 0.0
        %1695 = vmatpush.msra.mxu0 0.0
        %1696 = vmatpush.msra.mxu0 0.0
        %1697 = vmatpush.msra.mxu0 0.0
        %1698 = vmatpush.msra.mxu0 0.0
        %1699 = vmatpush.msra.mxu0 %v1677
        %1700 = vmatmul.f32.gmra.mxu0 %v1682
        %v1701 = vpop.f32.mrf.mxu0
        %v1702 = vadd.f32 0.0, %v1701
        %1703 = vdwg.mxu0
        %v1704 = vadd.f32 %v1632, %v1702
        %s1705 = scalar_lea.vmem %s2, 96
        %v1706 = vld [vmem:[%s1705] sm:$0xff]
        %v1707 = vld [vmem:[%s1705 + $0x8] sm:$0xff]
        %s1708 = scalar_lea.vmem %s2, 208
        %v1709 = vld [vmem:[%s1708] sm:$0xff]
        %v1710 = vld [vmem:[%s1708 + $0x8] sm:$0xff]
        %1711 = vmatpush.msra.mxu0 0.0
        %1712 = vmatpush.msra.mxu0 0.0
        %1713 = vmatpush.msra.mxu0 0.0
        %1714 = vmatpush.msra.mxu0 0.0
        %1715 = vmatpush.msra.mxu0 0.0
        %1716 = vmatpush.msra.mxu0 0.0
        %1717 = vmatpush.msra.mxu0 0.0
        %1718 = vmatpush.msra.mxu0 0.0
        %1719 = vmatpush.msra.mxu0 0.0
        %1720 = vmatpush.msra.mxu0 0.0
        %1721 = vmatpush.msra.mxu0 0.0
        %1722 = vmatpush.msra.mxu0 0.0
        %1723 = vmatpush.msra.mxu0 0.0
        %1724 = vmatpush.msra.mxu0 0.0
        %1725 = vmatpush.msra.mxu0 %v1710
        %1726 = vmatpush.msra.mxu0 %v1709
        %1727 = vmatmul.f32.gmra.mxu0 %v1262
        %v1728 = vpop.f32.mrf.mxu0
        %v1729 = vadd.f32 0.0, %v1728
        %1730 = vdwg.mxu0
        %1731 = vmatpush.msra.mxu0 0.0
        %1732 = vmatpush.msra.mxu0 0.0
        %1733 = vmatpush.msra.mxu0 0.0
        %1734 = vmatpush.msra.mxu0 0.0
        %1735 = vmatpush.msra.mxu0 0.0
        %1736 = vmatpush.msra.mxu0 0.0
        %1737 = vmatpush.msra.mxu0 0.0
        %1738 = vmatpush.msra.mxu0 0.0
        %1739 = vmatpush.msra.mxu0 0.0
        %1740 = vmatpush.msra.mxu0 0.0
        %1741 = vmatpush.msra.mxu0 0.0
        %1742 = vmatpush.msra.mxu0 0.0
        %1743 = vmatpush.msra.mxu0 0.0
        %1744 = vmatpush.msra.mxu0 0.0
        %1745 = vmatpush.msra.mxu0 %v1707
        %1746 = vmatpush.msra.mxu0 %v1706
        %1747 = vmatmul.f32.gmra.mxu0 %v1299
        %v1748 = vpop.f32.mrf.mxu0
        %v1749 = vadd.f32 %v1729, %v1748
        %1750 = vdwg.mxu0
        %s1751 = scalar_lea.vmem %s5, 48
        %v1752 = vld [vmem:[%s1751] sm:$0xff]
        %v1754 = vsel %vm1370, %v1752, 0
        %1756 = vmatpush.msra.mxu0 0.0
        %1757 = vmatpush.msra.mxu0 0.0
        %1758 = vmatpush.msra.mxu0 0.0
        %1759 = vmatpush.msra.mxu0 0.0
        %1760 = vmatpush.msra.mxu0 0.0
        %1761 = vmatpush.msra.mxu0 0.0
        %1762 = vmatpush.msra.mxu0 0.0
        %1763 = vmatpush.msra.mxu0 0.0
        %1764 = vmatpush.msra.mxu0 0.0
        %1765 = vmatpush.msra.mxu0 0.0
        %1766 = vmatpush.msra.mxu0 0.0
        %1767 = vmatpush.msra.mxu0 0.0
        %1768 = vmatpush.msra.mxu0 0.0
        %1769 = vmatpush.msra.mxu0 0.0
        %1770 = vmatpush.msra.mxu0 0.0
        %1771 = vmatpush.msra.mxu0 %v1749
        %1772 = vmatmul.f32.gmra.mxu0 %v1754
        %v1773 = vpop.f32.mrf.mxu0
        %v1774 = vadd.f32 0.0, %v1773
        %1775 = vdwg.mxu0
        %v1776 = vadd.f32 %v1704, %v1774
        %v1777 = vstv %s1234
        %v1778 = vadd.f32 %v1776, %v1777
        %v1779 = vxor.u32 %v1778, 2147483648
        %v1780 = vmul.f32 %v1779, 1.442695
        %v1781 = vpow.pop %v1780
        %v1782 = vadd.f32 %v1781, 1.0
        %v1783 = vrcp.pop %v1782
        %v1784 = vmul.f32 %v1782, %v1783
        %v1785 = vsub.f32 1.0, %v1784
        %v1786 = vmul.f32 %v1783, %v1785
        %v1787 = vadd.f32 %v1783, %v1786
        %vm1788 = vweird.f32 %v1782
        %vm1789 = vweird.f32 %v1783
        %vm1790 = vmor %vm1788, %vm1789
        %v1791 = vsel %vm1790, %v1783, %v1787
        %v1792 = vand.u32 2147483647, %v1782
        %vm1793 = vcmp.eq.f32.partialorder %v1792, 8.507059e+37
        %v1794 = vand.u32 %v1782, 2147483648
        %v1795 = vor.u32 1.1754944e-38, %v1794
        %v1796 = vsel %vm1793, %v1795, %v1791
        %v1797 = vmul.f32 1.0, %v1796
        %s1798 = sld [smem:[#allocation2 + $0x2]]
        %v1799 = vld [vmem:[%s3] sm:$0xff]
        %v1800 = vld [vmem:[%s3 + $0x8] sm:$0xff]
        %s1801 = scalar_lea.vmem %s3, 112
        %v1802 = vld [vmem:[%s1801] sm:$0xff]
        %v1803 = vld [vmem:[%s1801 + $0x8] sm:$0xff]
        %v1820 = vlaneseq
        %v1821 = vand.u32 %v1820, 127
        %v1822 = vperm.slane %v568, %v1821
        %v1823 = vadd.s32 %v1821, 4294967288
        %v1824 = vperm.slane %v569, %v1823
        %vm1825 = vcmask 130112
        %v1826 = vsel %vm1825, %v1824, %v1822
        %v1827 = vperm.slane %v570, %v1821
        %v1828 = vperm.slane %v571, %v1823
        %v1829 = vsel %vm1825, %v1828, %v1827
        %v1830 = vperm.slane %v572, %v1821
        %v1831 = vperm.slane %v573, %v1823
        %v1832 = vsel %vm1825, %v1831, %v1830
        %v1833 = vperm.slane %v574, %v1821
        %v1834 = vperm.slane %v575, %v1823
        %v1835 = vsel %vm1825, %v1834, %v1833
        %v1836 = vperm.slane %v576, %v1821
        %v1837 = vperm.slane %v577, %v1823
        %v1838 = vsel %vm1825, %v1837, %v1836
        %v1839 = vperm.slane %v578, %v1821
        %v1840 = vperm.slane %v579, %v1823
        %v1841 = vsel %vm1825, %v1840, %v1839
        %v1842 = vperm.slane %v580, %v1821
        %v1843 = vperm.slane %v581, %v1823
        %v1844 = vsel %vm1825, %v1843, %v1842
        %v1845 = vperm.slane %v582, %v1821
        %v1846 = vperm.slane %v583, %v1823
        %v1847 = vsel %vm1825, %v1846, %v1845
        %v1848 = vsel %vm1248, %v1829, %v1826
        %v1849 = vsel %vm1250, %v1832, %v1848
        %v1850 = vsel %vm1252, %v1835, %v1849
        %v1851 = vsel %vm1254, %v1838, %v1850
        %v1852 = vsel %vm1256, %v1841, %v1851
        %v1853 = vsel %vm1258, %v1844, %v1852
        %v1854 = vsel %vm1260, %v1847, %v1853
        %v1855 = vsel %vm307, %v1854, 0
        %1857 = vmatpush.msra.mxu0 0.0
        %1858 = vmatpush.msra.mxu0 0.0
        %1859 = vmatpush.msra.mxu0 0.0
        %1860 = vmatpush.msra.mxu0 0.0
        %1861 = vmatpush.msra.mxu0 0.0
        %1862 = vmatpush.msra.mxu0 0.0
        %1863 = vmatpush.msra.mxu0 0.0
        %1864 = vmatpush.msra.mxu0 0.0
        %1865 = vmatpush.msra.mxu0 0.0
        %1866 = vmatpush.msra.mxu0 0.0
        %1867 = vmatpush.msra.mxu0 0.0
        %1868 = vmatpush.msra.mxu0 0.0
        %1869 = vmatpush.msra.mxu0 0.0
        %1870 = vmatpush.msra.mxu0 0.0
        %1871 = vmatpush.msra.mxu0 %v1803
        %1872 = vmatpush.msra.mxu0 %v1802
        %1873 = vmatmul.f32.gmra.mxu0 %v1855
        %v1874 = vpop.f32.mrf.mxu0
        %v1875 = vadd.f32 0.0, %v1874
        %1876 = vdwg.mxu0
        %v1893 = vperm.slane %v505, %v1821
        %v1894 = vperm.slane %v507, %v1823
        %v1895 = vsel %vm1825, %v1894, %v1893
        %v1896 = vperm.slane %v509, %v1821
        %v1897 = vperm.slane %v511, %v1823
        %v1898 = vsel %vm1825, %v1897, %v1896
        %v1899 = vperm.slane %v513, %v1821
        %v1900 = vperm.slane %v515, %v1823
        %v1901 = vsel %vm1825, %v1900, %v1899
        %v1902 = vperm.slane %v517, %v1821
        %v1903 = vperm.slane %v519, %v1823
        %v1904 = vsel %vm1825, %v1903, %v1902
        %v1905 = vperm.slane %v521, %v1821
        %v1906 = vperm.slane %v523, %v1823
        %v1907 = vsel %vm1825, %v1906, %v1905
        %v1908 = vperm.slane %v525, %v1821
        %v1909 = vperm.slane %v527, %v1823
        %v1910 = vsel %vm1825, %v1909, %v1908
        %v1911 = vperm.slane %v529, %v1821
        %v1912 = vperm.slane %v531, %v1823
        %v1913 = vsel %vm1825, %v1912, %v1911
        %v1914 = vperm.slane %v533, %v1821
        %v1915 = vperm.slane %v535, %v1823
        %v1916 = vsel %vm1825, %v1915, %v1914
        %v1917 = vsel %vm1248, %v1898, %v1895
        %v1918 = vsel %vm1250, %v1901, %v1917
        %v1919 = vsel %vm1252, %v1904, %v1918
        %v1920 = vsel %vm1254, %v1907, %v1919
        %v1921 = vsel %vm1256, %v1910, %v1920
        %v1922 = vsel %vm1258, %v1913, %v1921
        %v1923 = vsel %vm1260, %v1916, %v1922
        %v1924 = vsel %vm307, %v1923, 0
        %1926 = vmatpush.msra.mxu0 0.0
        %1927 = vmatpush.msra.mxu0 0.0
        %1928 = vmatpush.msra.mxu0 0.0
        %1929 = vmatpush.msra.mxu0 0.0
        %1930 = vmatpush.msra.mxu0 0.0
        %1931 = vmatpush.msra.mxu0 0.0
        %1932 = vmatpush.msra.mxu0 0.0
        %1933 = vmatpush.msra.mxu0 0.0
        %1934 = vmatpush.msra.mxu0 0.0
        %1935 = vmatpush.msra.mxu0 0.0
        %1936 = vmatpush.msra.mxu0 0.0
        %1937 = vmatpush.msra.mxu0 0.0
        %1938 = vmatpush.msra.mxu0 0.0
        %1939 = vmatpush.msra.mxu0 0.0
        %1940 = vmatpush.msra.mxu0 %v1800
        %1941 = vmatpush.msra.mxu0 %v1799
        %1942 = vmatmul.f32.gmra.mxu0 %v1924
        %v1943 = vpop.f32.mrf.mxu0
        %v1944 = vadd.f32 %v1875, %v1943
        %1945 = vdwg.mxu0
        %s1946 = scalar_lea.vmem %s3, 16
        %v1947 = vld [vmem:[%s1946] sm:$0xff]
        %v1948 = vld [vmem:[%s1946 + $0x8] sm:$0xff]
        %s1949 = scalar_lea.vmem %s3, 128
        %v1950 = vld [vmem:[%s1949] sm:$0xff]
        %v1951 = vld [vmem:[%s1949 + $0x8] sm:$0xff]
        %1952 = vmatpush.msra.mxu0 0.0
        %1953 = vmatpush.msra.mxu0 0.0
        %1954 = vmatpush.msra.mxu0 0.0
        %1955 = vmatpush.msra.mxu0 0.0
        %1956 = vmatpush.msra.mxu0 0.0
        %1957 = vmatpush.msra.mxu0 0.0
        %1958 = vmatpush.msra.mxu0 0.0
        %1959 = vmatpush.msra.mxu0 0.0
        %1960 = vmatpush.msra.mxu0 0.0
        %1961 = vmatpush.msra.mxu0 0.0
        %1962 = vmatpush.msra.mxu0 0.0
        %1963 = vmatpush.msra.mxu0 0.0
        %1964 = vmatpush.msra.mxu0 0.0
        %1965 = vmatpush.msra.mxu0 0.0
        %1966 = vmatpush.msra.mxu0 %v1951
        %1967 = vmatpush.msra.mxu0 %v1950
        %1968 = vmatmul.f32.gmra.mxu0 %v1855
        %v1969 = vpop.f32.mrf.mxu0
        %v1970 = vadd.f32 0.0, %v1969
        %1971 = vdwg.mxu0
        %1972 = vmatpush.msra.mxu0 0.0
        %1973 = vmatpush.msra.mxu0 0.0
        %1974 = vmatpush.msra.mxu0 0.0
        %1975 = vmatpush.msra.mxu0 0.0
        %1976 = vmatpush.msra.mxu0 0.0
        %1977 = vmatpush.msra.mxu0 0.0
        %1978 = vmatpush.msra.mxu0 0.0
        %1979 = vmatpush.msra.mxu0 0.0
        %1980 = vmatpush.msra.mxu0 0.0
        %1981 = vmatpush.msra.mxu0 0.0
        %1982 = vmatpush.msra.mxu0 0.0
        %1983 = vmatpush.msra.mxu0 0.0
        %1984 = vmatpush.msra.mxu0 0.0
        %1985 = vmatpush.msra.mxu0 0.0
        %1986 = vmatpush.msra.mxu0 %v1948
        %1987 = vmatpush.msra.mxu0 %v1947
        %1988 = vmatmul.f32.gmra.mxu0 %v1924
        %v1989 = vpop.f32.mrf.mxu0
        %v1990 = vadd.f32 %v1970, %v1989
        %1991 = vdwg.mxu0
        %1992 = vmatpush.msra.mxu0 0.0
        %1993 = vmatpush.msra.mxu0 0.0
        %1994 = vmatpush.msra.mxu0 0.0
        %1995 = vmatpush.msra.mxu0 0.0
        %1996 = vmatpush.msra.mxu0 0.0
        %1997 = vmatpush.msra.mxu0 0.0
        %1998 = vmatpush.msra.mxu0 0.0
        %1999 = vmatpush.msra.mxu0 0.0
        %2000 = vmatpush.msra.mxu0 0.0
        %2001 = vmatpush.msra.mxu0 0.0
        %2002 = vmatpush.msra.mxu0 0.0
        %2003 = vmatpush.msra.mxu0 0.0
        %2004 = vmatpush.msra.mxu0 0.0
        %2005 = vmatpush.msra.mxu0 0.0
        %2006 = vmatpush.msra.mxu0 0.0
        %2007 = vmatpush.msra.mxu0 %v1990
        %2008 = vmatmul.f32.gmra.mxu0 %v1372
        %v2009 = vpop.f32.mrf.mxu0
        %v2010 = vadd.f32 0.0, %v2009
        %2011 = vdwg.mxu0
        %2012 = vmatpush.msra.mxu0 0.0
        %2013 = vmatpush.msra.mxu0 0.0
        %2014 = vmatpush.msra.mxu0 0.0
        %2015 = vmatpush.msra.mxu0 0.0
        %2016 = vmatpush.msra.mxu0 0.0
        %2017 = vmatpush.msra.mxu0 0.0
        %2018 = vmatpush.msra.mxu0 0.0
        %2019 = vmatpush.msra.mxu0 0.0
        %2020 = vmatpush.msra.mxu0 0.0
        %2021 = vmatpush.msra.mxu0 0.0
        %2022 = vmatpush.msra.mxu0 0.0
        %2023 = vmatpush.msra.mxu0 0.0
        %2024 = vmatpush.msra.mxu0 0.0
        %2025 = vmatpush.msra.mxu0 0.0
        %2026 = vmatpush.msra.mxu0 0.0
        %2027 = vmatpush.msra.mxu0 %v1944
        %2028 = vmatmul.f32.gmra.mxu0 %v1395
        %v2029 = vpop.f32.mrf.mxu0
        %v2030 = vadd.f32 %v2010, %v2029
        %2031 = vdwg.mxu0
        %s2032 = scalar_lea.vmem %s3, 32
        %v2033 = vld [vmem:[%s2032] sm:$0xff]
        %v2034 = vld [vmem:[%s2032 + $0x8] sm:$0xff]
        %s2035 = scalar_lea.vmem %s3, 144
        %v2036 = vld [vmem:[%s2035] sm:$0xff]
        %v2037 = vld [vmem:[%s2035 + $0x8] sm:$0xff]
        %2038 = vmatpush.msra.mxu0 0.0
        %2039 = vmatpush.msra.mxu0 0.0
        %2040 = vmatpush.msra.mxu0 0.0
        %2041 = vmatpush.msra.mxu0 0.0
        %2042 = vmatpush.msra.mxu0 0.0
        %2043 = vmatpush.msra.mxu0 0.0
        %2044 = vmatpush.msra.mxu0 0.0
        %2045 = vmatpush.msra.mxu0 0.0
        %2046 = vmatpush.msra.mxu0 0.0
        %2047 = vmatpush.msra.mxu0 0.0
        %2048 = vmatpush.msra.mxu0 0.0
        %2049 = vmatpush.msra.mxu0 0.0
        %2050 = vmatpush.msra.mxu0 0.0
        %2051 = vmatpush.msra.mxu0 0.0
        %2052 = vmatpush.msra.mxu0 %v2037
        %2053 = vmatpush.msra.mxu0 %v2036
        %2054 = vmatmul.f32.gmra.mxu0 %v1855
        %v2055 = vpop.f32.mrf.mxu0
        %v2056 = vadd.f32 0.0, %v2055
        %2057 = vdwg.mxu0
        %2058 = vmatpush.msra.mxu0 0.0
        %2059 = vmatpush.msra.mxu0 0.0
        %2060 = vmatpush.msra.mxu0 0.0
        %2061 = vmatpush.msra.mxu0 0.0
        %2062 = vmatpush.msra.mxu0 0.0
        %2063 = vmatpush.msra.mxu0 0.0
        %2064 = vmatpush.msra.mxu0 0.0
        %2065 = vmatpush.msra.mxu0 0.0
        %2066 = vmatpush.msra.mxu0 0.0
        %2067 = vmatpush.msra.mxu0 0.0
        %2068 = vmatpush.msra.mxu0 0.0
        %2069 = vmatpush.msra.mxu0 0.0
        %2070 = vmatpush.msra.mxu0 0.0
        %2071 = vmatpush.msra.mxu0 0.0
        %2072 = vmatpush.msra.mxu0 %v2034
        %2073 = vmatpush.msra.mxu0 %v2033
        %2074 = vmatmul.f32.gmra.mxu0 %v1924
        %v2075 = vpop.f32.mrf.mxu0
        %v2076 = vadd.f32 %v2056, %v2075
        %2077 = vdwg.mxu0
        %2078 = vmatpush.msra.mxu0 0.0
        %2079 = vmatpush.msra.mxu0 0.0
        %2080 = vmatpush.msra.mxu0 0.0
        %2081 = vmatpush.msra.mxu0 0.0
        %2082 = vmatpush.msra.mxu0 0.0
        %2083 = vmatpush.msra.mxu0 0.0
        %2084 = vmatpush.msra.mxu0 0.0
        %2085 = vmatpush.msra.mxu0 0.0
        %2086 = vmatpush.msra.mxu0 0.0
        %2087 = vmatpush.msra.mxu0 0.0
        %2088 = vmatpush.msra.mxu0 0.0
        %2089 = vmatpush.msra.mxu0 0.0
        %2090 = vmatpush.msra.mxu0 0.0
        %2091 = vmatpush.msra.mxu0 0.0
        %2092 = vmatpush.msra.mxu0 0.0
        %2093 = vmatpush.msra.mxu0 %v2076
        %2094 = vmatmul.f32.gmra.mxu0 %v1466
        %v2095 = vpop.f32.mrf.mxu0
        %v2096 = vadd.f32 0.0, %v2095
        %2097 = vdwg.mxu0
        %v2098 = vadd.f32 %v2030, %v2096
        %s2099 = scalar_lea.vmem %s3, 48
        %v2100 = vld [vmem:[%s2099] sm:$0xff]
        %v2101 = vld [vmem:[%s2099 + $0x8] sm:$0xff]
        %s2102 = scalar_lea.vmem %s3, 160
        %v2103 = vld [vmem:[%s2102] sm:$0xff]
        %v2104 = vld [vmem:[%s2102 + $0x8] sm:$0xff]
        %2105 = vmatpush.msra.mxu0 0.0
        %2106 = vmatpush.msra.mxu0 0.0
        %2107 = vmatpush.msra.mxu0 0.0
        %2108 = vmatpush.msra.mxu0 0.0
        %2109 = vmatpush.msra.mxu0 0.0
        %2110 = vmatpush.msra.mxu0 0.0
        %2111 = vmatpush.msra.mxu0 0.0
        %2112 = vmatpush.msra.mxu0 0.0
        %2113 = vmatpush.msra.mxu0 0.0
        %2114 = vmatpush.msra.mxu0 0.0
        %2115 = vmatpush.msra.mxu0 0.0
        %2116 = vmatpush.msra.mxu0 0.0
        %2117 = vmatpush.msra.mxu0 0.0
        %2118 = vmatpush.msra.mxu0 0.0
        %2119 = vmatpush.msra.mxu0 %v2104
        %2120 = vmatpush.msra.mxu0 %v2103
        %2121 = vmatmul.f32.gmra.mxu0 %v1855
        %v2122 = vpop.f32.mrf.mxu0
        %v2123 = vadd.f32 0.0, %v2122
        %2124 = vdwg.mxu0
        %2125 = vmatpush.msra.mxu0 0.0
        %2126 = vmatpush.msra.mxu0 0.0
        %2127 = vmatpush.msra.mxu0 0.0
        %2128 = vmatpush.msra.mxu0 0.0
        %2129 = vmatpush.msra.mxu0 0.0
        %2130 = vmatpush.msra.mxu0 0.0
        %2131 = vmatpush.msra.mxu0 0.0
        %2132 = vmatpush.msra.mxu0 0.0
        %2133 = vmatpush.msra.mxu0 0.0
        %2134 = vmatpush.msra.mxu0 0.0
        %2135 = vmatpush.msra.mxu0 0.0
        %2136 = vmatpush.msra.mxu0 0.0
        %2137 = vmatpush.msra.mxu0 0.0
        %2138 = vmatpush.msra.mxu0 0.0
        %2139 = vmatpush.msra.mxu0 %v2101
        %2140 = vmatpush.msra.mxu0 %v2100
        %2141 = vmatmul.f32.gmra.mxu0 %v1924
        %v2142 = vpop.f32.mrf.mxu0
        %v2143 = vadd.f32 %v2123, %v2142
        %2144 = vdwg.mxu0
        %2145 = vmatpush.msra.mxu0 0.0
        %2146 = vmatpush.msra.mxu0 0.0
        %2147 = vmatpush.msra.mxu0 0.0
        %2148 = vmatpush.msra.mxu0 0.0
        %2149 = vmatpush.msra.mxu0 0.0
        %2150 = vmatpush.msra.mxu0 0.0
        %2151 = vmatpush.msra.mxu0 0.0
        %2152 = vmatpush.msra.mxu0 0.0
        %2153 = vmatpush.msra.mxu0 0.0
        %2154 = vmatpush.msra.mxu0 0.0
        %2155 = vmatpush.msra.mxu0 0.0
        %2156 = vmatpush.msra.mxu0 0.0
        %2157 = vmatpush.msra.mxu0 0.0
        %2158 = vmatpush.msra.mxu0 0.0
        %2159 = vmatpush.msra.mxu0 0.0
        %2160 = vmatpush.msra.mxu0 %v2143
        %2161 = vmatmul.f32.gmra.mxu0 %v1538
        %v2162 = vpop.f32.mrf.mxu0
        %v2163 = vadd.f32 0.0, %v2162
        %2164 = vdwg.mxu0
        %v2165 = vadd.f32 %v2098, %v2163
        %s2166 = scalar_lea.vmem %s3, 64
        %v2167 = vld [vmem:[%s2166] sm:$0xff]
        %v2168 = vld [vmem:[%s2166 + $0x8] sm:$0xff]
        %s2169 = scalar_lea.vmem %s3, 176
        %v2170 = vld [vmem:[%s2169] sm:$0xff]
        %v2171 = vld [vmem:[%s2169 + $0x8] sm:$0xff]
        %2172 = vmatpush.msra.mxu0 0.0
        %2173 = vmatpush.msra.mxu0 0.0
        %2174 = vmatpush.msra.mxu0 0.0
        %2175 = vmatpush.msra.mxu0 0.0
        %2176 = vmatpush.msra.mxu0 0.0
        %2177 = vmatpush.msra.mxu0 0.0
        %2178 = vmatpush.msra.mxu0 0.0
        %2179 = vmatpush.msra.mxu0 0.0
        %2180 = vmatpush.msra.mxu0 0.0
        %2181 = vmatpush.msra.mxu0 0.0
        %2182 = vmatpush.msra.mxu0 0.0
        %2183 = vmatpush.msra.mxu0 0.0
        %2184 = vmatpush.msra.mxu0 0.0
        %2185 = vmatpush.msra.mxu0 0.0
        %2186 = vmatpush.msra.mxu0 %v2171
        %2187 = vmatpush.msra.mxu0 %v2170
        %2188 = vmatmul.f32.gmra.mxu0 %v1855
        %v2189 = vpop.f32.mrf.mxu0
        %v2190 = vadd.f32 0.0, %v2189
        %2191 = vdwg.mxu0
        %2192 = vmatpush.msra.mxu0 0.0
        %2193 = vmatpush.msra.mxu0 0.0
        %2194 = vmatpush.msra.mxu0 0.0
        %2195 = vmatpush.msra.mxu0 0.0
        %2196 = vmatpush.msra.mxu0 0.0
        %2197 = vmatpush.msra.mxu0 0.0
        %2198 = vmatpush.msra.mxu0 0.0
        %2199 = vmatpush.msra.mxu0 0.0
        %2200 = vmatpush.msra.mxu0 0.0
        %2201 = vmatpush.msra.mxu0 0.0
        %2202 = vmatpush.msra.mxu0 0.0
        %2203 = vmatpush.msra.mxu0 0.0
        %2204 = vmatpush.msra.mxu0 0.0
        %2205 = vmatpush.msra.mxu0 0.0
        %2206 = vmatpush.msra.mxu0 %v2168
        %2207 = vmatpush.msra.mxu0 %v2167
        %2208 = vmatmul.f32.gmra.mxu0 %v1924
        %v2209 = vpop.f32.mrf.mxu0
        %v2210 = vadd.f32 %v2190, %v2209
        %2211 = vdwg.mxu0
        %2212 = vmatpush.msra.mxu0 0.0
        %2213 = vmatpush.msra.mxu0 0.0
        %2214 = vmatpush.msra.mxu0 0.0
        %2215 = vmatpush.msra.mxu0 0.0
        %2216 = vmatpush.msra.mxu0 0.0
        %2217 = vmatpush.msra.mxu0 0.0
        %2218 = vmatpush.msra.mxu0 0.0
        %2219 = vmatpush.msra.mxu0 0.0
        %2220 = vmatpush.msra.mxu0 0.0
        %2221 = vmatpush.msra.mxu0 0.0
        %2222 = vmatpush.msra.mxu0 0.0
        %2223 = vmatpush.msra.mxu0 0.0
        %2224 = vmatpush.msra.mxu0 0.0
        %2225 = vmatpush.msra.mxu0 0.0
        %2226 = vmatpush.msra.mxu0 0.0
        %2227 = vmatpush.msra.mxu0 %v2210
        %2228 = vmatmul.f32.gmra.mxu0 %v1610
        %v2229 = vpop.f32.mrf.mxu0
        %v2230 = vadd.f32 0.0, %v2229
        %2231 = vdwg.mxu0
        %v2232 = vadd.f32 %v2165, %v2230
        %s2233 = scalar_lea.vmem %s3, 80
        %v2234 = vld [vmem:[%s2233] sm:$0xff]
        %v2235 = vld [vmem:[%s2233 + $0x8] sm:$0xff]
        %s2236 = scalar_lea.vmem %s3, 192
        %v2237 = vld [vmem:[%s2236] sm:$0xff]
        %v2238 = vld [vmem:[%s2236 + $0x8] sm:$0xff]
        %2239 = vmatpush.msra.mxu0 0.0
        %2240 = vmatpush.msra.mxu0 0.0
        %2241 = vmatpush.msra.mxu0 0.0
        %2242 = vmatpush.msra.mxu0 0.0
        %2243 = vmatpush.msra.mxu0 0.0
        %2244 = vmatpush.msra.mxu0 0.0
        %2245 = vmatpush.msra.mxu0 0.0
        %2246 = vmatpush.msra.mxu0 0.0
        %2247 = vmatpush.msra.mxu0 0.0
        %2248 = vmatpush.msra.mxu0 0.0
        %2249 = vmatpush.msra.mxu0 0.0
        %2250 = vmatpush.msra.mxu0 0.0
        %2251 = vmatpush.msra.mxu0 0.0
        %2252 = vmatpush.msra.mxu0 0.0
        %2253 = vmatpush.msra.mxu0 %v2238
        %2254 = vmatpush.msra.mxu0 %v2237
        %2255 = vmatmul.f32.gmra.mxu0 %v1855
        %v2256 = vpop.f32.mrf.mxu0
        %v2257 = vadd.f32 0.0, %v2256
        %2258 = vdwg.mxu0
        %2259 = vmatpush.msra.mxu0 0.0
        %2260 = vmatpush.msra.mxu0 0.0
        %2261 = vmatpush.msra.mxu0 0.0
        %2262 = vmatpush.msra.mxu0 0.0
        %2263 = vmatpush.msra.mxu0 0.0
        %2264 = vmatpush.msra.mxu0 0.0
        %2265 = vmatpush.msra.mxu0 0.0
        %2266 = vmatpush.msra.mxu0 0.0
        %2267 = vmatpush.msra.mxu0 0.0
        %2268 = vmatpush.msra.mxu0 0.0
        %2269 = vmatpush.msra.mxu0 0.0
        %2270 = vmatpush.msra.mxu0 0.0
        %2271 = vmatpush.msra.mxu0 0.0
        %2272 = vmatpush.msra.mxu0 0.0
        %2273 = vmatpush.msra.mxu0 %v2235
        %2274 = vmatpush.msra.mxu0 %v2234
        %2275 = vmatmul.f32.gmra.mxu0 %v1924
        %v2276 = vpop.f32.mrf.mxu0
        %v2277 = vadd.f32 %v2257, %v2276
        %2278 = vdwg.mxu0
        %2279 = vmatpush.msra.mxu0 0.0
        %2280 = vmatpush.msra.mxu0 0.0
        %2281 = vmatpush.msra.mxu0 0.0
        %2282 = vmatpush.msra.mxu0 0.0
        %2283 = vmatpush.msra.mxu0 0.0
        %2284 = vmatpush.msra.mxu0 0.0
        %2285 = vmatpush.msra.mxu0 0.0
        %2286 = vmatpush.msra.mxu0 0.0
        %2287 = vmatpush.msra.mxu0 0.0
        %2288 = vmatpush.msra.mxu0 0.0
        %2289 = vmatpush.msra.mxu0 0.0
        %2290 = vmatpush.msra.mxu0 0.0
        %2291 = vmatpush.msra.mxu0 0.0
        %2292 = vmatpush.msra.mxu0 0.0
        %2293 = vmatpush.msra.mxu0 0.0
        %2294 = vmatpush.msra.mxu0 %v2277
        %2295 = vmatmul.f32.gmra.mxu0 %v1682
        %v2296 = vpop.f32.mrf.mxu0
        %v2297 = vadd.f32 0.0, %v2296
        %2298 = vdwg.mxu0
        %v2299 = vadd.f32 %v2232, %v2297
        %s2300 = scalar_lea.vmem %s3, 96
        %v2301 = vld [vmem:[%s2300] sm:$0xff]
        %v2302 = vld [vmem:[%s2300 + $0x8] sm:$0xff]
        %s2303 = scalar_lea.vmem %s3, 208
        %v2304 = vld [vmem:[%s2303] sm:$0xff]
        %v2305 = vld [vmem:[%s2303 + $0x8] sm:$0xff]
        %2306 = vmatpush.msra.mxu0 0.0
        %2307 = vmatpush.msra.mxu0 0.0
        %2308 = vmatpush.msra.mxu0 0.0
        %2309 = vmatpush.msra.mxu0 0.0
        %2310 = vmatpush.msra.mxu0 0.0
        %2311 = vmatpush.msra.mxu0 0.0
        %2312 = vmatpush.msra.mxu0 0.0
        %2313 = vmatpush.msra.mxu0 0.0
        %2314 = vmatpush.msra.mxu0 0.0
        %2315 = vmatpush.msra.mxu0 0.0
        %2316 = vmatpush.msra.mxu0 0.0
        %2317 = vmatpush.msra.mxu0 0.0
        %2318 = vmatpush.msra.mxu0 0.0
        %2319 = vmatpush.msra.mxu0 0.0
        %2320 = vmatpush.msra.mxu0 %v2305
        %2321 = vmatpush.msra.mxu0 %v2304
        %2322 = vmatmul.f32.gmra.mxu0 %v1855
        %v2323 = vpop.f32.mrf.mxu0
        %v2324 = vadd.f32 0.0, %v2323
        %2325 = vdwg.mxu0
        %2326 = vmatpush.msra.mxu0 0.0
        %2327 = vmatpush.msra.mxu0 0.0
        %2328 = vmatpush.msra.mxu0 0.0
        %2329 = vmatpush.msra.mxu0 0.0
        %2330 = vmatpush.msra.mxu0 0.0
        %2331 = vmatpush.msra.mxu0 0.0
        %2332 = vmatpush.msra.mxu0 0.0
        %2333 = vmatpush.msra.mxu0 0.0
        %2334 = vmatpush.msra.mxu0 0.0
        %2335 = vmatpush.msra.mxu0 0.0
        %2336 = vmatpush.msra.mxu0 0.0
        %2337 = vmatpush.msra.mxu0 0.0
        %2338 = vmatpush.msra.mxu0 0.0
        %2339 = vmatpush.msra.mxu0 0.0
        %2340 = vmatpush.msra.mxu0 %v2302
        %2341 = vmatpush.msra.mxu0 %v2301
        %2342 = vmatmul.f32.gmra.mxu0 %v1924
        %v2343 = vpop.f32.mrf.mxu0
        %v2344 = vadd.f32 %v2324, %v2343
        %2345 = vdwg.mxu0
        %2346 = vmatpush.msra.mxu0 0.0
        %2347 = vmatpush.msra.mxu0 0.0
        %2348 = vmatpush.msra.mxu0 0.0
        %2349 = vmatpush.msra.mxu0 0.0
        %2350 = vmatpush.msra.mxu0 0.0
        %2351 = vmatpush.msra.mxu0 0.0
        %2352 = vmatpush.msra.mxu0 0.0
        %2353 = vmatpush.msra.mxu0 0.0
        %2354 = vmatpush.msra.mxu0 0.0
        %2355 = vmatpush.msra.mxu0 0.0
        %2356 = vmatpush.msra.mxu0 0.0
        %2357 = vmatpush.msra.mxu0 0.0
        %2358 = vmatpush.msra.mxu0 0.0
        %2359 = vmatpush.msra.mxu0 0.0
        %2360 = vmatpush.msra.mxu0 0.0
        %2361 = vmatpush.msra.mxu0 %v2344
        %2362 = vmatmul.f32.gmra.mxu0 %v1754
        %v2363 = vpop.f32.mrf.mxu0
        %v2364 = vadd.f32 0.0, %v2363
        %2365 = vdwg.mxu0
        %v2366 = vadd.f32 %v2299, %v2364
        %v2367 = vstv %s1798
        %v2368 = vadd.f32 %v2366, %v2367
        %v2369 = vxor.u32 %v2368, 2147483648
        %v2370 = vmul.f32 %v2369, 1.442695
        %v2371 = vpow.pop %v2370
        %v2372 = vadd.f32 %v2371, 1.0
        %v2373 = vrcp.pop %v2372
        %v2374 = vmul.f32 %v2372, %v2373
        %v2375 = vsub.f32 1.0, %v2374
        %v2376 = vmul.f32 %v2373, %v2375
        %v2377 = vadd.f32 %v2373, %v2376
        %vm2378 = vweird.f32 %v2372
        %vm2379 = vweird.f32 %v2373
        %vm2380 = vmor %vm2378, %vm2379
        %v2381 = vsel %vm2380, %v2373, %v2377
        %v2382 = vand.u32 2147483647, %v2372
        %vm2383 = vcmp.eq.f32.partialorder %v2382, 8.507059e+37
        %v2384 = vand.u32 %v2372, 2147483648
        %v2385 = vor.u32 1.1754944e-38, %v2384
        %v2386 = vsel %vm2383, %v2385, %v2381
        %v2387 = vmul.f32 1.0, %v2386
        %v2389 = vrot.slane %v1797, 1
        %v2390 = vrot.slane %v1797, 2
        %v2391 = vrot.slane %v1797, 3
        %v2392 = vrot.slane %v1797, 4
        %v2393 = vrot.slane %v1797, 5
        %v2394 = vrot.slane %v1797, 6
        %v2395 = vrot.slane %v1797, 7
        %v2396 = vperm.slane %v1797, 0
        %v2397 = vperm.slane %v2389, 0
        %v2398 = vperm.slane %v2390, 0
        %v2399 = vperm.slane %v2391, 0
        %v2400 = vperm.slane %v2392, 0
        %v2401 = vperm.slane %v2393, 0
        %v2402 = vperm.slane %v2394, 0
        %v2403 = vperm.slane %v2395, 0
        %v2412 = vadd.f32 %v1218, %v2396
        %v2413 = vadd.f32 %v1233, %v2396
        %v2414 = vadd.f32 %v1218, %v2397
        %v2415 = vadd.f32 %v1233, %v2397
        %v2416 = vadd.f32 %v1218, %v2398
        %v2417 = vadd.f32 %v1233, %v2398
        %v2418 = vadd.f32 %v1218, %v2399
        %v2419 = vadd.f32 %v1233, %v2399
        %v2420 = vadd.f32 %v1218, %v2400
        %v2421 = vadd.f32 %v1233, %v2400
        %v2422 = vadd.f32 %v1218, %v2401
        %v2423 = vadd.f32 %v1233, %v2401
        %v2424 = vadd.f32 %v1218, %v2402
        %v2425 = vadd.f32 %v1233, %v2402
        %v2426 = vadd.f32 %v1218, %v2403
        %v2427 = vadd.f32 %v1233, %v2403
        %v2428 = vperm.slane %v2387, 0
        %v2429 = vlaneseq
        %v2430 = vshrl.u32 %v2429, 7
        %2432 = vset.pattern.permute.xlu0 %v2430
        %2433 = vperm.xlu0 %2432, %v2428
        %v2434 = vpop.permute.xlu0 %2433
        %v2435 = vlaneseq
        %v2436 = vshrl.u32 %v2435, 7
        %v2437 = vadd.s32 %v2436, 8
        %2438 = vset.pattern.permute.xlu0 %v2437
        %2439 = vperm.xlu0 %2438, %v2428
        %v2440 = vpop.permute.xlu0 %2439
        %v2441 = vperm.slane %v2387, 1
        %v2442 = vlaneseq
        %v2443 = vshrl.u32 %v2442, 7
        %2445 = vset.pattern.permute.xlu0 %v2443
        %2446 = vperm.xlu0 %2445, %v2441
        %v2447 = vpop.permute.xlu0 %2446
        %v2448 = vlaneseq
        %v2449 = vshrl.u32 %v2448, 7
        %v2450 = vadd.s32 %v2449, 8
        %2451 = vset.pattern.permute.xlu0 %v2450
        %2452 = vperm.xlu0 %2451, %v2441
        %v2453 = vpop.permute.xlu0 %2452
        %v2454 = vperm.slane %v2387, 2
        %v2455 = vlaneseq
        %v2456 = vshrl.u32 %v2455, 7
        %2458 = vset.pattern.permute.xlu0 %v2456
        %2459 = vperm.xlu0 %2458, %v2454
        %v2460 = vpop.permute.xlu0 %2459
        %v2461 = vlaneseq
        %v2462 = vshrl.u32 %v2461, 7
        %v2463 = vadd.s32 %v2462, 8
        %2464 = vset.pattern.permute.xlu0 %v2463
        %2465 = vperm.xlu0 %2464, %v2454
        %v2466 = vpop.permute.xlu0 %2465
        %v2467 = vperm.slane %v2387, 3
        %v2468 = vlaneseq
        %v2469 = vshrl.u32 %v2468, 7
        %2471 = vset.pattern.permute.xlu0 %v2469
        %2472 = vperm.xlu0 %2471, %v2467
        %v2473 = vpop.permute.xlu0 %2472
        %v2474 = vlaneseq
        %v2475 = vshrl.u32 %v2474, 7
        %v2476 = vadd.s32 %v2475, 8
        %2477 = vset.pattern.permute.xlu0 %v2476
        %2478 = vperm.xlu0 %2477, %v2467
        %v2479 = vpop.permute.xlu0 %2478
        %v2480 = vperm.slane %v2387, 4
        %v2481 = vlaneseq
        %v2482 = vshrl.u32 %v2481, 7
        %2484 = vset.pattern.permute.xlu0 %v2482
        %2485 = vperm.xlu0 %2484, %v2480
        %v2486 = vpop.permute.xlu0 %2485
        %v2487 = vlaneseq
        %v2488 = vshrl.u32 %v2487, 7
        %v2489 = vadd.s32 %v2488, 8
        %2490 = vset.pattern.permute.xlu0 %v2489
        %2491 = vperm.xlu0 %2490, %v2480
        %v2492 = vpop.permute.xlu0 %2491
        %v2493 = vperm.slane %v2387, 5
        %v2494 = vlaneseq
        %v2495 = vshrl.u32 %v2494, 7
        %2497 = vset.pattern.permute.xlu0 %v2495
        %2498 = vperm.xlu0 %2497, %v2493
        %v2499 = vpop.permute.xlu0 %2498
        %v2500 = vlaneseq
        %v2501 = vshrl.u32 %v2500, 7
        %v2502 = vadd.s32 %v2501, 8
        %2503 = vset.pattern.permute.xlu0 %v2502
        %2504 = vperm.xlu0 %2503, %v2493
        %v2505 = vpop.permute.xlu0 %2504
        %v2506 = vperm.slane %v2387, 6
        %v2507 = vlaneseq
        %v2508 = vshrl.u32 %v2507, 7
        %2510 = vset.pattern.permute.xlu0 %v2508
        %2511 = vperm.xlu0 %2510, %v2506
        %v2512 = vpop.permute.xlu0 %2511
        %v2513 = vlaneseq
        %v2514 = vshrl.u32 %v2513, 7
        %v2515 = vadd.s32 %v2514, 8
        %2516 = vset.pattern.permute.xlu0 %v2515
        %2517 = vperm.xlu0 %2516, %v2506
        %v2518 = vpop.permute.xlu0 %2517
        %v2519 = vperm.slane %v2387, 7
        %v2520 = vlaneseq
        %v2521 = vshrl.u32 %v2520, 7
        %2523 = vset.pattern.permute.xlu0 %v2521
        %2524 = vperm.xlu0 %2523, %v2519
        %v2525 = vpop.permute.xlu0 %2524
        %v2526 = vlaneseq
        %v2527 = vshrl.u32 %v2526, 7
        %v2528 = vadd.s32 %v2527, 8
        %2529 = vset.pattern.permute.xlu0 %v2528
        %2530 = vperm.xlu0 %2529, %v2519
        %v2531 = vpop.permute.xlu0 %2530
        %v2532 = vadd.f32 %v2412, %v2434
        %v2533 = vadd.f32 %v2413, %v2440
        %v2534 = vadd.f32 %v2414, %v2447
        %v2535 = vadd.f32 %v2415, %v2453
        %v2536 = vadd.f32 %v2416, %v2460
        %v2537 = vadd.f32 %v2417, %v2466
        %v2538 = vadd.f32 %v2418, %v2473
        %v2539 = vadd.f32 %v2419, %v2479
        %v2540 = vadd.f32 %v2420, %v2486
        %v2541 = vadd.f32 %v2421, %v2492
        %v2542 = vadd.f32 %v2422, %v2499
        %v2543 = vadd.f32 %v2423, %v2505
        %v2544 = vadd.f32 %v2424, %v2512
        %v2545 = vadd.f32 %v2425, %v2518
        %v2546 = vadd.f32 %v2426, %v2525
        %v2547 = vadd.f32 %v2427, %v2531
        %v2548 = vmul.f32 %v2532, 0.33333334
        %v2549 = vmul.f32 %v2533, 0.33333334
        %v2550 = vmul.f32 %v2534, 0.33333334
        %v2551 = vmul.f32 %v2535, 0.33333334
        %v2552 = vmul.f32 %v2536, 0.33333334
        %v2553 = vmul.f32 %v2537, 0.33333334
        %v2554 = vmul.f32 %v2538, 0.33333334
        %v2555 = vmul.f32 %v2539, 0.33333334
        %v2556 = vmul.f32 %v2540, 0.33333334
        %v2557 = vmul.f32 %v2541, 0.33333334
        %v2558 = vmul.f32 %v2542, 0.33333334
        %v2559 = vmul.f32 %v2543, 0.33333334
        %v2560 = vmul.f32 %v2544, 0.33333334
        %v2561 = vmul.f32 %v2545, 0.33333334
        %v2562 = vmul.f32 %v2546, 0.33333334
        %v2563 = vmul.f32 %v2547, 0.33333334
        %v2564 = vmul.f32 %v291, %v2548
        %v2565 = vmul.f32 %v292, %v2549
        %v2566 = vmul.f32 %v293, %v2550
        %v2567 = vmul.f32 %v294, %v2551
        %v2568 = vmul.f32 %v295, %v2552
        %v2569 = vmul.f32 %v296, %v2553
        %v2570 = vmul.f32 %v297, %v2554
        %v2571 = vmul.f32 %v298, %v2555
        %v2572 = vmul.f32 %v299, %v2556
        %v2573 = vmul.f32 %v300, %v2557
        %v2574 = vmul.f32 %v301, %v2558
        %v2575 = vmul.f32 %v302, %v2559
        %v2576 = vmul.f32 %v303, %v2560
        %v2577 = vmul.f32 %v304, %v2561
        %v2578 = vmul.f32 %v305, %v2562
        %v2579 = vmul.f32 %v306, %v2563
        %2580 = vst.msk [vmem:[%s285] sm:$0xff] %vm307, %v2564
        %2581 = vst.msk [vmem:[%s285 + $0x8] sm:$0xff] %vm307, %v2565
        %2582 = vst.msk [vmem:[%s285 + $0x10] sm:$0xff] %vm307, %v2566
        %2583 = vst.msk [vmem:[%s285 + $0x18] sm:$0xff] %vm307, %v2567
        %2584 = vst.msk [vmem:[%s285 + $0x20] sm:$0xff] %vm307, %v2568
        %2585 = vst.msk [vmem:[%s285 + $0x28] sm:$0xff] %vm307, %v2569
        %2586 = vst.msk [vmem:[%s285 + $0x30] sm:$0xff] %vm307, %v2570
        %2587 = vst.msk [vmem:[%s285 + $0x38] sm:$0xff] %vm307, %v2571
        %2588 = vst.msk [vmem:[%s285 + $0x40] sm:$0xff] %vm307, %v2572
        %2589 = vst.msk [vmem:[%s285 + $0x48] sm:$0xff] %vm307, %v2573
        %2590 = vst.msk [vmem:[%s285 + $0x50] sm:$0xff] %vm307, %v2574
        %2591 = vst.msk [vmem:[%s285 + $0x58] sm:$0xff] %vm307, %v2575
        %2592 = vst.msk [vmem:[%s285 + $0x60] sm:$0xff] %vm307, %v2576
        %2593 = vst.msk [vmem:[%s285 + $0x68] sm:$0xff] %vm307, %v2577
        %2594 = vst.msk [vmem:[%s285 + $0x70] sm:$0xff] %vm307, %v2578
        %2595 = vst.msk [vmem:[%s285 + $0x78] sm:$0xff] %vm307, %v2579
        %s2596 = sand.u32 %s182, 1
        %s2597 = scalar_lea.sflag [#allocation3], %s2596
        %s2598 = sand.u32 %s182, 1
        %s2599 = smul.addr %s2598, 128
        %s2600 = scalar_lea.vmem [#allocation5], %s2599
        // Predicated region
        $region53: #{triplet_attention_forward.1} parent=47 // pred_check
          %p2601 = pneg %p192
        $region54: #{triplet_attention_forward.1} parent=47 // pred_check_branch
          %2603 = sbr.rel (%p2601) target = $region56
        $region55: #{triplet_attention_forward.1} parent=47 // pred_region
          %2605 = vsyncadd %s2597, 0
          %s2606 = smul.addr %s22, 16
          %s2607 = smul.addr %s2606, 8
          %s2608 = scalar_lea.hbm %s7, %s2607
          %s2609 = sshll.u32 %s2600, 4
          %s2610 = int_to_ptr.vmem [resolvable:$true] %s2609
          %s2611 = sshll.u32 %s2608, 4
          %s2612 = int_to_ptr.hbm [resolvable:$true] %s2611
          %2617 = dma.vmem_to_hbm [thread:$0]  %s2610, 2048, %s2612, %s2597, 128, 128, 8
        $region56: #{triplet_attention_forward.1} parent=47 // pred_fallthru
          _
      $region48: #{triplet_attention_forward.1} parent=5 // pred_fallthru
        _
      %p2618 = scmp.le.s32.totalorder 2, %s17
      // Predicated region
      $region57: #{triplet_attention_forward.1} parent=5 // pred_check
        %p2619 = pneg %p2618
      $region58: #{triplet_attention_forward.1} parent=5 // pred_check_branch
        %2621 = sbr.rel (%p2619) target = $region60
      $region59: #{triplet_attention_forward.1} parent=5 // pred_region
        %s2622 = ssub.s32 %s17, 2
        // Predicated region
        $region61: #{triplet_attention_forward.1} parent=59 // pred_check
          %p2623 = pneg %p198
        $region62: #{triplet_attention_forward.1} parent=59 // pred_check_branch
          %2625 = sbr.rel (%p2623) target = $region64
        $region63: #{triplet_attention_forward.1} parent=59 // pred_region
          %s2626 = sand.u32 %s183, 1
          %s2627 = scalar_lea.sflag [#allocation3], %s2626
          %s2628 = sand.u32 %s183, 1
          %s2629 = smul.addr %s2628, 128
          %s2630 = scalar_lea.vmem [#allocation5], %s2629
          %2632 = dma.done %s2627, 2048
        $region64: #{triplet_attention_forward.1} parent=59 // pred_fallthru
          _
      $region60: #{triplet_attention_forward.1} parent=5 // pred_fallthru
        _
    $region6: #{triplet_attention_forward.1} parent=1 // loop_footer
      %s21 = sadd.s32 1, %s17
    $region7: #{triplet_attention_forward.1} parent=1 // loop_footer_branch
      %16 = sbr.rel target = $region3
    $region8: #{triplet_attention_forward.1} parent=1 // loop_exit
      _
    %2633 = vsyncpa [#allocation3], 1
    %s2634 = scalar_lea.sflag [#allocation3], 1
    %2635 = vsyncpa %s2634, 1
    %2636 = vsyncpa [#allocation4], 1
    %s2637 = scalar_lea.sflag [#allocation4], 1
    %2638 = vsyncpa %s2637, 1

</llo_original>
